<compile_context>
chip_gen: v7x
topology: tpu7x:2x2x1
jax: 0.10.0
libtpu: 0.0.40
codegen_flags: <defaults>
</compile_context>

<pallas_src>
import functools

import jax
import jax.numpy as jnp
from jax import lax
from jax.experimental import pallas as pl
from jax.experimental.pallas import tpu as pltpu

_LANE = 128
_SUBLANE = 8
_FULL_UNROLL_T = 32        # chunks with <= this many steps are Python-unrolled
_FORI_UNROLL = 4           # partial unroll for longer chunks (LLO visibility)
_XG_CHUNK_BYTES = 4 << 20  # target size of the hoisted-projection VMEM scratch


def _round_up(x, m):
    return (x + m - 1) // m * m


def _sigmoid(x):
    # sigmoid(x) == 0.5*tanh(0.5*x) + 0.5 : a single EUP (tanh) push instead of
    # exp + reciprocal on the serial recurrence critical path.
    return 0.5 * jnp.tanh(0.5 * x) + 0.5


# --------------------------------------------------------------------------
# Fused stacked-LSTM kernel (whole sequence, all layers, one invocation)
# --------------------------------------------------------------------------
def _fused_rnn_kernel(*refs, n_layers, seq_len, batch_p, p_ins, p_hs,
                      t_chunk, compute_dtype):
    """refs layout:
       x_ref (T*Bp, Pin0),
       [wih_l (Pin_l, 4*Ph_l), whh_l (Ph_l, 4*Ph_l), b_l (1, 4*Ph_l)] * L,
       y_ref (T*Bp, Ph_last), c_ref (Bp, Ph_last),
       xg_sc (Tc*Bp, 4*Ph_max) f32,
       [act_sc (T*Bp, max(Ph[:-1])) compute_dtype]   (only if L > 1)
    """
    T, Bp = seq_len, batch_p
    x_ref = refs[0]
    layer_refs = [(refs[1 + 3 * l], refs[2 + 3 * l], refs[3 + 3 * l])
                  for l in range(n_layers)]
    pos = 1 + 3 * n_layers
    y_ref, c_ref, xg_sc = refs[pos], refs[pos + 1], refs[pos + 2]
    act_sc = refs[pos + 3] if n_layers > 1 else None

    n_chunks = -(-T // t_chunk)

    for layer in range(n_layers):
        wih_ref, whh_ref, b_ref = layer_refs[layer]
        Pin, Ph = p_ins[layer], p_hs[layer]
        is_last = layer == n_layers - 1
        src_ref = x_ref if layer == 0 else act_sc
        out_ref = y_ref if is_last else act_sc

        h = jnp.zeros((Bp, Ph), jnp.float32)
        c = jnp.zeros((Bp, Ph), jnp.float32)

        for ck in range(n_chunks):
            t0 = ck * t_chunk
            cur_T = min(t_chunk, T - t0)

            # ---- phase 1: hoisted input projection for this time chunk ------
            # One MXU matmul per chunk; scratch stays (Tc*Bp, 4*Ph) regardless
            # of total sequence length.
            src = src_ref[t0 * Bp:(t0 + cur_T) * Bp, 0:Pin].astype(compute_dtype)
            xg_sc[0:cur_T * Bp, 0:4 * Ph] = (
                jnp.dot(src, wih_ref[...], preferred_element_type=jnp.float32)
                + b_ref[...])

            # ---- phase 2: serial recurrence over the chunk -------------------
            def step(tl, carry, *, t0=t0, Ph=Ph, whh_ref=whh_ref,
                     out_ref=out_ref):
                h, c = carry
                if isinstance(tl, int):
                    r0 = tl * Bp
                    o0 = (t0 + tl) * Bp
                else:
                    r0 = pl.multiple_of(tl * Bp, Bp)
                    o0 = pl.multiple_of((t0 + tl) * Bp, Bp)

                # W_hh is read from its VMEM ref each step (no hoisted live
                # (P,4P) value carried across the loop).
                gates = xg_sc[pl.ds(r0, Bp), 0:4 * Ph] + jnp.dot(
                    h.astype(compute_dtype), whh_ref[...],
                    preferred_element_type=jnp.float32)

                # gate blocks are 128-lane aligned (Ph is a multiple of 128)
                i_g = _sigmoid(gates[:, 0 * Ph:1 * Ph])
                f_g = _sigmoid(gates[:, 1 * Ph:2 * Ph])
                g_g = jnp.tanh(gates[:, 2 * Ph:3 * Ph])
                o_g = _sigmoid(gates[:, 3 * Ph:4 * Ph])

                c_new = f_g * c + i_g * g_g
                h_new = o_g * jnp.tanh(c_new)

                out_ref[pl.ds(o0, Bp), 0:Ph] = h_new.astype(out_ref.dtype)
                return h_new, c_new

            if cur_T <= _FULL_UNROLL_T:
                for tl in range(cur_T):        # fully unrolled, static slices
                    h, c = step(tl, (h, c))
            else:
                h, c = lax.fori_loop(0, cur_T, step, (h, c),
                                     unroll=_FORI_UNROLL)

        if is_last:
            c_ref[...] = c


# --------------------------------------------------------------------------
# Wrapper: per-layer parameter padding + pallas_call
# --------------------------------------------------------------------------
def _pad_gate_weight(w, d_in, h, p_in, p_h, dtype):
    """w: (4H, D_in) PyTorch layout -> (Pin, 4*Ph) padded, transposed, gate-blocked."""
    wt = jnp.transpose(w).astype(jnp.float32).reshape(d_in, 4, h)
    out = jnp.zeros((p_in, 4, p_h), jnp.float32).at[:d_in, :, :h].set(wt)
    return out.reshape(p_in, 4 * p_h).astype(dtype)


def _pad_gate_bias(b, h, p_h):
    bb = b.astype(jnp.float32).reshape(4, h)
    out = jnp.zeros((4, p_h), jnp.float32).at[:, :h].set(bb)
    return out.reshape(1, 4 * p_h)


def rnn_forward(x, params, *, use_bf16_matmul=True):
    """RNN.forward: stacked LSTM layers on time-major x (T, B, input_dim).

    Returns (y, (h_n, c_n)) of the LAST layer, matching the PyTorch module
    (h_n/c_n have a leading num_layers(=1) axis).
    """
    T, B, input_dim = x.shape
    n_layers = len(params)
    h_dims = [int(prm["w_hh"].shape[1]) for prm in params]

    compute_dtype = jnp.bfloat16 if use_bf16_matmul else jnp.float32
    Bp = _round_up(B, _SUBLANE)
    p_ins = [_round_up(input_dim, _LANE)] + [_round_up(h, _LANE)
                                             for h in h_dims[:-1]]
    p_hs = [_round_up(h, _LANE) for h in h_dims]
    ph_max = max(p_hs)

    # Per-layer padded weights, passed as SEPARATE kernel operands.
    weight_ops = []
    d_in = input_dim
    for l, prm in enumerate(params):
        h = h_dims[l]
        weight_ops += [
            _pad_gate_weight(prm["w_ih"], d_in, h, p_ins[l], p_hs[l],
                             compute_dtype),
            _pad_gate_weight(prm["w_hh"], h, h, p_hs[l], p_hs[l],
                             compute_dtype),
            _pad_gate_bias(prm["b_ih"] + prm["b_hh"], h, p_hs[l]),
        ]
        d_in = h

    # Padded input (T*Bp, Pin0), stored in the MXU operand dtype.
    x_p = jnp.zeros((T, Bp, p_ins[0]), jnp.float32)
    x_p = x_p.at[:, :B, :input_dim].set(x.astype(jnp.float32))
    x_p = x_p.reshape(T * Bp, p_ins[0]).astype(compute_dtype)

    # Time-chunk length so the hoisted-projection scratch stays small.
    xg_row_bytes = Bp * 4 * ph_max * 4
    t_chunk = max(1, min(T, _XG_CHUNK_BYTES // xg_row_bytes))

    y_dtype = x.dtype
    act_w = max(p_hs[:-1]) if n_layers > 1 else 0

    scratch_shapes = [pltpu.VMEM((t_chunk * Bp, 4 * ph_max), jnp.float32)]
    if n_layers > 1:
        scratch_shapes.append(pltpu.VMEM((T * Bp, act_w), compute_dtype))

    # VMEM footprint (everything is whole-array resident, no double-buffering).
    def nbytes(a):
        return a.size * a.dtype.itemsize
    footprint = nbytes(x_p) + sum(nbytes(w) for w in weight_ops)
    footprint += T * Bp * p_hs[-1] * jnp.dtype(y_dtype).itemsize        # y
    footprint += Bp * p_hs[-1] * 4                                      # c
    footprint += t_chunk * Bp * 4 * ph_max * 4                          # xg_sc
    if n_layers > 1:
        footprint += T * Bp * act_w * jnp.dtype(compute_dtype).itemsize
    vmem_limit = min(128 << 20, max(8 << 20, int(footprint * 1.5) + (2 << 20)))

    kernel = functools.partial(
        _fused_rnn_kernel,
        n_layers=n_layers, seq_len=T, batch_p=Bp,
        p_ins=tuple(p_ins), p_hs=tuple(p_hs),
        t_chunk=t_chunk, compute_dtype=compute_dtype)

    # Whole-array VMEM operands; no grid -> no pipeline double-buffering.
    vmem_spec = pl.BlockSpec(memory_space=pltpu.MemorySpace.VMEM)

    y_p, c_p = pl.pallas_call(
        kernel,
        out_shape=(
            jax.ShapeDtypeStruct((T * Bp, p_hs[-1]), y_dtype),
            jax.ShapeDtypeStruct((Bp, p_hs[-1]), jnp.float32),
        ),
        in_specs=[vmem_spec] * (1 + 3 * n_layers),
        out_specs=(vmem_spec, vmem_spec),
        scratch_shapes=scratch_shapes,
        compiler_params=pltpu.CompilerParams(vmem_limit_bytes=vmem_limit),
    )(x_p, *weight_ops)

    h_out = h_dims[-1]
    y = y_p.reshape(T, Bp, p_hs[-1])[:, :B, :h_out].astype(x.dtype)
    h_n = y[-1][None]                                 # final hidden == y[T-1]
    c_n = c_p[:B, :h_out][None].astype(x.dtype)
    return y, (h_n, c_n)


# --------------------------------------------------------------------------
# Parameter init (PyTorch LSTM shapes) and pure-JAX reference
# --------------------------------------------------------------------------
def init_rnn_params(key, input_dim, out_dim, h_dims):
    layer_dims = [input_dim] + list(h_dims) + [out_dim]
    params = []
    for idx in range(len(layer_dims) - 1):
        d_in, d_h = layer_dims[idx], layer_dims[idx + 1]
        k = 1.0 / jnp.sqrt(d_h)
        key, k1, k2, k3, k4 = jax.random.split(key, 5)
        params.append({
            "w_ih": jax.random.uniform(k1, (4 * d_h, d_in), jnp.float32, -k, k),
            "w_hh": jax.random.uniform(k2, (4 * d_h, d_h), jnp.float32, -k, k),
            "b_ih": jax.random.uniform(k3, (4 * d_h,), jnp.float32, -k, k),
            "b_hh": jax.random.uniform(k4, (4 * d_h,), jnp.float32, -k, k),
        })
    return params


def _lstm_layer_ref(x, w_ih, w_hh, b_ih, b_hh):
    T, B, D = x.shape
    H = w_hh.shape[1]
    h0 = jnp.zeros((B, H), jnp.float32)
    c0 = jnp.zeros((B, H), jnp.float32)

    def step(carry, x_t):
        h, c = carry
        gates = x_t @ w_ih.T + b_ih + h @ w_hh.T + b_hh
        i = jax.nn.sigmoid(gates[:, 0 * H:1 * H])
        f = jax.nn.sigmoid(gates[:, 1 * H:2 * H])
        g = jnp.tanh(gates[:, 2 * H:3 * H])
        o = jax.nn.sigmoid(gates[:, 3 * H:4 * H])
        c_new = f * c + i * g
        h_new = o * jnp.tanh(c_new)
        return (h_new, c_new), h_new

    (h_n, c_n), ys = lax.scan(step, (h0, c0), x)
    return ys, h_n, c_n


def rnn_forward_ref(x, params):
    h_n = c_n = None
    for p in params:
        x, h_n, c_n = _lstm_layer_ref(x, p["w_ih"], p["w_hh"], p["b_ih"],
                                      p["b_hh"])
    return x, (h_n[None], c_n[None])


if __name__ == "__main__":
    key = jax.random.PRNGKey(0)
    k_param, k_x = jax.random.split(key)

    # Small shapes consistent with the module: seq=8, batch=2,
    # input_dim=4, h_dims=[16], out_dim=32  -> two stacked LSTM layers.
    T, B = 8, 2
    input_dim, h_dims, out_dim = 4, [16], 32

    params = init_rnn_params(k_param, input_dim, out_dim, h_dims)
    x = jax.random.normal(k_x, (T, B, input_dim), jnp.float32)

    y_ref, (h_ref, c_ref) = rnn_forward_ref(x, params)

    # f32 MXU-operand path: tight check against the pure-JAX reference.
    y32, (h32, c32) = jax.jit(functools.partial(
        rnn_forward, params=params, use_bf16_matmul=False))(x)
    jax.block_until_ready((y32, h32, c32))
    assert y32.shape == (T, B, out_dim)
    assert h32.shape == (1, B, out_dim) and c32.shape == (1, B, out_dim)
    assert jnp.allclose(y32, y_ref, atol=2e-5, rtol=2e-5)
    assert jnp.allclose(h32, h_ref, atol=2e-5, rtol=2e-5)
    assert jnp.allclose(c32, c_ref, atol=2e-5, rtol=2e-5)

    # Default path: bf16 MXU operands (recommended on v5e/v6e/v7x); gate
    # nonlinearities and the c/h update stay float32.
    y, (h_n, c_n) = jax.jit(functools.partial(rnn_forward, params=params))(x)
    jax.block_until_ready((y, h_n, c_n))
    assert y.shape == (T, B, out_dim)
    assert jnp.allclose(y, y_ref, atol=1e-1)
    assert jnp.allclose(h_n, h_ref, atol=1e-1)
    assert jnp.allclose(c_n, c_ref, atol=1e-1)

    print("KERNEL_OK")
</pallas_src>

<mosaic_0001>
module attributes {stable_mosaic.version = 11 : i64} {
  func.func @_fused_rnn_kernel(%arg0: memref<64x128xf32, #tpu.memory_space<vmem>>, %arg1: memref<128x512xf32, #tpu.memory_space<vmem>>, %arg2: memref<128x512xf32, #tpu.memory_space<vmem>>, %arg3: memref<1x512xf32, #tpu.memory_space<vmem>>, %arg4: memref<128x512xf32, #tpu.memory_space<vmem>>, %arg5: memref<128x512xf32, #tpu.memory_space<vmem>>, %arg6: memref<1x512xf32, #tpu.memory_space<vmem>>, %arg7: memref<64x128xf32, #tpu.memory_space<vmem>>, %arg8: memref<8x128xf32, #tpu.memory_space<vmem>>, %arg9: memref<64x512xf32, #tpu.memory_space<vmem>>, %arg10: memref<64x128xf32, #tpu.memory_space<vmem>>) attributes {dimension_semantics = [], scalar_prefetch = 0 : i64, scratch_operands = 2 : i64, tpu.core_type = #tpu.core_type<tc>} {
    %cst = arith.constant 0.000000e+00 : f32
    %0 = vector.broadcast %cst : f32 to vector<8x128xf32>
    %cst_0 = arith.constant 0.000000e+00 : f32
    %1 = vector.broadcast %cst_0 : f32 to vector<8x128xf32>
    %c0 = arith.constant 0 : index
    %c0_1 = arith.constant 0 : index
    %2 = vector.load %arg0[%c0, %c0_1] : memref<64x128xf32, #tpu.memory_space<vmem>>, vector<64x128xf32>
    %c0_2 = arith.constant 0 : index
    %c0_3 = arith.constant 0 : index
    %3 = vector.load %arg1[%c0_2, %c0_3] : memref<128x512xf32, #tpu.memory_space<vmem>>, vector<128x512xf32>
    %cst_4 = arith.constant dense<0.000000e+00> : vector<64x512xf32>
    %4 = tpu.matmul %2, %3, %cst_4 {dimension_numbers = #tpu.dot_dimension_numbers<[1], [0], [0], [1], [0, 0, 1, 1], [], []>} : vector<64x128xf32>, vector<128x512xf32>, vector<64x512xf32> -> vector<64x512xf32>
    %c0_5 = arith.constant 0 : index
    %c0_6 = arith.constant 0 : index
    %5 = vector.load %arg3[%c0_5, %c0_6] : memref<1x512xf32, #tpu.memory_space<vmem>>, vector<1x512xf32>
    %6 = vector.broadcast %5 : vector<1x512xf32> to vector<64x512xf32>
    %7 = arith.addf %4, %6 : vector<64x512xf32>
    %c0_7 = arith.constant 0 : index
    %c0_8 = arith.constant 0 : index
    %8 = vector.load %arg9[%c0_7, %c0_8] : memref<64x512xf32, #tpu.memory_space<vmem>>, vector<64x512xf32>
    tpu.vector_store %arg9[%c0_7, %c0_8], %7 {strides = array<i32>} : memref<64x512xf32, #tpu.memory_space<vmem>>, vector<64x512xf32>,
    %c0_9 = arith.constant 0 : index
    %c0_10 = arith.constant 0 : index
    %9 = vector.load %arg9[%c0_9, %c0_10] : memref<64x512xf32, #tpu.memory_space<vmem>>, vector<8x512xf32>
    %c0_11 = arith.constant 0 : index
    %c0_12 = arith.constant 0 : index
    %10 = vector.load %arg2[%c0_11, %c0_12] : memref<128x512xf32, #tpu.memory_space<vmem>>, vector<128x512xf32>
    %cst_13 = arith.constant dense<0.000000e+00> : vector<8x512xf32>
    %11 = tpu.matmul %0, %10, %cst_13 {dimension_numbers = #tpu.dot_dimension_numbers<[1], [0], [0], [1], [0, 0, 1, 1], [], []>} : vector<8x128xf32>, vector<128x512xf32>, vector<8x512xf32> -> vector<8x512xf32>
    %12 = arith.addf %9, %11 : vector<8x512xf32>
    %13 = vector.extract_strided_slice %12 {offsets = [0, 0], sizes = [8, 128], strides = [1, 1]} : vector<8x512xf32> to vector<8x128xf32>
    %cst_14 = arith.constant 5.000000e-01 : f32
    %14 = vector.broadcast %cst_14 : f32 to vector<8x128xf32>
    %15 = arith.mulf %14, %13 : vector<8x128xf32>
    %16 = math.tanh %15 : vector<8x128xf32>
    %cst_15 = arith.constant 5.000000e-01 : f32
    %17 = vector.broadcast %cst_15 : f32 to vector<8x128xf32>
    %18 = arith.mulf %17, %16 : vector<8x128xf32>
    %cst_16 = arith.constant 5.000000e-01 : f32
    %19 = vector.broadcast %cst_16 : f32 to vector<8x128xf32>
    %20 = arith.addf %18, %19 : vector<8x128xf32>
    %21 = vector.extract_strided_slice %12 {offsets = [0, 128], sizes = [8, 128], strides = [1, 1]} : vector<8x512xf32> to vector<8x128xf32>
    %cst_17 = arith.constant 5.000000e-01 : f32
    %22 = vector.broadcast %cst_17 : f32 to vector<8x128xf32>
    %23 = arith.mulf %22, %21 : vector<8x128xf32>
    %24 = math.tanh %23 : vector<8x128xf32>
    %cst_18 = arith.constant 5.000000e-01 : f32
    %25 = vector.broadcast %cst_18 : f32 to vector<8x128xf32>
    %26 = arith.mulf %25, %24 : vector<8x128xf32>
    %cst_19 = arith.constant 5.000000e-01 : f32
    %27 = vector.broadcast %cst_19 : f32 to vector<8x128xf32>
    %28 = arith.addf %26, %27 : vector<8x128xf32>
    %29 = vector.extract_strided_slice %12 {offsets = [0, 256], sizes = [8, 128], strides = [1, 1]} : vector<8x512xf32> to vector<8x128xf32>
    %30 = math.tanh %29 : vector<8x128xf32>
    %31 = vector.extract_strided_slice %12 {offsets = [0, 384], sizes = [8, 128], strides = [1, 1]} : vector<8x512xf32> to vector<8x128xf32>
    %cst_20 = arith.constant 5.000000e-01 : f32
    %32 = vector.broadcast %cst_20 : f32 to vector<8x128xf32>
    %33 = arith.mulf %32, %31 : vector<8x128xf32>
    %34 = math.tanh %33 : vector<8x128xf32>
    %cst_21 = arith.constant 5.000000e-01 : f32
    %35 = vector.broadcast %cst_21 : f32 to vector<8x128xf32>
    %36 = arith.mulf %35, %34 : vector<8x128xf32>
    %cst_22 = arith.constant 5.000000e-01 : f32
    %37 = vector.broadcast %cst_22 : f32 to vector<8x128xf32>
    %38 = arith.addf %36, %37 : vector<8x128xf32>
    %39 = arith.mulf %28, %1 : vector<8x128xf32>
    %40 = arith.mulf %20, %30 : vector<8x128xf32>
    %41 = arith.addf %39, %40 : vector<8x128xf32>
    %42 = math.tanh %41 : vector<8x128xf32>
    %43 = arith.mulf %38, %42 : vector<8x128xf32>
    %c0_23 = arith.constant 0 : index
    %c0_24 = arith.constant 0 : index
    %44 = vector.load %arg10[%c0_23, %c0_24] : memref<64x128xf32, #tpu.memory_space<vmem>>, vector<8x128xf32>
    tpu.vector_store %arg10[%c0_23, %c0_24], %43 {strides = array<i32>} : memref<64x128xf32, #tpu.memory_space<vmem>>, vector<8x128xf32>,
    %c8 = arith.constant 8 : index
    %c0_25 = arith.constant 0 : index
    %45 = vector.load %arg9[%c8, %c0_25] : memref<64x512xf32, #tpu.memory_space<vmem>>, vector<8x512xf32>
    %c0_26 = arith.constant 0 : index
    %c0_27 = arith.constant 0 : index
    %46 = vector.load %arg2[%c0_26, %c0_27] : memref<128x512xf32, #tpu.memory_space<vmem>>, vector<128x512xf32>
    %cst_28 = arith.constant dense<0.000000e+00> : vector<8x512xf32>
    %47 = tpu.matmul %43, %46, %cst_28 {dimension_numbers = #tpu.dot_dimension_numbers<[1], [0], [0], [1], [0, 0, 1, 1], [], []>} : vector<8x128xf32>, vector<128x512xf32>, vector<8x512xf32> -> vector<8x512xf32>
    %48 = arith.addf %45, %47 : vector<8x512xf32>
    %49 = vector.extract_strided_slice %48 {offsets = [0, 0], sizes = [8, 128], strides = [1, 1]} : vector<8x512xf32> to vector<8x128xf32>
    %cst_29 = arith.constant 5.000000e-01 : f32
    %50 = vector.broadcast %cst_29 : f32 to vector<8x128xf32>
    %51 = arith.mulf %50, %49 : vector<8x128xf32>
    %52 = math.tanh %51 : vector<8x128xf32>
    %cst_30 = arith.constant 5.000000e-01 : f32
    %53 = vector.broadcast %cst_30 : f32 to vector<8x128xf32>
    %54 = arith.mulf %53, %52 : vector<8x128xf32>
    %cst_31 = arith.constant 5.000000e-01 : f32
    %55 = vector.broadcast %cst_31 : f32 to vector<8x128xf32>
    %56 = arith.addf %54, %55 : vector<8x128xf32>
    %57 = vector.extract_strided_slice %48 {offsets = [0, 128], sizes = [8, 128], strides = [1, 1]} : vector<8x512xf32> to vector<8x128xf32>
    %cst_32 = arith.constant 5.000000e-01 : f32
    %58 = vector.broadcast %cst_32 : f32 to vector<8x128xf32>
    %59 = arith.mulf %58, %57 : vector<8x128xf32>
    %60 = math.tanh %59 : vector<8x128xf32>
    %cst_33 = arith.constant 5.000000e-01 : f32
    %61 = vector.broadcast %cst_33 : f32 to vector<8x128xf32>
    %62 = arith.mulf %61, %60 : vector<8x128xf32>
    %cst_34 = arith.constant 5.000000e-01 : f32
    %63 = vector.broadcast %cst_34 : f32 to vector<8x128xf32>
    %64 = arith.addf %62, %63 : vector<8x128xf32>
    %65 = vector.extract_strided_slice %48 {offsets = [0, 256], sizes = [8, 128], strides = [1, 1]} : vector<8x512xf32> to vector<8x128xf32>
    %66 = math.tanh %65 : vector<8x128xf32>
    %67 = vector.extract_strided_slice %48 {offsets = [0, 384], sizes = [8, 128], strides = [1, 1]} : vector<8x512xf32> to vector<8x128xf32>
    %cst_35 = arith.constant 5.000000e-01 : f32
    %68 = vector.broadcast %cst_35 : f32 to vector<8x128xf32>
    %69 = arith.mulf %68, %67 : vector<8x128xf32>
    %70 = math.tanh %69 : vector<8x128xf32>
    %cst_36 = arith.constant 5.000000e-01 : f32
    %71 = vector.broadcast %cst_36 : f32 to vector<8x128xf32>
    %72 = arith.mulf %71, %70 : vector<8x128xf32>
    %cst_37 = arith.constant 5.000000e-01 : f32
    %73 = vector.broadcast %cst_37 : f32 to vector<8x128xf32>
    %74 = arith.addf %72, %73 : vector<8x128xf32>
    %75 = arith.mulf %64, %41 : vector<8x128xf32>
    %76 = arith.mulf %56, %66 : vector<8x128xf32>
    %77 = arith.addf %75, %76 : vector<8x128xf32>
    %78 = math.tanh %77 : vector<8x128xf32>
    %79 = arith.mulf %74, %78 : vector<8x128xf32>
    %c8_38 = arith.constant 8 : index
    %c0_39 = arith.constant 0 : index
    %80 = vector.load %arg10[%c8_38, %c0_39] : memref<64x128xf32, #tpu.memory_space<vmem>>, vector<8x128xf32>
    tpu.vector_store %arg10[%c8_38, %c0_39], %79 {strides = array<i32>} : memref<64x128xf32, #tpu.memory_space<vmem>>, vector<8x128xf32>,
    %c16 = arith.constant 16 : index
    %c0_40 = arith.constant 0 : index
    %81 = vector.load %arg9[%c16, %c0_40] : memref<64x512xf32, #tpu.memory_space<vmem>>, vector<8x512xf32>
    %c0_41 = arith.constant 0 : index
    %c0_42 = arith.constant 0 : index
    %82 = vector.load %arg2[%c0_41, %c0_42] : memref<128x512xf32, #tpu.memory_space<vmem>>, vector<128x512xf32>
    %cst_43 = arith.constant dense<0.000000e+00> : vector<8x512xf32>
    %83 = tpu.matmul %79, %82, %cst_43 {dimension_numbers = #tpu.dot_dimension_numbers<[1], [0], [0], [1], [0, 0, 1, 1], [], []>} : vector<8x128xf32>, vector<128x512xf32>, vector<8x512xf32> -> vector<8x512xf32>
    %84 = arith.addf %81, %83 : vector<8x512xf32>
    %85 = vector.extract_strided_slice %84 {offsets = [0, 0], sizes = [8, 128], strides = [1, 1]} : vector<8x512xf32> to vector<8x128xf32>
    %cst_44 = arith.constant 5.000000e-01 : f32
    %86 = vector.broadcast %cst_44 : f32 to vector<8x128xf32>
    %87 = arith.mulf %86, %85 : vector<8x128xf32>
    %88 = math.tanh %87 : vector<8x128xf32>
    %cst_45 = arith.constant 5.000000e-01 : f32
    %89 = vector.broadcast %cst_45 : f32 to vector<8x128xf32>
    %90 = arith.mulf %89, %88 : vector<8x128xf32>
    %cst_46 = arith.constant 5.000000e-01 : f32
    %91 = vector.broadcast %cst_46 : f32 to vector<8x128xf32>
    %92 = arith.addf %90, %91 : vector<8x128xf32>
    %93 = vector.extract_strided_slice %84 {offsets = [0, 128], sizes = [8, 128], strides = [1, 1]} : vector<8x512xf32> to vector<8x128xf32>
    %cst_47 = arith.constant 5.000000e-01 : f32
    %94 = vector.broadcast %cst_47 : f32 to vector<8x128xf32>
    %95 = arith.mulf %94, %93 : vector<8x128xf32>
    %96 = math.tanh %95 : vector<8x128xf32>
    %cst_48 = arith.constant 5.000000e-01 : f32
    %97 = vector.broadcast %cst_48 : f32 to vector<8x128xf32>
    %98 = arith.mulf %97, %96 : vector<8x128xf32>
    %cst_49 = arith.constant 5.000000e-01 : f32
    %99 = vector.broadcast %cst_49 : f32 to vector<8x128xf32>
    %100 = arith.addf %98, %99 : vector<8x128xf32>
    %101 = vector.extract_strided_slice %84 {offsets = [0, 256], sizes = [8, 128], strides = [1, 1]} : vector<8x512xf32> to vector<8x128xf32>
    %102 = math.tanh %101 : vector<8x128xf32>
    %103 = vector.extract_strided_slice %84 {offsets = [0, 384], sizes = [8, 128], strides = [1, 1]} : vector<8x512xf32> to vector<8x128xf32>
    %cst_50 = arith.constant 5.000000e-01 : f32
    %104 = vector.broadcast %cst_50 : f32 to vector<8x128xf32>
    %105 = arith.mulf %104, %103 : vector<8x128xf32>
    %106 = math.tanh %105 : vector<8x128xf32>
    %cst_51 = arith.constant 5.000000e-01 : f32
    %107 = vector.broadcast %cst_51 : f32 to vector<8x128xf32>
    %108 = arith.mulf %107, %106 : vector<8x128xf32>
    %cst_52 = arith.constant 5.000000e-01 : f32
    %109 = vector.broadcast %cst_52 : f32 to vector<8x128xf32>
    %110 = arith.addf %108, %109 : vector<8x128xf32>
    %111 = arith.mulf %100, %77 : vector<8x128xf32>
    %112 = arith.mulf %92, %102 : vector<8x128xf32>
    %113 = arith.addf %111, %112 : vector<8x128xf32>
    %114 = math.tanh %113 : vector<8x128xf32>
    %115 = arith.mulf %110, %114 : vector<8x128xf32>
    %c16_53 = arith.constant 16 : index
    %c0_54 = arith.constant 0 : index
    %116 = vector.load %arg10[%c16_53, %c0_54] : memref<64x128xf32, #tpu.memory_space<vmem>>, vector<8x128xf32>
    tpu.vector_store %arg10[%c16_53, %c0_54], %115 {strides = array<i32>} : memref<64x128xf32, #tpu.memory_space<vmem>>, vector<8x128xf32>,
    %c24 = arith.constant 24 : index
    %c0_55 = arith.constant 0 : index
    %117 = vector.load %arg9[%c24, %c0_55] : memref<64x512xf32, #tpu.memory_space<vmem>>, vector<8x512xf32>
    %c0_56 = arith.constant 0 : index
    %c0_57 = arith.constant 0 : index
    %118 = vector.load %arg2[%c0_56, %c0_57] : memref<128x512xf32, #tpu.memory_space<vmem>>, vector<128x512xf32>
    %cst_58 = arith.constant dense<0.000000e+00> : vector<8x512xf32>
    %119 = tpu.matmul %115, %118, %cst_58 {dimension_numbers = #tpu.dot_dimension_numbers<[1], [0], [0], [1], [0, 0, 1, 1], [], []>} : vector<8x128xf32>, vector<128x512xf32>, vector<8x512xf32> -> vector<8x512xf32>
    %120 = arith.addf %117, %119 : vector<8x512xf32>
    %121 = vector.extract_strided_slice %120 {offsets = [0, 0], sizes = [8, 128], strides = [1, 1]} : vector<8x512xf32> to vector<8x128xf32>
    %cst_59 = arith.constant 5.000000e-01 : f32
    %122 = vector.broadcast %cst_59 : f32 to vector<8x128xf32>
    %123 = arith.mulf %122, %121 : vector<8x128xf32>
    %124 = math.tanh %123 : vector<8x128xf32>
    %cst_60 = arith.constant 5.000000e-01 : f32
    %125 = vector.broadcast %cst_60 : f32 to vector<8x128xf32>
    %126 = arith.mulf %125, %124 : vector<8x128xf32>
    %cst_61 = arith.constant 5.000000e-01 : f32
    %127 = vector.broadcast %cst_61 : f32 to vector<8x128xf32>
    %128 = arith.addf %126, %127 : vector<8x128xf32>
    %129 = vector.extract_strided_slice %120 {offsets = [0, 128], sizes = [8, 128], strides = [1, 1]} : vector<8x512xf32> to vector<8x128xf32>
    %cst_62 = arith.constant 5.000000e-01 : f32
    %130 = vector.broadcast %cst_62 : f32 to vector<8x128xf32>
    %131 = arith.mulf %130, %129 : vector<8x128xf32>
    %132 = math.tanh %131 : vector<8x128xf32>
    %cst_63 = arith.constant 5.000000e-01 : f32
    %133 = vector.broadcast %cst_63 : f32 to vector<8x128xf32>
    %134 = arith.mulf %133, %132 : vector<8x128xf32>
    %cst_64 = arith.constant 5.000000e-01 : f32
    %135 = vector.broadcast %cst_64 : f32 to vector<8x128xf32>
    %136 = arith.addf %134, %135 : vector<8x128xf32>
    %137 = vector.extract_strided_slice %120 {offsets = [0, 256], sizes = [8, 128], strides = [1, 1]} : vector<8x512xf32> to vector<8x128xf32>
    %138 = math.tanh %137 : vector<8x128xf32>
    %139 = vector.extract_strided_slice %120 {offsets = [0, 384], sizes = [8, 128], strides = [1, 1]} : vector<8x512xf32> to vector<8x128xf32>
    %cst_65 = arith.constant 5.000000e-01 : f32
    %140 = vector.broadcast %cst_65 : f32 to vector<8x128xf32>
    %141 = arith.mulf %140, %139 : vector<8x128xf32>
    %142 = math.tanh %141 : vector<8x128xf32>
    %cst_66 = arith.constant 5.000000e-01 : f32
    %143 = vector.broadcast %cst_66 : f32 to vector<8x128xf32>
    %144 = arith.mulf %143, %142 : vector<8x128xf32>
    %cst_67 = arith.constant 5.000000e-01 : f32
    %145 = vector.broadcast %cst_67 : f32 to vector<8x128xf32>
    %146 = arith.addf %144, %145 : vector<8x128xf32>
    %147 = arith.mulf %136, %113 : vector<8x128xf32>
    %148 = arith.mulf %128, %138 : vector<8x128xf32>
    %149 = arith.addf %147, %148 : vector<8x128xf32>
    %150 = math.tanh %149 : vector<8x128xf32>
    %151 = arith.mulf %146, %150 : vector<8x128xf32>
    %c24_68 = arith.constant 24 : index
    %c0_69 = arith.constant 0 : index
    %152 = vector.load %arg10[%c24_68, %c0_69] : memref<64x128xf32, #tpu.memory_space<vmem>>, vector<8x128xf32>
    tpu.vector_store %arg10[%c24_68, %c0_69], %151 {strides = array<i32>} : memref<64x128xf32, #tpu.memory_space<vmem>>, vector<8x128xf32>,
    %c32 = arith.constant 32 : index
    %c0_70 = arith.constant 0 : index
    %153 = vector.load %arg9[%c32, %c0_70] : memref<64x512xf32, #tpu.memory_space<vmem>>, vector<8x512xf32>
    %c0_71 = arith.constant 0 : index
    %c0_72 = arith.constant 0 : index
    %154 = vector.load %arg2[%c0_71, %c0_72] : memref<128x512xf32, #tpu.memory_space<vmem>>, vector<128x512xf32>
    %cst_73 = arith.constant dense<0.000000e+00> : vector<8x512xf32>
    %155 = tpu.matmul %151, %154, %cst_73 {dimension_numbers = #tpu.dot_dimension_numbers<[1], [0], [0], [1], [0, 0, 1, 1], [], []>} : vector<8x128xf32>, vector<128x512xf32>, vector<8x512xf32> -> vector<8x512xf32>
    %156 = arith.addf %153, %155 : vector<8x512xf32>
    %157 = vector.extract_strided_slice %156 {offsets = [0, 0], sizes = [8, 128], strides = [1, 1]} : vector<8x512xf32> to vector<8x128xf32>
    %cst_74 = arith.constant 5.000000e-01 : f32
    %158 = vector.broadcast %cst_74 : f32 to vector<8x128xf32>
    %159 = arith.mulf %158, %157 : vector<8x128xf32>
    %160 = math.tanh %159 : vector<8x128xf32>
    %cst_75 = arith.constant 5.000000e-01 : f32
    %161 = vector.broadcast %cst_75 : f32 to vector<8x128xf32>
    %162 = arith.mulf %161, %160 : vector<8x128xf32>
    %cst_76 = arith.constant 5.000000e-01 : f32
    %163 = vector.broadcast %cst_76 : f32 to vector<8x128xf32>
    %164 = arith.addf %162, %163 : vector<8x128xf32>
    %165 = vector.extract_strided_slice %156 {offsets = [0, 128], sizes = [8, 128], strides = [1, 1]} : vector<8x512xf32> to vector<8x128xf32>
    %cst_77 = arith.constant 5.000000e-01 : f32
    %166 = vector.broadcast %cst_77 : f32 to vector<8x128xf32>
    %167 = arith.mulf %166, %165 : vector<8x128xf32>
    %168 = math.tanh %167 : vector<8x128xf32>
    %cst_78 = arith.constant 5.000000e-01 : f32
    %169 = vector.broadcast %cst_78 : f32 to vector<8x128xf32>
    %170 = arith.mulf %169, %168 : vector<8x128xf32>
    %cst_79 = arith.constant 5.000000e-01 : f32
    %171 = vector.broadcast %cst_79 : f32 to vector<8x128xf32>
    %172 = arith.addf %170, %171 : vector<8x128xf32>
    %173 = vector.extract_strided_slice %156 {offsets = [0, 256], sizes = [8, 128], strides = [1, 1]} : vector<8x512xf32> to vector<8x128xf32>
    %174 = math.tanh %173 : vector<8x128xf32>
    %175 = vector.extract_strided_slice %156 {offsets = [0, 384], sizes = [8, 128], strides = [1, 1]} : vector<8x512xf32> to vector<8x128xf32>
    %cst_80 = arith.constant 5.000000e-01 : f32
    %176 = vector.broadcast %cst_80 : f32 to vector<8x128xf32>
    %177 = arith.mulf %176, %175 : vector<8x128xf32>
    %178 = math.tanh %177 : vector<8x128xf32>
    %cst_81 = arith.constant 5.000000e-01 : f32
    %179 = vector.broadcast %cst_81 : f32 to vector<8x128xf32>
    %180 = arith.mulf %179, %178 : vector<8x128xf32>
    %cst_82 = arith.constant 5.000000e-01 : f32
    %181 = vector.broadcast %cst_82 : f32 to vector<8x128xf32>
    %182 = arith.addf %180, %181 : vector<8x128xf32>
    %183 = arith.mulf %172, %149 : vector<8x128xf32>
    %184 = arith.mulf %164, %174 : vector<8x128xf32>
    %185 = arith.addf %183, %184 : vector<8x128xf32>
    %186 = math.tanh %185 : vector<8x128xf32>
    %187 = arith.mulf %182, %186 : vector<8x128xf32>
    %c32_83 = arith.constant 32 : index
    %c0_84 = arith.constant 0 : index
    %188 = vector.load %arg10[%c32_83, %c0_84] : memref<64x128xf32, #tpu.memory_space<vmem>>, vector<8x128xf32>
    tpu.vector_store %arg10[%c32_83, %c0_84], %187 {strides = array<i32>} : memref<64x128xf32, #tpu.memory_space<vmem>>, vector<8x128xf32>,
    %c40 = arith.constant 40 : index
    %c0_85 = arith.constant 0 : index
    %189 = vector.load %arg9[%c40, %c0_85] : memref<64x512xf32, #tpu.memory_space<vmem>>, vector<8x512xf32>
    %c0_86 = arith.constant 0 : index
    %c0_87 = arith.constant 0 : index
    %190 = vector.load %arg2[%c0_86, %c0_87] : memref<128x512xf32, #tpu.memory_space<vmem>>, vector<128x512xf32>
    %cst_88 = arith.constant dense<0.000000e+00> : vector<8x512xf32>
    %191 = tpu.matmul %187, %190, %cst_88 {dimension_numbers = #tpu.dot_dimension_numbers<[1], [0], [0], [1], [0, 0, 1, 1], [], []>} : vector<8x128xf32>, vector<128x512xf32>, vector<8x512xf32> -> vector<8x512xf32>
    %192 = arith.addf %189, %191 : vector<8x512xf32>
    %193 = vector.extract_strided_slice %192 {offsets = [0, 0], sizes = [8, 128], strides = [1, 1]} : vector<8x512xf32> to vector<8x128xf32>
    %cst_89 = arith.constant 5.000000e-01 : f32
    %194 = vector.broadcast %cst_89 : f32 to vector<8x128xf32>
    %195 = arith.mulf %194, %193 : vector<8x128xf32>
    %196 = math.tanh %195 : vector<8x128xf32>
    %cst_90 = arith.constant 5.000000e-01 : f32
    %197 = vector.broadcast %cst_90 : f32 to vector<8x128xf32>
    %198 = arith.mulf %197, %196 : vector<8x128xf32>
    %cst_91 = arith.constant 5.000000e-01 : f32
    %199 = vector.broadcast %cst_91 : f32 to vector<8x128xf32>
    %200 = arith.addf %198, %199 : vector<8x128xf32>
    %201 = vector.extract_strided_slice %192 {offsets = [0, 128], sizes = [8, 128], strides = [1, 1]} : vector<8x512xf32> to vector<8x128xf32>
    %cst_92 = arith.constant 5.000000e-01 : f32
    %202 = vector.broadcast %cst_92 : f32 to vector<8x128xf32>
    %203 = arith.mulf %202, %201 : vector<8x128xf32>
    %204 = math.tanh %203 : vector<8x128xf32>
    %cst_93 = arith.constant 5.000000e-01 : f32
    %205 = vector.broadcast %cst_93 : f32 to vector<8x128xf32>
    %206 = arith.mulf %205, %204 : vector<8x128xf32>
    %cst_94 = arith.constant 5.000000e-01 : f32
    %207 = vector.broadcast %cst_94 : f32 to vector<8x128xf32>
    %208 = arith.addf %206, %207 : vector<8x128xf32>
    %209 = vector.extract_strided_slice %192 {offsets = [0, 256], sizes = [8, 128], strides = [1, 1]} : vector<8x512xf32> to vector<8x128xf32>
    %210 = math.tanh %209 : vector<8x128xf32>
    %211 = vector.extract_strided_slice %192 {offsets = [0, 384], sizes = [8, 128], strides = [1, 1]} : vector<8x512xf32> to vector<8x128xf32>
    %cst_95 = arith.constant 5.000000e-01 : f32
    %212 = vector.broadcast %cst_95 : f32 to vector<8x128xf32>
    %213 = arith.mulf %212, %211 : vector<8x128xf32>
    %214 = math.tanh %213 : vector<8x128xf32>
    %cst_96 = arith.constant 5.000000e-01 : f32
    %215 = vector.broadcast %cst_96 : f32 to vector<8x128xf32>
    %216 = arith.mulf %215, %214 : vector<8x128xf32>
    %cst_97 = arith.constant 5.000000e-01 : f32
    %217 = vector.broadcast %cst_97 : f32 to vector<8x128xf32>
    %218 = arith.addf %216, %217 : vector<8x128xf32>
    %219 = arith.mulf %208, %185 : vector<8x128xf32>
    %220 = arith.mulf %200, %210 : vector<8x128xf32>
    %221 = arith.addf %219, %220 : vector<8x128xf32>
    %222 = math.tanh %221 : vector<8x128xf32>
    %223 = arith.mulf %218, %222 : vector<8x128xf32>
    %c40_98 = arith.constant 40 : index
    %c0_99 = arith.constant 0 : index
    %224 = vector.load %arg10[%c40_98, %c0_99] : memref<64x128xf32, #tpu.memory_space<vmem>>, vector<8x128xf32>
    tpu.vector_store %arg10[%c40_98, %c0_99], %223 {strides = array<i32>} : memref<64x128xf32, #tpu.memory_space<vmem>>, vector<8x128xf32>,
    %c48 = arith.constant 48 : index
    %c0_100 = arith.constant 0 : index
    %225 = vector.load %arg9[%c48, %c0_100] : memref<64x512xf32, #tpu.memory_space<vmem>>, vector<8x512xf32>
    %c0_101 = arith.constant 0 : index
    %c0_102 = arith.constant 0 : index
    %226 = vector.load %arg2[%c0_101, %c0_102] : memref<128x512xf32, #tpu.memory_space<vmem>>, vector<128x512xf32>
    %cst_103 = arith.constant dense<0.000000e+00> : vector<8x512xf32>
    %227 = tpu.matmul %223, %226, %cst_103 {dimension_numbers = #tpu.dot_dimension_numbers<[1], [0], [0], [1], [0, 0, 1, 1], [], []>} : vector<8x128xf32>, vector<128x512xf32>, vector<8x512xf32> -> vector<8x512xf32>
    %228 = arith.addf %225, %227 : vector<8x512xf32>
    %229 = vector.extract_strided_slice %228 {offsets = [0, 0], sizes = [8, 128], strides = [1, 1]} : vector<8x512xf32> to vector<8x128xf32>
    %cst_104 = arith.constant 5.000000e-01 : f32
    %230 = vector.broadcast %cst_104 : f32 to vector<8x128xf32>
    %231 = arith.mulf %230, %229 : vector<8x128xf32>
    %232 = math.tanh %231 : vector<8x128xf32>
    %cst_105 = arith.constant 5.000000e-01 : f32
    %233 = vector.broadcast %cst_105 : f32 to vector<8x128xf32>
    %234 = arith.mulf %233, %232 : vector<8x128xf32>
    %cst_106 = arith.constant 5.000000e-01 : f32
    %235 = vector.broadcast %cst_106 : f32 to vector<8x128xf32>
    %236 = arith.addf %234, %235 : vector<8x128xf32>
    %237 = vector.extract_strided_slice %228 {offsets = [0, 128], sizes = [8, 128], strides = [1, 1]} : vector<8x512xf32> to vector<8x128xf32>
    %cst_107 = arith.constant 5.000000e-01 : f32
    %238 = vector.broadcast %cst_107 : f32 to vector<8x128xf32>
    %239 = arith.mulf %238, %237 : vector<8x128xf32>
    %240 = math.tanh %239 : vector<8x128xf32>
    %cst_108 = arith.constant 5.000000e-01 : f32
    %241 = vector.broadcast %cst_108 : f32 to vector<8x128xf32>
    %242 = arith.mulf %241, %240 : vector<8x128xf32>
    %cst_109 = arith.constant 5.000000e-01 : f32
    %243 = vector.broadcast %cst_109 : f32 to vector<8x128xf32>
    %244 = arith.addf %242, %243 : vector<8x128xf32>
    %245 = vector.extract_strided_slice %228 {offsets = [0, 256], sizes = [8, 128], strides = [1, 1]} : vector<8x512xf32> to vector<8x128xf32>
    %246 = math.tanh %245 : vector<8x128xf32>
    %247 = vector.extract_strided_slice %228 {offsets = [0, 384], sizes = [8, 128], strides = [1, 1]} : vector<8x512xf32> to vector<8x128xf32>
    %cst_110 = arith.constant 5.000000e-01 : f32
    %248 = vector.broadcast %cst_110 : f32 to vector<8x128xf32>
    %249 = arith.mulf %248, %247 : vector<8x128xf32>
    %250 = math.tanh %249 : vector<8x128xf32>
    %cst_111 = arith.constant 5.000000e-01 : f32
    %251 = vector.broadcast %cst_111 : f32 to vector<8x128xf32>
    %252 = arith.mulf %251, %250 : vector<8x128xf32>
    %cst_112 = arith.constant 5.000000e-01 : f32
    %253 = vector.broadcast %cst_112 : f32 to vector<8x128xf32>
    %254 = arith.addf %252, %253 : vector<8x128xf32>
    %255 = arith.mulf %244, %221 : vector<8x128xf32>
    %256 = arith.mulf %236, %246 : vector<8x128xf32>
    %257 = arith.addf %255, %256 : vector<8x128xf32>
    %258 = math.tanh %257 : vector<8x128xf32>
    %259 = arith.mulf %254, %258 : vector<8x128xf32>
    %c48_113 = arith.constant 48 : index
    %c0_114 = arith.constant 0 : index
    %260 = vector.load %arg10[%c48_113, %c0_114] : memref<64x128xf32, #tpu.memory_space<vmem>>, vector<8x128xf32>
    tpu.vector_store %arg10[%c48_113, %c0_114], %259 {strides = array<i32>} : memref<64x128xf32, #tpu.memory_space<vmem>>, vector<8x128xf32>,
    %c56 = arith.constant 56 : index
    %c0_115 = arith.constant 0 : index
    %261 = vector.load %arg9[%c56, %c0_115] : memref<64x512xf32, #tpu.memory_space<vmem>>, vector<8x512xf32>
    %c0_116 = arith.constant 0 : index
    %c0_117 = arith.constant 0 : index
    %262 = vector.load %arg2[%c0_116, %c0_117] : memref<128x512xf32, #tpu.memory_space<vmem>>, vector<128x512xf32>
    %cst_118 = arith.constant dense<0.000000e+00> : vector<8x512xf32>
    %263 = tpu.matmul %259, %262, %cst_118 {dimension_numbers = #tpu.dot_dimension_numbers<[1], [0], [0], [1], [0, 0, 1, 1], [], []>} : vector<8x128xf32>, vector<128x512xf32>, vector<8x512xf32> -> vector<8x512xf32>
    %264 = arith.addf %261, %263 : vector<8x512xf32>
    %265 = vector.extract_strided_slice %264 {offsets = [0, 0], sizes = [8, 128], strides = [1, 1]} : vector<8x512xf32> to vector<8x128xf32>
    %cst_119 = arith.constant 5.000000e-01 : f32
    %266 = vector.broadcast %cst_119 : f32 to vector<8x128xf32>
    %267 = arith.mulf %266, %265 : vector<8x128xf32>
    %268 = math.tanh %267 : vector<8x128xf32>
    %cst_120 = arith.constant 5.000000e-01 : f32
    %269 = vector.broadcast %cst_120 : f32 to vector<8x128xf32>
    %270 = arith.mulf %269, %268 : vector<8x128xf32>
    %cst_121 = arith.constant 5.000000e-01 : f32
    %271 = vector.broadcast %cst_121 : f32 to vector<8x128xf32>
    %272 = arith.addf %270, %271 : vector<8x128xf32>
    %273 = vector.extract_strided_slice %264 {offsets = [0, 128], sizes = [8, 128], strides = [1, 1]} : vector<8x512xf32> to vector<8x128xf32>
    %cst_122 = arith.constant 5.000000e-01 : f32
    %274 = vector.broadcast %cst_122 : f32 to vector<8x128xf32>
    %275 = arith.mulf %274, %273 : vector<8x128xf32>
    %276 = math.tanh %275 : vector<8x128xf32>
    %cst_123 = arith.constant 5.000000e-01 : f32
    %277 = vector.broadcast %cst_123 : f32 to vector<8x128xf32>
    %278 = arith.mulf %277, %276 : vector<8x128xf32>
    %cst_124 = arith.constant 5.000000e-01 : f32
    %279 = vector.broadcast %cst_124 : f32 to vector<8x128xf32>
    %280 = arith.addf %278, %279 : vector<8x128xf32>
    %281 = vector.extract_strided_slice %264 {offsets = [0, 256], sizes = [8, 128], strides = [1, 1]} : vector<8x512xf32> to vector<8x128xf32>
    %282 = math.tanh %281 : vector<8x128xf32>
    %283 = vector.extract_strided_slice %264 {offsets = [0, 384], sizes = [8, 128], strides = [1, 1]} : vector<8x512xf32> to vector<8x128xf32>
    %cst_125 = arith.constant 5.000000e-01 : f32
    %284 = vector.broadcast %cst_125 : f32 to vector<8x128xf32>
    %285 = arith.mulf %284, %283 : vector<8x128xf32>
    %286 = math.tanh %285 : vector<8x128xf32>
    %cst_126 = arith.constant 5.000000e-01 : f32
    %287 = vector.broadcast %cst_126 : f32 to vector<8x128xf32>
    %288 = arith.mulf %287, %286 : vector<8x128xf32>
    %cst_127 = arith.constant 5.000000e-01 : f32
    %289 = vector.broadcast %cst_127 : f32 to vector<8x128xf32>
    %290 = arith.addf %288, %289 : vector<8x128xf32>
    %291 = arith.mulf %280, %257 : vector<8x128xf32>
    %292 = arith.mulf %272, %282 : vector<8x128xf32>
    %293 = arith.addf %291, %292 : vector<8x128xf32>
    %294 = math.tanh %293 : vector<8x128xf32>
    %295 = arith.mulf %290, %294 : vector<8x128xf32>
    %c56_128 = arith.constant 56 : index
    %c0_129 = arith.constant 0 : index
    %296 = vector.load %arg10[%c56_128, %c0_129] : memref<64x128xf32, #tpu.memory_space<vmem>>, vector<8x128xf32>
    tpu.vector_store %arg10[%c56_128, %c0_129], %295 {strides = array<i32>} : memref<64x128xf32, #tpu.memory_space<vmem>>, vector<8x128xf32>,
    %cst_130 = arith.constant 0.000000e+00 : f32
    %297 = vector.broadcast %cst_130 : f32 to vector<8x128xf32>
    %cst_131 = arith.constant 0.000000e+00 : f32
    %298 = vector.broadcast %cst_131 : f32 to vector<8x128xf32>
    %c0_132 = arith.constant 0 : index
    %c0_133 = arith.constant 0 : index
    %299 = vector.load %arg10[%c0_132, %c0_133] : memref<64x128xf32, #tpu.memory_space<vmem>>, vector<64x128xf32>
    %c0_134 = arith.constant 0 : index
    %c0_135 = arith.constant 0 : index
    %300 = vector.load %arg4[%c0_134, %c0_135] : memref<128x512xf32, #tpu.memory_space<vmem>>, vector<128x512xf32>
    %cst_136 = arith.constant dense<0.000000e+00> : vector<64x512xf32>
    %301 = tpu.matmul %299, %300, %cst_136 {dimension_numbers = #tpu.dot_dimension_numbers<[1], [0], [0], [1], [0, 0, 1, 1], [], []>} : vector<64x128xf32>, vector<128x512xf32>, vector<64x512xf32> -> vector<64x512xf32>
    %c0_137 = arith.constant 0 : index
    %c0_138 = arith.constant 0 : index
    %302 = vector.load %arg6[%c0_137, %c0_138] : memref<1x512xf32, #tpu.memory_space<vmem>>, vector<1x512xf32>
    %303 = vector.broadcast %302 : vector<1x512xf32> to vector<64x512xf32>
    %304 = arith.addf %301, %303 : vector<64x512xf32>
    %c0_139 = arith.constant 0 : index
    %c0_140 = arith.constant 0 : index
    %305 = vector.load %arg9[%c0_139, %c0_140] : memref<64x512xf32, #tpu.memory_space<vmem>>, vector<64x512xf32>
    tpu.vector_store %arg9[%c0_139, %c0_140], %304 {strides = array<i32>} : memref<64x512xf32, #tpu.memory_space<vmem>>, vector<64x512xf32>,
    %c0_141 = arith.constant 0 : index
    %c0_142 = arith.constant 0 : index
    %306 = vector.load %arg9[%c0_141, %c0_142] : memref<64x512xf32, #tpu.memory_space<vmem>>, vector<8x512xf32>
    %c0_143 = arith.constant 0 : index
    %c0_144 = arith.constant 0 : index
    %307 = vector.load %arg5[%c0_143, %c0_144] : memref<128x512xf32, #tpu.memory_space<vmem>>, vector<128x512xf32>
    %cst_145 = arith.constant dense<0.000000e+00> : vector<8x512xf32>
    %308 = tpu.matmul %297, %307, %cst_145 {dimension_numbers = #tpu.dot_dimension_numbers<[1], [0], [0], [1], [0, 0, 1, 1], [], []>} : vector<8x128xf32>, vector<128x512xf32>, vector<8x512xf32> -> vector<8x512xf32>
    %309 = arith.addf %306, %308 : vector<8x512xf32>
    %310 = vector.extract_strided_slice %309 {offsets = [0, 0], sizes = [8, 128], strides = [1, 1]} : vector<8x512xf32> to vector<8x128xf32>
    %cst_146 = arith.constant 5.000000e-01 : f32
    %311 = vector.broadcast %cst_146 : f32 to vector<8x128xf32>
    %312 = arith.mulf %311, %310 : vector<8x128xf32>
    %313 = math.tanh %312 : vector<8x128xf32>
    %cst_147 = arith.constant 5.000000e-01 : f32
    %314 = vector.broadcast %cst_147 : f32 to vector<8x128xf32>
    %315 = arith.mulf %314, %313 : vector<8x128xf32>
    %cst_148 = arith.constant 5.000000e-01 : f32
    %316 = vector.broadcast %cst_148 : f32 to vector<8x128xf32>
    %317 = arith.addf %315, %316 : vector<8x128xf32>
    %318 = vector.extract_strided_slice %309 {offsets = [0, 128], sizes = [8, 128], strides = [1, 1]} : vector<8x512xf32> to vector<8x128xf32>
    %cst_149 = arith.constant 5.000000e-01 : f32
    %319 = vector.broadcast %cst_149 : f32 to vector<8x128xf32>
    %320 = arith.mulf %319, %318 : vector<8x128xf32>
    %321 = math.tanh %320 : vector<8x128xf32>
    %cst_150 = arith.constant 5.000000e-01 : f32
    %322 = vector.broadcast %cst_150 : f32 to vector<8x128xf32>
    %323 = arith.mulf %322, %321 : vector<8x128xf32>
    %cst_151 = arith.constant 5.000000e-01 : f32
    %324 = vector.broadcast %cst_151 : f32 to vector<8x128xf32>
    %325 = arith.addf %323, %324 : vector<8x128xf32>
    %326 = vector.extract_strided_slice %309 {offsets = [0, 256], sizes = [8, 128], strides = [1, 1]} : vector<8x512xf32> to vector<8x128xf32>
    %327 = math.tanh %326 : vector<8x128xf32>
    %328 = vector.extract_strided_slice %309 {offsets = [0, 384], sizes = [8, 128], strides = [1, 1]} : vector<8x512xf32> to vector<8x128xf32>
    %cst_152 = arith.constant 5.000000e-01 : f32
    %329 = vector.broadcast %cst_152 : f32 to vector<8x128xf32>
    %330 = arith.mulf %329, %328 : vector<8x128xf32>
    %331 = math.tanh %330 : vector<8x128xf32>
    %cst_153 = arith.constant 5.000000e-01 : f32
    %332 = vector.broadcast %cst_153 : f32 to vector<8x128xf32>
    %333 = arith.mulf %332, %331 : vector<8x128xf32>
    %cst_154 = arith.constant 5.000000e-01 : f32
    %334 = vector.broadcast %cst_154 : f32 to vector<8x128xf32>
    %335 = arith.addf %333, %334 : vector<8x128xf32>
    %336 = arith.mulf %325, %298 : vector<8x128xf32>
    %337 = arith.mulf %317, %327 : vector<8x128xf32>
    %338 = arith.addf %336, %337 : vector<8x128xf32>
    %339 = math.tanh %338 : vector<8x128xf32>
    %340 = arith.mulf %335, %339 : vector<8x128xf32>
    %c0_155 = arith.constant 0 : index
    %c0_156 = arith.constant 0 : index
    %341 = vector.load %arg7[%c0_155, %c0_156] : memref<64x128xf32, #tpu.memory_space<vmem>>, vector<8x128xf32>
    tpu.vector_store %arg7[%c0_155, %c0_156], %340 {strides = array<i32>} : memref<64x128xf32, #tpu.memory_space<vmem>>, vector<8x128xf32>,
    %c8_157 = arith.constant 8 : index
    %c0_158 = arith.constant 0 : index
    %342 = vector.load %arg9[%c8_157, %c0_158] : memref<64x512xf32, #tpu.memory_space<vmem>>, vector<8x512xf32>
    %c0_159 = arith.constant 0 : index
    %c0_160 = arith.constant 0 : index
    %343 = vector.load %arg5[%c0_159, %c0_160] : memref<128x512xf32, #tpu.memory_space<vmem>>, vector<128x512xf32>
    %cst_161 = arith.constant dense<0.000000e+00> : vector<8x512xf32>
    %344 = tpu.matmul %340, %343, %cst_161 {dimension_numbers = #tpu.dot_dimension_numbers<[1], [0], [0], [1], [0, 0, 1, 1], [], []>} : vector<8x128xf32>, vector<128x512xf32>, vector<8x512xf32> -> vector<8x512xf32>
    %345 = arith.addf %342, %344 : vector<8x512xf32>
    %346 = vector.extract_strided_slice %345 {offsets = [0, 0], sizes = [8, 128], strides = [1, 1]} : vector<8x512xf32> to vector<8x128xf32>
    %cst_162 = arith.constant 5.000000e-01 : f32
    %347 = vector.broadcast %cst_162 : f32 to vector<8x128xf32>
    %348 = arith.mulf %347, %346 : vector<8x128xf32>
    %349 = math.tanh %348 : vector<8x128xf32>
    %cst_163 = arith.constant 5.000000e-01 : f32
    %350 = vector.broadcast %cst_163 : f32 to vector<8x128xf32>
    %351 = arith.mulf %350, %349 : vector<8x128xf32>
    %cst_164 = arith.constant 5.000000e-01 : f32
    %352 = vector.broadcast %cst_164 : f32 to vector<8x128xf32>
    %353 = arith.addf %351, %352 : vector<8x128xf32>
    %354 = vector.extract_strided_slice %345 {offsets = [0, 128], sizes = [8, 128], strides = [1, 1]} : vector<8x512xf32> to vector<8x128xf32>
    %cst_165 = arith.constant 5.000000e-01 : f32
    %355 = vector.broadcast %cst_165 : f32 to vector<8x128xf32>
    %356 = arith.mulf %355, %354 : vector<8x128xf32>
    %357 = math.tanh %356 : vector<8x128xf32>
    %cst_166 = arith.constant 5.000000e-01 : f32
    %358 = vector.broadcast %cst_166 : f32 to vector<8x128xf32>
    %359 = arith.mulf %358, %357 : vector<8x128xf32>
    %cst_167 = arith.constant 5.000000e-01 : f32
    %360 = vector.broadcast %cst_167 : f32 to vector<8x128xf32>
    %361 = arith.addf %359, %360 : vector<8x128xf32>
    %362 = vector.extract_strided_slice %345 {offsets = [0, 256], sizes = [8, 128], strides = [1, 1]} : vector<8x512xf32> to vector<8x128xf32>
    %363 = math.tanh %362 : vector<8x128xf32>
    %364 = vector.extract_strided_slice %345 {offsets = [0, 384], sizes = [8, 128], strides = [1, 1]} : vector<8x512xf32> to vector<8x128xf32>
    %cst_168 = arith.constant 5.000000e-01 : f32
    %365 = vector.broadcast %cst_168 : f32 to vector<8x128xf32>
    %366 = arith.mulf %365, %364 : vector<8x128xf32>
    %367 = math.tanh %366 : vector<8x128xf32>
    %cst_169 = arith.constant 5.000000e-01 : f32
    %368 = vector.broadcast %cst_169 : f32 to vector<8x128xf32>
    %369 = arith.mulf %368, %367 : vector<8x128xf32>
    %cst_170 = arith.constant 5.000000e-01 : f32
    %370 = vector.broadcast %cst_170 : f32 to vector<8x128xf32>
    %371 = arith.addf %369, %370 : vector<8x128xf32>
    %372 = arith.mulf %361, %338 : vector<8x128xf32>
    %373 = arith.mulf %353, %363 : vector<8x128xf32>
    %374 = arith.addf %372, %373 : vector<8x128xf32>
    %375 = math.tanh %374 : vector<8x128xf32>
    %376 = arith.mulf %371, %375 : vector<8x128xf32>
    %c8_171 = arith.constant 8 : index
    %c0_172 = arith.constant 0 : index
    %377 = vector.load %arg7[%c8_171, %c0_172] : memref<64x128xf32, #tpu.memory_space<vmem>>, vector<8x128xf32>
    tpu.vector_store %arg7[%c8_171, %c0_172], %376 {strides = array<i32>} : memref<64x128xf32, #tpu.memory_space<vmem>>, vector<8x128xf32>,
    %c16_173 = arith.constant 16 : index
    %c0_174 = arith.constant 0 : index
    %378 = vector.load %arg9[%c16_173, %c0_174] : memref<64x512xf32, #tpu.memory_space<vmem>>, vector<8x512xf32>
    %c0_175 = arith.constant 0 : index
    %c0_176 = arith.constant 0 : index
    %379 = vector.load %arg5[%c0_175, %c0_176] : memref<128x512xf32, #tpu.memory_space<vmem>>, vector<128x512xf32>
    %cst_177 = arith.constant dense<0.000000e+00> : vector<8x512xf32>
    %380 = tpu.matmul %376, %379, %cst_177 {dimension_numbers = #tpu.dot_dimension_numbers<[1], [0], [0], [1], [0, 0, 1, 1], [], []>} : vector<8x128xf32>, vector<128x512xf32>, vector<8x512xf32> -> vector<8x512xf32>
    %381 = arith.addf %378, %380 : vector<8x512xf32>
    %382 = vector.extract_strided_slice %381 {offsets = [0, 0], sizes = [8, 128], strides = [1, 1]} : vector<8x512xf32> to vector<8x128xf32>
    %cst_178 = arith.constant 5.000000e-01 : f32
    %383 = vector.broadcast %cst_178 : f32 to vector<8x128xf32>
    %384 = arith.mulf %383, %382 : vector<8x128xf32>
    %385 = math.tanh %384 : vector<8x128xf32>
    %cst_179 = arith.constant 5.000000e-01 : f32
    %386 = vector.broadcast %cst_179 : f32 to vector<8x128xf32>
    %387 = arith.mulf %386, %385 : vector<8x128xf32>
    %cst_180 = arith.constant 5.000000e-01 : f32
    %388 = vector.broadcast %cst_180 : f32 to vector<8x128xf32>
    %389 = arith.addf %387, %388 : vector<8x128xf32>
    %390 = vector.extract_strided_slice %381 {offsets = [0, 128], sizes = [8, 128], strides = [1, 1]} : vector<8x512xf32> to vector<8x128xf32>
    %cst_181 = arith.constant 5.000000e-01 : f32
    %391 = vector.broadcast %cst_181 : f32 to vector<8x128xf32>
    %392 = arith.mulf %391, %390 : vector<8x128xf32>
    %393 = math.tanh %392 : vector<8x128xf32>
    %cst_182 = arith.constant 5.000000e-01 : f32
    %394 = vector.broadcast %cst_182 : f32 to vector<8x128xf32>
    %395 = arith.mulf %394, %393 : vector<8x128xf32>
    %cst_183 = arith.constant 5.000000e-01 : f32
    %396 = vector.broadcast %cst_183 : f32 to vector<8x128xf32>
    %397 = arith.addf %395, %396 : vector<8x128xf32>
    %398 = vector.extract_strided_slice %381 {offsets = [0, 256], sizes = [8, 128], strides = [1, 1]} : vector<8x512xf32> to vector<8x128xf32>
    %399 = math.tanh %398 : vector<8x128xf32>
    %400 = vector.extract_strided_slice %381 {offsets = [0, 384], sizes = [8, 128], strides = [1, 1]} : vector<8x512xf32> to vector<8x128xf32>
    %cst_184 = arith.constant 5.000000e-01 : f32
    %401 = vector.broadcast %cst_184 : f32 to vector<8x128xf32>
    %402 = arith.mulf %401, %400 : vector<8x128xf32>
    %403 = math.tanh %402 : vector<8x128xf32>
    %cst_185 = arith.constant 5.000000e-01 : f32
    %404 = vector.broadcast %cst_185 : f32 to vector<8x128xf32>
    %405 = arith.mulf %404, %403 : vector<8x128xf32>
    %cst_186 = arith.constant 5.000000e-01 : f32
    %406 = vector.broadcast %cst_186 : f32 to vector<8x128xf32>
    %407 = arith.addf %405, %406 : vector<8x128xf32>
    %408 = arith.mulf %397, %374 : vector<8x128xf32>
    %409 = arith.mulf %389, %399 : vector<8x128xf32>
    %410 = arith.addf %408, %409 : vector<8x128xf32>
    %411 = math.tanh %410 : vector<8x128xf32>
    %412 = arith.mulf %407, %411 : vector<8x128xf32>
    %c16_187 = arith.constant 16 : index
    %c0_188 = arith.constant 0 : index
    %413 = vector.load %arg7[%c16_187, %c0_188] : memref<64x128xf32, #tpu.memory_space<vmem>>, vector<8x128xf32>
    tpu.vector_store %arg7[%c16_187, %c0_188], %412 {strides = array<i32>} : memref<64x128xf32, #tpu.memory_space<vmem>>, vector<8x128xf32>,
    %c24_189 = arith.constant 24 : index
    %c0_190 = arith.constant 0 : index
    %414 = vector.load %arg9[%c24_189, %c0_190] : memref<64x512xf32, #tpu.memory_space<vmem>>, vector<8x512xf32>
    %c0_191 = arith.constant 0 : index
    %c0_192 = arith.constant 0 : index
    %415 = vector.load %arg5[%c0_191, %c0_192] : memref<128x512xf32, #tpu.memory_space<vmem>>, vector<128x512xf32>
    %cst_193 = arith.constant dense<0.000000e+00> : vector<8x512xf32>
    %416 = tpu.matmul %412, %415, %cst_193 {dimension_numbers = #tpu.dot_dimension_numbers<[1], [0], [0], [1], [0, 0, 1, 1], [], []>} : vector<8x128xf32>, vector<128x512xf32>, vector<8x512xf32> -> vector<8x512xf32>
    %417 = arith.addf %414, %416 : vector<8x512xf32>
    %418 = vector.extract_strided_slice %417 {offsets = [0, 0], sizes = [8, 128], strides = [1, 1]} : vector<8x512xf32> to vector<8x128xf32>
    %cst_194 = arith.constant 5.000000e-01 : f32
    %419 = vector.broadcast %cst_194 : f32 to vector<8x128xf32>
    %420 = arith.mulf %419, %418 : vector<8x128xf32>
    %421 = math.tanh %420 : vector<8x128xf32>
    %cst_195 = arith.constant 5.000000e-01 : f32
    %422 = vector.broadcast %cst_195 : f32 to vector<8x128xf32>
    %423 = arith.mulf %422, %421 : vector<8x128xf32>
    %cst_196 = arith.constant 5.000000e-01 : f32
    %424 = vector.broadcast %cst_196 : f32 to vector<8x128xf32>
    %425 = arith.addf %423, %424 : vector<8x128xf32>
    %426 = vector.extract_strided_slice %417 {offsets = [0, 128], sizes = [8, 128], strides = [1, 1]} : vector<8x512xf32> to vector<8x128xf32>
    %cst_197 = arith.constant 5.000000e-01 : f32
    %427 = vector.broadcast %cst_197 : f32 to vector<8x128xf32>
    %428 = arith.mulf %427, %426 : vector<8x128xf32>
    %429 = math.tanh %428 : vector<8x128xf32>
    %cst_198 = arith.constant 5.000000e-01 : f32
    %430 = vector.broadcast %cst_198 : f32 to vector<8x128xf32>
    %431 = arith.mulf %430, %429 : vector<8x128xf32>
    %cst_199 = arith.constant 5.000000e-01 : f32
    %432 = vector.broadcast %cst_199 : f32 to vector<8x128xf32>
    %433 = arith.addf %431, %432 : vector<8x128xf32>
    %434 = vector.extract_strided_slice %417 {offsets = [0, 256], sizes = [8, 128], strides = [1, 1]} : vector<8x512xf32> to vector<8x128xf32>
    %435 = math.tanh %434 : vector<8x128xf32>
    %436 = vector.extract_strided_slice %417 {offsets = [0, 384], sizes = [8, 128], strides = [1, 1]} : vector<8x512xf32> to vector<8x128xf32>
    %cst_200 = arith.constant 5.000000e-01 : f32
    %437 = vector.broadcast %cst_200 : f32 to vector<8x128xf32>
    %438 = arith.mulf %437, %436 : vector<8x128xf32>
    %439 = math.tanh %438 : vector<8x128xf32>
    %cst_201 = arith.constant 5.000000e-01 : f32
    %440 = vector.broadcast %cst_201 : f32 to vector<8x128xf32>
    %441 = arith.mulf %440, %439 : vector<8x128xf32>
    %cst_202 = arith.constant 5.000000e-01 : f32
    %442 = vector.broadcast %cst_202 : f32 to vector<8x128xf32>
    %443 = arith.addf %441, %442 : vector<8x128xf32>
    %444 = arith.mulf %433, %410 : vector<8x128xf32>
    %445 = arith.mulf %425, %435 : vector<8x128xf32>
    %446 = arith.addf %444, %445 : vector<8x128xf32>
    %447 = math.tanh %446 : vector<8x128xf32>
    %448 = arith.mulf %443, %447 : vector<8x128xf32>
    %c24_203 = arith.constant 24 : index
    %c0_204 = arith.constant 0 : index
    %449 = vector.load %arg7[%c24_203, %c0_204] : memref<64x128xf32, #tpu.memory_space<vmem>>, vector<8x128xf32>
    tpu.vector_store %arg7[%c24_203, %c0_204], %448 {strides = array<i32>} : memref<64x128xf32, #tpu.memory_space<vmem>>, vector<8x128xf32>,
    %c32_205 = arith.constant 32 : index
    %c0_206 = arith.constant 0 : index
    %450 = vector.load %arg9[%c32_205, %c0_206] : memref<64x512xf32, #tpu.memory_space<vmem>>, vector<8x512xf32>
    %c0_207 = arith.constant 0 : index
    %c0_208 = arith.constant 0 : index
    %451 = vector.load %arg5[%c0_207, %c0_208] : memref<128x512xf32, #tpu.memory_space<vmem>>, vector<128x512xf32>
    %cst_209 = arith.constant dense<0.000000e+00> : vector<8x512xf32>
    %452 = tpu.matmul %448, %451, %cst_209 {dimension_numbers = #tpu.dot_dimension_numbers<[1], [0], [0], [1], [0, 0, 1, 1], [], []>} : vector<8x128xf32>, vector<128x512xf32>, vector<8x512xf32> -> vector<8x512xf32>
    %453 = arith.addf %450, %452 : vector<8x512xf32>
    %454 = vector.extract_strided_slice %453 {offsets = [0, 0], sizes = [8, 128], strides = [1, 1]} : vector<8x512xf32> to vector<8x128xf32>
    %cst_210 = arith.constant 5.000000e-01 : f32
    %455 = vector.broadcast %cst_210 : f32 to vector<8x128xf32>
    %456 = arith.mulf %455, %454 : vector<8x128xf32>
    %457 = math.tanh %456 : vector<8x128xf32>
    %cst_211 = arith.constant 5.000000e-01 : f32
    %458 = vector.broadcast %cst_211 : f32 to vector<8x128xf32>
    %459 = arith.mulf %458, %457 : vector<8x128xf32>
    %cst_212 = arith.constant 5.000000e-01 : f32
    %460 = vector.broadcast %cst_212 : f32 to vector<8x128xf32>
    %461 = arith.addf %459, %460 : vector<8x128xf32>
    %462 = vector.extract_strided_slice %453 {offsets = [0, 128], sizes = [8, 128], strides = [1, 1]} : vector<8x512xf32> to vector<8x128xf32>
    %cst_213 = arith.constant 5.000000e-01 : f32
    %463 = vector.broadcast %cst_213 : f32 to vector<8x128xf32>
    %464 = arith.mulf %463, %462 : vector<8x128xf32>
    %465 = math.tanh %464 : vector<8x128xf32>
    %cst_214 = arith.constant 5.000000e-01 : f32
    %466 = vector.broadcast %cst_214 : f32 to vector<8x128xf32>
    %467 = arith.mulf %466, %465 : vector<8x128xf32>
    %cst_215 = arith.constant 5.000000e-01 : f32
    %468 = vector.broadcast %cst_215 : f32 to vector<8x128xf32>
    %469 = arith.addf %467, %468 : vector<8x128xf32>
    %470 = vector.extract_strided_slice %453 {offsets = [0, 256], sizes = [8, 128], strides = [1, 1]} : vector<8x512xf32> to vector<8x128xf32>
    %471 = math.tanh %470 : vector<8x128xf32>
    %472 = vector.extract_strided_slice %453 {offsets = [0, 384], sizes = [8, 128], strides = [1, 1]} : vector<8x512xf32> to vector<8x128xf32>
    %cst_216 = arith.constant 5.000000e-01 : f32
    %473 = vector.broadcast %cst_216 : f32 to vector<8x128xf32>
    %474 = arith.mulf %473, %472 : vector<8x128xf32>
    %475 = math.tanh %474 : vector<8x128xf32>
    %cst_217 = arith.constant 5.000000e-01 : f32
    %476 = vector.broadcast %cst_217 : f32 to vector<8x128xf32>
    %477 = arith.mulf %476, %475 : vector<8x128xf32>
    %cst_218 = arith.constant 5.000000e-01 : f32
    %478 = vector.broadcast %cst_218 : f32 to vector<8x128xf32>
    %479 = arith.addf %477, %478 : vector<8x128xf32>
    %480 = arith.mulf %469, %446 : vector<8x128xf32>
    %481 = arith.mulf %461, %471 : vector<8x128xf32>
    %482 = arith.addf %480, %481 : vector<8x128xf32>
    %483 = math.tanh %482 : vector<8x128xf32>
    %484 = arith.mulf %479, %483 : vector<8x128xf32>
    %c32_219 = arith.constant 32 : index
    %c0_220 = arith.constant 0 : index
    %485 = vector.load %arg7[%c32_219, %c0_220] : memref<64x128xf32, #tpu.memory_space<vmem>>, vector<8x128xf32>
    tpu.vector_store %arg7[%c32_219, %c0_220], %484 {strides = array<i32>} : memref<64x128xf32, #tpu.memory_space<vmem>>, vector<8x128xf32>,
    %c40_221 = arith.constant 40 : index
    %c0_222 = arith.constant 0 : index
    %486 = vector.load %arg9[%c40_221, %c0_222] : memref<64x512xf32, #tpu.memory_space<vmem>>, vector<8x512xf32>
    %c0_223 = arith.constant 0 : index
    %c0_224 = arith.constant 0 : index
    %487 = vector.load %arg5[%c0_223, %c0_224] : memref<128x512xf32, #tpu.memory_space<vmem>>, vector<128x512xf32>
    %cst_225 = arith.constant dense<0.000000e+00> : vector<8x512xf32>
    %488 = tpu.matmul %484, %487, %cst_225 {dimension_numbers = #tpu.dot_dimension_numbers<[1], [0], [0], [1], [0, 0, 1, 1], [], []>} : vector<8x128xf32>, vector<128x512xf32>, vector<8x512xf32> -> vector<8x512xf32>
    %489 = arith.addf %486, %488 : vector<8x512xf32>
    %490 = vector.extract_strided_slice %489 {offsets = [0, 0], sizes = [8, 128], strides = [1, 1]} : vector<8x512xf32> to vector<8x128xf32>
    %cst_226 = arith.constant 5.000000e-01 : f32
    %491 = vector.broadcast %cst_226 : f32 to vector<8x128xf32>
    %492 = arith.mulf %491, %490 : vector<8x128xf32>
    %493 = math.tanh %492 : vector<8x128xf32>
    %cst_227 = arith.constant 5.000000e-01 : f32
    %494 = vector.broadcast %cst_227 : f32 to vector<8x128xf32>
    %495 = arith.mulf %494, %493 : vector<8x128xf32>
    %cst_228 = arith.constant 5.000000e-01 : f32
    %496 = vector.broadcast %cst_228 : f32 to vector<8x128xf32>
    %497 = arith.addf %495, %496 : vector<8x128xf32>
    %498 = vector.extract_strided_slice %489 {offsets = [0, 128], sizes = [8, 128], strides = [1, 1]} : vector<8x512xf32> to vector<8x128xf32>
    %cst_229 = arith.constant 5.000000e-01 : f32
    %499 = vector.broadcast %cst_229 : f32 to vector<8x128xf32>
    %500 = arith.mulf %499, %498 : vector<8x128xf32>
    %501 = math.tanh %500 : vector<8x128xf32>
    %cst_230 = arith.constant 5.000000e-01 : f32
    %502 = vector.broadcast %cst_230 : f32 to vector<8x128xf32>
    %503 = arith.mulf %502, %501 : vector<8x128xf32>
    %cst_231 = arith.constant 5.000000e-01 : f32
    %504 = vector.broadcast %cst_231 : f32 to vector<8x128xf32>
    %505 = arith.addf %503, %504 : vector<8x128xf32>
    %506 = vector.extract_strided_slice %489 {offsets = [0, 256], sizes = [8, 128], strides = [1, 1]} : vector<8x512xf32> to vector<8x128xf32>
    %507 = math.tanh %506 : vector<8x128xf32>
    %508 = vector.extract_strided_slice %489 {offsets = [0, 384], sizes = [8, 128], strides = [1, 1]} : vector<8x512xf32> to vector<8x128xf32>
    %cst_232 = arith.constant 5.000000e-01 : f32
    %509 = vector.broadcast %cst_232 : f32 to vector<8x128xf32>
    %510 = arith.mulf %509, %508 : vector<8x128xf32>
    %511 = math.tanh %510 : vector<8x128xf32>
    %cst_233 = arith.constant 5.000000e-01 : f32
    %512 = vector.broadcast %cst_233 : f32 to vector<8x128xf32>
    %513 = arith.mulf %512, %511 : vector<8x128xf32>
    %cst_234 = arith.constant 5.000000e-01 : f32
    %514 = vector.broadcast %cst_234 : f32 to vector<8x128xf32>
    %515 = arith.addf %513, %514 : vector<8x128xf32>
    %516 = arith.mulf %505, %482 : vector<8x128xf32>
    %517 = arith.mulf %497, %507 : vector<8x128xf32>
    %518 = arith.addf %516, %517 : vector<8x128xf32>
    %519 = math.tanh %518 : vector<8x128xf32>
    %520 = arith.mulf %515, %519 : vector<8x128xf32>
    %c40_235 = arith.constant 40 : index
    %c0_236 = arith.constant 0 : index
    %521 = vector.load %arg7[%c40_235, %c0_236] : memref<64x128xf32, #tpu.memory_space<vmem>>, vector<8x128xf32>
    tpu.vector_store %arg7[%c40_235, %c0_236], %520 {strides = array<i32>} : memref<64x128xf32, #tpu.memory_space<vmem>>, vector<8x128xf32>,
    %c48_237 = arith.constant 48 : index
    %c0_238 = arith.constant 0 : index
    %522 = vector.load %arg9[%c48_237, %c0_238] : memref<64x512xf32, #tpu.memory_space<vmem>>, vector<8x512xf32>
    %c0_239 = arith.constant 0 : index
    %c0_240 = arith.constant 0 : index
    %523 = vector.load %arg5[%c0_239, %c0_240] : memref<128x512xf32, #tpu.memory_space<vmem>>, vector<128x512xf32>
    %cst_241 = arith.constant dense<0.000000e+00> : vector<8x512xf32>
    %524 = tpu.matmul %520, %523, %cst_241 {dimension_numbers = #tpu.dot_dimension_numbers<[1], [0], [0], [1], [0, 0, 1, 1], [], []>} : vector<8x128xf32>, vector<128x512xf32>, vector<8x512xf32> -> vector<8x512xf32>
    %525 = arith.addf %522, %524 : vector<8x512xf32>
    %526 = vector.extract_strided_slice %525 {offsets = [0, 0], sizes = [8, 128], strides = [1, 1]} : vector<8x512xf32> to vector<8x128xf32>
    %cst_242 = arith.constant 5.000000e-01 : f32
    %527 = vector.broadcast %cst_242 : f32 to vector<8x128xf32>
    %528 = arith.mulf %527, %526 : vector<8x128xf32>
    %529 = math.tanh %528 : vector<8x128xf32>
    %cst_243 = arith.constant 5.000000e-01 : f32
    %530 = vector.broadcast %cst_243 : f32 to vector<8x128xf32>
    %531 = arith.mulf %530, %529 : vector<8x128xf32>
    %cst_244 = arith.constant 5.000000e-01 : f32
    %532 = vector.broadcast %cst_244 : f32 to vector<8x128xf32>
    %533 = arith.addf %531, %532 : vector<8x128xf32>
    %534 = vector.extract_strided_slice %525 {offsets = [0, 128], sizes = [8, 128], strides = [1, 1]} : vector<8x512xf32> to vector<8x128xf32>
    %cst_245 = arith.constant 5.000000e-01 : f32
    %535 = vector.broadcast %cst_245 : f32 to vector<8x128xf32>
    %536 = arith.mulf %535, %534 : vector<8x128xf32>
    %537 = math.tanh %536 : vector<8x128xf32>
    %cst_246 = arith.constant 5.000000e-01 : f32
    %538 = vector.broadcast %cst_246 : f32 to vector<8x128xf32>
    %539 = arith.mulf %538, %537 : vector<8x128xf32>
    %cst_247 = arith.constant 5.000000e-01 : f32
    %540 = vector.broadcast %cst_247 : f32 to vector<8x128xf32>
    %541 = arith.addf %539, %540 : vector<8x128xf32>
    %542 = vector.extract_strided_slice %525 {offsets = [0, 256], sizes = [8, 128], strides = [1, 1]} : vector<8x512xf32> to vector<8x128xf32>
    %543 = math.tanh %542 : vector<8x128xf32>
    %544 = vector.extract_strided_slice %525 {offsets = [0, 384], sizes = [8, 128], strides = [1, 1]} : vector<8x512xf32> to vector<8x128xf32>
    %cst_248 = arith.constant 5.000000e-01 : f32
    %545 = vector.broadcast %cst_248 : f32 to vector<8x128xf32>
    %546 = arith.mulf %545, %544 : vector<8x128xf32>
    %547 = math.tanh %546 : vector<8x128xf32>
    %cst_249 = arith.constant 5.000000e-01 : f32
    %548 = vector.broadcast %cst_249 : f32 to vector<8x128xf32>
    %549 = arith.mulf %548, %547 : vector<8x128xf32>
    %cst_250 = arith.constant 5.000000e-01 : f32
    %550 = vector.broadcast %cst_250 : f32 to vector<8x128xf32>
    %551 = arith.addf %549, %550 : vector<8x128xf32>
    %552 = arith.mulf %541, %518 : vector<8x128xf32>
    %553 = arith.mulf %533, %543 : vector<8x128xf32>
    %554 = arith.addf %552, %553 : vector<8x128xf32>
    %555 = math.tanh %554 : vector<8x128xf32>
    %556 = arith.mulf %551, %555 : vector<8x128xf32>
    %c48_251 = arith.constant 48 : index
    %c0_252 = arith.constant 0 : index
    %557 = vector.load %arg7[%c48_251, %c0_252] : memref<64x128xf32, #tpu.memory_space<vmem>>, vector<8x128xf32>
    tpu.vector_store %arg7[%c48_251, %c0_252], %556 {strides = array<i32>} : memref<64x128xf32, #tpu.memory_space<vmem>>, vector<8x128xf32>,
    %c56_253 = arith.constant 56 : index
    %c0_254 = arith.constant 0 : index
    %558 = vector.load %arg9[%c56_253, %c0_254] : memref<64x512xf32, #tpu.memory_space<vmem>>, vector<8x512xf32>
    %c0_255 = arith.constant 0 : index
    %c0_256 = arith.constant 0 : index
    %559 = vector.load %arg5[%c0_255, %c0_256] : memref<128x512xf32, #tpu.memory_space<vmem>>, vector<128x512xf32>
    %cst_257 = arith.constant dense<0.000000e+00> : vector<8x512xf32>
    %560 = tpu.matmul %556, %559, %cst_257 {dimension_numbers = #tpu.dot_dimension_numbers<[1], [0], [0], [1], [0, 0, 1, 1], [], []>} : vector<8x128xf32>, vector<128x512xf32>, vector<8x512xf32> -> vector<8x512xf32>
    %561 = arith.addf %558, %560 : vector<8x512xf32>
    %562 = vector.extract_strided_slice %561 {offsets = [0, 0], sizes = [8, 128], strides = [1, 1]} : vector<8x512xf32> to vector<8x128xf32>
    %cst_258 = arith.constant 5.000000e-01 : f32
    %563 = vector.broadcast %cst_258 : f32 to vector<8x128xf32>
    %564 = arith.mulf %563, %562 : vector<8x128xf32>
    %565 = math.tanh %564 : vector<8x128xf32>
    %cst_259 = arith.constant 5.000000e-01 : f32
    %566 = vector.broadcast %cst_259 : f32 to vector<8x128xf32>
    %567 = arith.mulf %566, %565 : vector<8x128xf32>
    %cst_260 = arith.constant 5.000000e-01 : f32
    %568 = vector.broadcast %cst_260 : f32 to vector<8x128xf32>
    %569 = arith.addf %567, %568 : vector<8x128xf32>
    %570 = vector.extract_strided_slice %561 {offsets = [0, 128], sizes = [8, 128], strides = [1, 1]} : vector<8x512xf32> to vector<8x128xf32>
    %cst_261 = arith.constant 5.000000e-01 : f32
    %571 = vector.broadcast %cst_261 : f32 to vector<8x128xf32>
    %572 = arith.mulf %571, %570 : vector<8x128xf32>
    %573 = math.tanh %572 : vector<8x128xf32>
    %cst_262 = arith.constant 5.000000e-01 : f32
    %574 = vector.broadcast %cst_262 : f32 to vector<8x128xf32>
    %575 = arith.mulf %574, %573 : vector<8x128xf32>
    %cst_263 = arith.constant 5.000000e-01 : f32
    %576 = vector.broadcast %cst_263 : f32 to vector<8x128xf32>
    %577 = arith.addf %575, %576 : vector<8x128xf32>
    %578 = vector.extract_strided_slice %561 {offsets = [0, 256], sizes = [8, 128], strides = [1, 1]} : vector<8x512xf32> to vector<8x128xf32>
    %579 = math.tanh %578 : vector<8x128xf32>
    %580 = vector.extract_strided_slice %561 {offsets = [0, 384], sizes = [8, 128], strides = [1, 1]} : vector<8x512xf32> to vector<8x128xf32>
    %cst_264 = arith.constant 5.000000e-01 : f32
    %581 = vector.broadcast %cst_264 : f32 to vector<8x128xf32>
    %582 = arith.mulf %581, %580 : vector<8x128xf32>
    %583 = math.tanh %582 : vector<8x128xf32>
    %cst_265 = arith.constant 5.000000e-01 : f32
    %584 = vector.broadcast %cst_265 : f32 to vector<8x128xf32>
    %585 = arith.mulf %584, %583 : vector<8x128xf32>
    %cst_266 = arith.constant 5.000000e-01 : f32
    %586 = vector.broadcast %cst_266 : f32 to vector<8x128xf32>
    %587 = arith.addf %585, %586 : vector<8x128xf32>
    %588 = arith.mulf %577, %554 : vector<8x128xf32>
    %589 = arith.mulf %569, %579 : vector<8x128xf32>
    %590 = arith.addf %588, %589 : vector<8x128xf32>
    %591 = math.tanh %590 : vector<8x128xf32>
    %592 = arith.mulf %587, %591 : vector<8x128xf32>
    %c56_267 = arith.constant 56 : index
    %c0_268 = arith.constant 0 : index
    %593 = vector.load %arg7[%c56_267, %c0_268] : memref<64x128xf32, #tpu.memory_space<vmem>>, vector<8x128xf32>
    tpu.vector_store %arg7[%c56_267, %c0_268], %592 {strides = array<i32>} : memref<64x128xf32, #tpu.memory_space<vmem>>, vector<8x128xf32>,
    %c0_269 = arith.constant 0 : index
    %c0_270 = arith.constant 0 : index
    %594 = vector.load %arg8[%c0_269, %c0_270] : memref<8x128xf32, #tpu.memory_space<vmem>>, vector<8x128xf32>
    tpu.vector_store %arg8[%c0_269, %c0_270], %590 {strides = array<i32>} : memref<8x128xf32, #tpu.memory_space<vmem>>, vector<8x128xf32>,
    return
  }
}

</mosaic_0001>

<llo_original>
// kernel: rnn_forward.1
$region0: #{rnn_forward.1}
  #allocation0 [shape = 'u32[]', space=smem, size = 0x4, offset = 0x4, fixed_abs, tag = 'smem constant byte address 0x4 - core index']
  #allocation1 [shape = 'u32[144,128]{1,0:T(1,128)}', space=vmem, size = 0x12000, scoped, tag = 'internal scratch']
  #allocation2 [shape = 'f32[64,512]{1,0:T(8,128)}', space=vmem, size = 0x20000, scoped, tag = 'scratch operand']
  #allocation3 [shape = 'f32[64,128]{1,0:T(8,128)}', space=vmem, size = 0x8000, scoped, tag = 'scratch operand']
  %s0 = inlined_call_operand.vmem [shape: f32[64,128], index: 0, kind: input, shape index: {}]
  %s1 = inlined_call_operand.hbm [shape: f32[128,512], index: 1, kind: input, shape index: {}]
  %s2 = inlined_call_operand.hbm [shape: f32[128,512], index: 2, kind: input, shape index: {}]
  %s3 = inlined_call_operand.vmem [shape: f32[1,512], index: 3, kind: input, shape index: {}]
  %s4 = inlined_call_operand.hbm [shape: f32[128,512], index: 4, kind: input, shape index: {}]
  %s5 = inlined_call_operand.hbm [shape: f32[128,512], index: 5, kind: input, shape index: {}]
  %s6 = inlined_call_operand.vmem [shape: f32[1,512], index: 6, kind: input, shape index: {}]
  %s7 = inlined_call_operand.vmem [shape: f32[64,128], index: 7, kind: output, shape index: {0}]
  %s8 = inlined_call_operand.vmem [shape: f32[8,128], index: 8, kind: output, shape index: {1}]
  %9 = xla_tuple %s7, %s8
  %s10 = sld [smem:[#allocation0]]
  $region62: #{rnn_forward.1} parent=0
    _
  %s12 = ssub.s32 1, %s10
  %s13 = scalar_select 0, %s12, %s10
  $region1: #{rnn_forward.1} parent=0
    #allocation4 [shape = 'u8[262144]{0}', space=vmem, size = 0x40000, scoped, tag = 'input window, operand 1, single buffered']
    #allocation5 [shape = 's32[1]{0}', space=sflag, size = 0x4, scoped, tag = 'scoped memory for rnn_forward.1']
    #allocation6 [shape = 'u8[262144]{0}', space=vmem, size = 0x40000, scoped, tag = 'input window, operand 2, single buffered']
    #allocation7 [shape = 's32[1]{0}', space=sflag, size = 0x4, scoped, tag = 'scoped memory for rnn_forward.1']
    #allocation8 [shape = 'u8[262144]{0}', space=vmem, size = 0x40000, scoped, tag = 'input window, operand 4, single buffered']
    #allocation9 [shape = 'u8[262144]{0}', space=vmem, size = 0x40000, scoped, tag = 'input window, operand 5, single buffered']
    #allocation10 [shape = 's32[1]{0}', space=sflag, size = 0x4, scoped, tag = 'scoped memory for rnn_forward.1']
    %14 = vsyncpa [#allocation5], 0
    %15 = vsyncpa [#allocation7], 0
    %16 = vsyncpa [#allocation10], 0
    // Predicated region
    $region2: #{rnn_forward.1} parent=1 // pred_check
      _
    $region3: #{rnn_forward.1} parent=1 // pred_check_branch
      %18 = sbr.rel (0) target = $region5
    $region4: #{rnn_forward.1} parent=1 // pred_region
      _
    $region5: #{rnn_forward.1} parent=1 // pred_fallthru
      _
    // Predicated region
    $region6: #{rnn_forward.1} parent=1 // pred_check
      _
    $region7: #{rnn_forward.1} parent=1 // pred_check_branch
      %20 = sbr.rel (0) target = $region9
    $region8: #{rnn_forward.1} parent=1 // pred_region
      %s22 = ssub.s32 8192, 8192
      %23 = vsyncadd [#allocation5], %s22
      %s24 = sshll.u32 [#allocation4], 4
      %s25 = int_to_ptr.vmem [resolvable:$true] %s24
      %30 = dma.hbm_to_vmem [thread:$0]  %s1, 8192, %s25, [#allocation5], 512, 512, 32
    $region9: #{rnn_forward.1} parent=1 // pred_fallthru
      _
    // Predicated region
    $region10: #{rnn_forward.1} parent=1 // pred_check
      _
    $region11: #{rnn_forward.1} parent=1 // pred_check_branch
      %32 = sbr.rel (0) target = $region13
    $region12: #{rnn_forward.1} parent=1 // pred_region
      %s34 = ssub.s32 8192, 8192
      %35 = vsyncadd [#allocation7], %s34
      %s36 = sshll.u32 [#allocation6], 4
      %s37 = int_to_ptr.vmem [resolvable:$true] %s36
      %42 = dma.hbm_to_vmem [thread:$0]  %s2, 8192, %s37, [#allocation7], 512, 512, 32
    $region13: #{rnn_forward.1} parent=1 // pred_fallthru
      _
    // Predicated region
    $region14: #{rnn_forward.1} parent=1 // pred_check
      _
    $region15: #{rnn_forward.1} parent=1 // pred_check_branch
      %44 = sbr.rel (0) target = $region17
    $region16: #{rnn_forward.1} parent=1 // pred_region
      _
    $region17: #{rnn_forward.1} parent=1 // pred_fallthru
      _
    // Predicated region
    $region18: #{rnn_forward.1} parent=1 // pred_check
      _
    $region19: #{rnn_forward.1} parent=1 // pred_check_branch
      %46 = sbr.rel (0) target = $region21
    $region20: #{rnn_forward.1} parent=1 // pred_region
      %s48 = ssub.s32 8192, 8192
      %49 = vsyncadd [#allocation7], %s48
      %s50 = sshll.u32 [#allocation8], 4
      %s51 = int_to_ptr.vmem [resolvable:$true] %s50
      %56 = dma.hbm_to_vmem [thread:$0]  %s4, 8192, %s51, [#allocation7], 512, 512, 32
    $region21: #{rnn_forward.1} parent=1 // pred_fallthru
      _
    // Predicated region
    $region22: #{rnn_forward.1} parent=1 // pred_check
      _
    $region23: #{rnn_forward.1} parent=1 // pred_check_branch
      %58 = sbr.rel (0) target = $region25
    $region24: #{rnn_forward.1} parent=1 // pred_region
      %s60 = ssub.s32 8192, 8192
      %61 = vsyncadd [#allocation10], %s60
      %s62 = sshll.u32 [#allocation9], 4
      %s63 = int_to_ptr.vmem [resolvable:$true] %s62
      %68 = dma.hbm_to_vmem [thread:$0]  %s5, 8192, %s63, [#allocation10], 512, 512, 32
    $region25: #{rnn_forward.1} parent=1 // pred_fallthru
      _
    // Predicated region
    $region26: #{rnn_forward.1} parent=1 // pred_check
      _
    $region27: #{rnn_forward.1} parent=1 // pred_check_branch
      %70 = sbr.rel (0) target = $region29
    $region28: #{rnn_forward.1} parent=1 // pred_region
      _
    $region29: #{rnn_forward.1} parent=1 // pred_fallthru
      _
    // Predicated region
    $region30: #{rnn_forward.1} parent=1 // pred_check
      _
    $region31: #{rnn_forward.1} parent=1 // pred_check_branch
      %72 = sbr.rel (0) target = $region33
    $region32: #{rnn_forward.1} parent=1 // pred_region
      %73 = dma.done [#allocation5], 8192
    $region33: #{rnn_forward.1} parent=1 // pred_fallthru
      _
    // Predicated region
    $region34: #{rnn_forward.1} parent=1 // pred_check
      _
    $region35: #{rnn_forward.1} parent=1 // pred_check_branch
      %75 = sbr.rel (0) target = $region37
    $region36: #{rnn_forward.1} parent=1 // pred_region
      %76 = dma.done [#allocation7], 8192
    $region37: #{rnn_forward.1} parent=1 // pred_fallthru
      _
    // Predicated region
    $region38: #{rnn_forward.1} parent=1 // pred_check
      _
    $region39: #{rnn_forward.1} parent=1 // pred_check_branch
      %78 = sbr.rel (0) target = $region41
    $region40: #{rnn_forward.1} parent=1 // pred_region
      %79 = dma.done [#allocation7], 8192
    $region41: #{rnn_forward.1} parent=1 // pred_fallthru
      _
    // Predicated region
    $region42: #{rnn_forward.1} parent=1 // pred_check
      _
    $region43: #{rnn_forward.1} parent=1 // pred_check_branch
      %81 = sbr.rel (0) target = $region45
    $region44: #{rnn_forward.1} parent=1 // pred_region
      %82 = dma.done [#allocation10], 8192
    $region45: #{rnn_forward.1} parent=1 // pred_fallthru
      _
    %v83 = vld [vmem:[%s0] sm:$0xff]
    %v84 = vld [vmem:[%s0 + $0x8] sm:$0xff]
    %v85 = vld [vmem:[%s0 + $0x10] sm:$0xff]
    %v86 = vld [vmem:[%s0 + $0x18] sm:$0xff]
    %v87 = vld [vmem:[%s0 + $0x20] sm:$0xff]
    %v88 = vld [vmem:[%s0 + $0x28] sm:$0xff]
    %v89 = vld [vmem:[%s0 + $0x30] sm:$0xff]
    %v90 = vld [vmem:[%s0 + $0x38] sm:$0xff]
    %v91 = vld [vmem:[#allocation4] sm:$0xff]
    %v92 = vld [vmem:[#allocation4 + $0x8] sm:$0xff]
    %v93 = vld [vmem:[#allocation4 + $0x10] sm:$0xff]
    %v94 = vld [vmem:[#allocation4 + $0x18] sm:$0xff]
    %v95 = vld [vmem:[#allocation4 + $0x20] sm:$0xff]
    %v96 = vld [vmem:[#allocation4 + $0x28] sm:$0xff]
    %v97 = vld [vmem:[#allocation4 + $0x30] sm:$0xff]
    %v98 = vld [vmem:[#allocation4 + $0x38] sm:$0xff]
    %v99 = vld [vmem:[#allocation4 + $0x40] sm:$0xff]
    %v100 = vld [vmem:[#allocation4 + $0x48] sm:$0xff]
    %v101 = vld [vmem:[#allocation4 + $0x50] sm:$0xff]
    %v102 = vld [vmem:[#allocation4 + $0x58] sm:$0xff]
    %v103 = vld [vmem:[#allocation4 + $0x60] sm:$0xff]
    %v104 = vld [vmem:[#allocation4 + $0x68] sm:$0xff]
    %v105 = vld [vmem:[#allocation4 + $0x70] sm:$0xff]
    %v106 = vld [vmem:[#allocation4 + $0x78] sm:$0xff]
    %v107 = vld [vmem:[#allocation4 + $0x80] sm:$0xff]
    %v108 = vld [vmem:[#allocation4 + $0x88] sm:$0xff]
    %v109 = vld [vmem:[#allocation4 + $0x90] sm:$0xff]
    %v110 = vld [vmem:[#allocation4 + $0x98] sm:$0xff]
    %v111 = vld [vmem:[#allocation4 + $0xa0] sm:$0xff]
    %v112 = vld [vmem:[#allocation4 + $0xa8] sm:$0xff]
    %v113 = vld [vmem:[#allocation4 + $0xb0] sm:$0xff]
    %v114 = vld [vmem:[#allocation4 + $0xb8] sm:$0xff]
    %v115 = vld [vmem:[#allocation4 + $0xc0] sm:$0xff]
    %v116 = vld [vmem:[#allocation4 + $0xc8] sm:$0xff]
    %v117 = vld [vmem:[#allocation4 + $0xd0] sm:$0xff]
    %v118 = vld [vmem:[#allocation4 + $0xd8] sm:$0xff]
    %v119 = vld [vmem:[#allocation4 + $0xe0] sm:$0xff]
    %v120 = vld [vmem:[#allocation4 + $0xe8] sm:$0xff]
    %v121 = vld [vmem:[#allocation4 + $0xf0] sm:$0xff]
    %v122 = vld [vmem:[#allocation4 + $0xf8] sm:$0xff]
    %v123 = vld [vmem:[#allocation4 + $0x100] sm:$0xff]
    %v124 = vld [vmem:[#allocation4 + $0x108] sm:$0xff]
    %v125 = vld [vmem:[#allocation4 + $0x110] sm:$0xff]
    %v126 = vld [vmem:[#allocation4 + $0x118] sm:$0xff]
    %v127 = vld [vmem:[#allocation4 + $0x120] sm:$0xff]
    %v128 = vld [vmem:[#allocation4 + $0x128] sm:$0xff]
    %v129 = vld [vmem:[#allocation4 + $0x130] sm:$0xff]
    %v130 = vld [vmem:[#allocation4 + $0x138] sm:$0xff]
    %v131 = vld [vmem:[#allocation4 + $0x140] sm:$0xff]
    %v132 = vld [vmem:[#allocation4 + $0x148] sm:$0xff]
    %v133 = vld [vmem:[#allocation4 + $0x150] sm:$0xff]
    %v134 = vld [vmem:[#allocation4 + $0x158] sm:$0xff]
    %v135 = vld [vmem:[#allocation4 + $0x160] sm:$0xff]
    %v136 = vld [vmem:[#allocation4 + $0x168] sm:$0xff]
    %v137 = vld [vmem:[#allocation4 + $0x170] sm:$0xff]
    %v138 = vld [vmem:[#allocation4 + $0x178] sm:$0xff]
    %v139 = vld [vmem:[#allocation4 + $0x180] sm:$0xff]
    %v140 = vld [vmem:[#allocation4 + $0x188] sm:$0xff]
    %v141 = vld [vmem:[#allocation4 + $0x190] sm:$0xff]
    %v142 = vld [vmem:[#allocation4 + $0x198] sm:$0xff]
    %v143 = vld [vmem:[#allocation4 + $0x1a0] sm:$0xff]
    %v144 = vld [vmem:[#allocation4 + $0x1a8] sm:$0xff]
    %v145 = vld [vmem:[#allocation4 + $0x1b0] sm:$0xff]
    %v146 = vld [vmem:[#allocation4 + $0x1b8] sm:$0xff]
    %v147 = vld [vmem:[#allocation4 + $0x1c0] sm:$0xff]
    %v148 = vld [vmem:[#allocation4 + $0x1c8] sm:$0xff]
    %v149 = vld [vmem:[#allocation4 + $0x1d0] sm:$0xff]
    %v150 = vld [vmem:[#allocation4 + $0x1d8] sm:$0xff]
    %v151 = vld [vmem:[#allocation4 + $0x1e0] sm:$0xff]
    %v152 = vld [vmem:[#allocation4 + $0x1e8] sm:$0xff]
    %v153 = vld [vmem:[#allocation4 + $0x1f0] sm:$0xff]
    %v154 = vld [vmem:[#allocation4 + $0x1f8] sm:$0xff]
    %v155 = vld [vmem:[%s3] sm:$0xf]
    %v157 = vlaneseq
    %v158 = vshrl.u32 %v157, 7
    %v159 = vsub.s32 0, %v158
    %v160 = vrot.slane %v155, %v159
    %v161 = vlaneseq
    %v162 = vshrl.u32 %v161, 7
    %v163 = vsub.s32 1, %v162
    %v164 = vrot.slane %v155, %v163
    %v165 = vlaneseq
    %v166 = vshrl.u32 %v165, 7
    %v167 = vsub.s32 2, %v166
    %v168 = vrot.slane %v155, %v167
    %v169 = vlaneseq
    %v170 = vshrl.u32 %v169, 7
    %v171 = vsub.s32 3, %v170
    %v172 = vrot.slane %v155, %v171
    %177 = vmatprep.subr.mxu0 %v92
    %178 = vmatpush1.msra.mxu0 %v91
    %179 = vmatprep.subr.mxu0 %v96
    %180 = vmatpush1.msra.mxu0 %v95
    %181 = vmatprep.subr.mxu0 %v100
    %182 = vmatpush1.msra.mxu0 %v99
    %183 = vmatprep.subr.mxu0 %v104
    %184 = vmatpush1.msra.mxu0 %v103
    %185 = vmatprep.subr.mxu0 %v108
    %186 = vmatpush1.msra.mxu0 %v107
    %187 = vmatprep.subr.mxu0 %v112
    %188 = vmatpush1.msra.mxu0 %v111
    %189 = vmatprep.subr.mxu0 %v116
    %190 = vmatpush1.msra.mxu0 %v115
    %191 = vmatprep.subr.mxu0 %v120
    %192 = vmatpush1.msra.mxu0 %v119
    %193 = vmatprep.subr.mxu0 %v124
    %194 = vmatpush1.msra.mxu0 %v123
    %195 = vmatprep.subr.mxu0 %v128
    %196 = vmatpush1.msra.mxu0 %v127
    %197 = vmatprep.subr.mxu0 %v132
    %198 = vmatpush1.msra.mxu0 %v131
    %199 = vmatprep.subr.mxu0 %v136
    %200 = vmatpush1.msra.mxu0 %v135
    %201 = vmatprep.subr.mxu0 %v140
    %202 = vmatpush1.msra.mxu0 %v139
    %203 = vmatprep.subr.mxu0 %v144
    %204 = vmatpush1.msra.mxu0 %v143
    %205 = vmatprep.subr.mxu0 %v148
    %206 = vmatpush1.msra.mxu0 %v147
    %207 = vmatprep.subr.mxu0 %v152
    %208 = vmatpush1.msra.mxu0 %v151
    %209 = vmatprep.subr.mxu0 0.0
    %210 = vmatpush1.msra.mxu0 0.0
    %211 = vmatprep.subr.mxu0 0.0
    %212 = vmatpush1.msra.mxu0 0.0
    %213 = vmatprep.subr.mxu0 0.0
    %214 = vmatpush1.msra.mxu0 0.0
    %215 = vmatprep.subr.mxu0 0.0
    %216 = vmatpush1.msra.mxu0 0.0
    %217 = vmatprep.subr.mxu0 0.0
    %218 = vmatpush1.msra.mxu0 0.0
    %219 = vmatprep.subr.mxu0 0.0
    %220 = vmatpush1.msra.mxu0 0.0
    %221 = vmatprep.subr.mxu0 0.0
    %222 = vmatpush1.msra.mxu0 0.0
    %223 = vmatprep.subr.mxu0 0.0
    %224 = vmatpush1.msra.mxu0 0.0
    %225 = vmatprep.subr.mxu0 0.0
    %226 = vmatpush1.msra.mxu0 0.0
    %227 = vmatprep.subr.mxu0 0.0
    %228 = vmatpush1.msra.mxu0 0.0
    %229 = vmatprep.subr.mxu0 0.0
    %230 = vmatpush1.msra.mxu0 0.0
    %231 = vmatprep.subr.mxu0 0.0
    %232 = vmatpush1.msra.mxu0 0.0
    %233 = vmatprep.subr.mxu0 0.0
    %234 = vmatpush1.msra.mxu0 0.0
    %235 = vmatprep.subr.mxu0 0.0
    %236 = vmatpush1.msra.mxu0 0.0
    %237 = vmatprep.subr.mxu0 0.0
    %238 = vmatpush1.msra.mxu0 0.0
    %239 = vmatprep.subr.mxu0 0.0
    %240 = vmatpush1.msra.mxu0 0.0
    %241 = vmatprep.mubr.f32.mxu0 0.0
    %242 = vmatmul.mubr.f32.gmra.mrb[0].mxu0 %v83
    %v243 = vpop.f32.mrb[0].mxu0
    %v244 = vadd.f32 %v160, %v243
    %v245 = vpop.f32.mrb[0].mxu0
    %v246 = vadd.f32 %v164, %v245
    %247 = vmatprep.mubr.f32.mxu0 0.0
    %248 = vmatmul.mubr.f32.gmra.mrb[0].mxu0 %v84
    %v249 = vpop.f32.mrb[0].mxu0
    %v250 = vadd.f32 %v160, %v249
    %v251 = vpop.f32.mrb[0].mxu0
    %v252 = vadd.f32 %v164, %v251
    %253 = vmatprep.mubr.f32.mxu0 0.0
    %254 = vmatmul.mubr.f32.gmra.mrb[0].mxu0 %v85
    %v255 = vpop.f32.mrb[0].mxu0
    %v256 = vadd.f32 %v160, %v255
    %v257 = vpop.f32.mrb[0].mxu0
    %v258 = vadd.f32 %v164, %v257
    %259 = vmatprep.mubr.f32.mxu0 0.0
    %260 = vmatmul.mubr.f32.gmra.mrb[0].mxu0 %v86
    %v261 = vpop.f32.mrb[0].mxu0
    %v262 = vadd.f32 %v160, %v261
    %v263 = vpop.f32.mrb[0].mxu0
    %v264 = vadd.f32 %v164, %v263
    %265 = vmatprep.mubr.f32.mxu0 0.0
    %266 = vmatmul.mubr.f32.gmra.mrb[0].mxu0 %v87
    %v267 = vpop.f32.mrb[0].mxu0
    %v268 = vadd.f32 %v160, %v267
    %v269 = vpop.f32.mrb[0].mxu0
    %v270 = vadd.f32 %v164, %v269
    %271 = vmatprep.mubr.f32.mxu0 0.0
    %272 = vmatmul.mubr.f32.gmra.mrb[0].mxu0 %v88
    %v273 = vpop.f32.mrb[0].mxu0
    %v274 = vadd.f32 %v160, %v273
    %v275 = vpop.f32.mrb[0].mxu0
    %v276 = vadd.f32 %v164, %v275
    %277 = vmatprep.mubr.f32.mxu0 0.0
    %278 = vmatmul.mubr.f32.gmra.mrb[0].mxu0 %v89
    %v279 = vpop.f32.mrb[0].mxu0
    %v280 = vadd.f32 %v160, %v279
    %v281 = vpop.f32.mrb[0].mxu0
    %v282 = vadd.f32 %v164, %v281
    %283 = vmatprep.mubr.f32.mxu0 0.0
    %284 = vmatmul.mubr.f32.gmra.mrb[0].mxu0 %v90
    %v285 = vpop.f32.mrb[0].mxu0
    %v286 = vadd.f32 %v160, %v285
    %v287 = vpop.f32.mrb[0].mxu0
    %v288 = vadd.f32 %v164, %v287
    %289 = vdwg.mxu0
    %290 = vmatprep.subr.mxu0 %v94
    %291 = vmatpush1.msra.mxu0 %v93
    %292 = vmatprep.subr.mxu0 %v98
    %293 = vmatpush1.msra.mxu0 %v97
    %294 = vmatprep.subr.mxu0 %v102
    %295 = vmatpush1.msra.mxu0 %v101
    %296 = vmatprep.subr.mxu0 %v106
    %297 = vmatpush1.msra.mxu0 %v105
    %298 = vmatprep.subr.mxu0 %v110
    %299 = vmatpush1.msra.mxu0 %v109
    %300 = vmatprep.subr.mxu0 %v114
    %301 = vmatpush1.msra.mxu0 %v113
    %302 = vmatprep.subr.mxu0 %v118
    %303 = vmatpush1.msra.mxu0 %v117
    %304 = vmatprep.subr.mxu0 %v122
    %305 = vmatpush1.msra.mxu0 %v121
    %306 = vmatprep.subr.mxu0 %v126
    %307 = vmatpush1.msra.mxu0 %v125
    %308 = vmatprep.subr.mxu0 %v130
    %309 = vmatpush1.msra.mxu0 %v129
    %310 = vmatprep.subr.mxu0 %v134
    %311 = vmatpush1.msra.mxu0 %v133
    %312 = vmatprep.subr.mxu0 %v138
    %313 = vmatpush1.msra.mxu0 %v137
    %314 = vmatprep.subr.mxu0 %v142
    %315 = vmatpush1.msra.mxu0 %v141
    %316 = vmatprep.subr.mxu0 %v146
    %317 = vmatpush1.msra.mxu0 %v145
    %318 = vmatprep.subr.mxu0 %v150
    %319 = vmatpush1.msra.mxu0 %v149
    %320 = vmatprep.subr.mxu0 %v154
    %321 = vmatpush1.msra.mxu0 %v153
    %322 = vmatprep.subr.mxu0 0.0
    %323 = vmatpush1.msra.mxu0 0.0
    %324 = vmatprep.subr.mxu0 0.0
    %325 = vmatpush1.msra.mxu0 0.0
    %326 = vmatprep.subr.mxu0 0.0
    %327 = vmatpush1.msra.mxu0 0.0
    %328 = vmatprep.subr.mxu0 0.0
    %329 = vmatpush1.msra.mxu0 0.0
    %330 = vmatprep.subr.mxu0 0.0
    %331 = vmatpush1.msra.mxu0 0.0
    %332 = vmatprep.subr.mxu0 0.0
    %333 = vmatpush1.msra.mxu0 0.0
    %334 = vmatprep.subr.mxu0 0.0
    %335 = vmatpush1.msra.mxu0 0.0
    %336 = vmatprep.subr.mxu0 0.0
    %337 = vmatpush1.msra.mxu0 0.0
    %338 = vmatprep.subr.mxu0 0.0
    %339 = vmatpush1.msra.mxu0 0.0
    %340 = vmatprep.subr.mxu0 0.0
    %341 = vmatpush1.msra.mxu0 0.0
    %342 = vmatprep.subr.mxu0 0.0
    %343 = vmatpush1.msra.mxu0 0.0
    %344 = vmatprep.subr.mxu0 0.0
    %345 = vmatpush1.msra.mxu0 0.0
    %346 = vmatprep.subr.mxu0 0.0
    %347 = vmatpush1.msra.mxu0 0.0
    %348 = vmatprep.subr.mxu0 0.0
    %349 = vmatpush1.msra.mxu0 0.0
    %350 = vmatprep.subr.mxu0 0.0
    %351 = vmatpush1.msra.mxu0 0.0
    %352 = vmatprep.subr.mxu0 0.0
    %353 = vmatpush1.msra.mxu0 0.0
    %354 = vmatprep.mubr.f32.mxu0 0.0
    %355 = vmatmul.mubr.f32.gmra.mrb[0].mxu0 %v83
    %v356 = vpop.f32.mrb[0].mxu0
    %v357 = vadd.f32 %v168, %v356
    %v358 = vpop.f32.mrb[0].mxu0
    %v359 = vadd.f32 %v172, %v358
    %360 = vmatprep.mubr.f32.mxu0 0.0
    %361 = vmatmul.mubr.f32.gmra.mrb[0].mxu0 %v84
    %v362 = vpop.f32.mrb[0].mxu0
    %v363 = vadd.f32 %v168, %v362
    %v364 = vpop.f32.mrb[0].mxu0
    %v365 = vadd.f32 %v172, %v364
    %366 = vmatprep.mubr.f32.mxu0 0.0
    %367 = vmatmul.mubr.f32.gmra.mrb[0].mxu0 %v85
    %v368 = vpop.f32.mrb[0].mxu0
    %v369 = vadd.f32 %v168, %v368
    %v370 = vpop.f32.mrb[0].mxu0
    %v371 = vadd.f32 %v172, %v370
    %372 = vmatprep.mubr.f32.mxu0 0.0
    %373 = vmatmul.mubr.f32.gmra.mrb[0].mxu0 %v86
    %v374 = vpop.f32.mrb[0].mxu0
    %v375 = vadd.f32 %v168, %v374
    %v376 = vpop.f32.mrb[0].mxu0
    %v377 = vadd.f32 %v172, %v376
    %378 = vmatprep.mubr.f32.mxu0 0.0
    %379 = vmatmul.mubr.f32.gmra.mrb[0].mxu0 %v87
    %v380 = vpop.f32.mrb[0].mxu0
    %v381 = vadd.f32 %v168, %v380
    %v382 = vpop.f32.mrb[0].mxu0
    %v383 = vadd.f32 %v172, %v382
    %384 = vmatprep.mubr.f32.mxu0 0.0
    %385 = vmatmul.mubr.f32.gmra.mrb[0].mxu0 %v88
    %v386 = vpop.f32.mrb[0].mxu0
    %v387 = vadd.f32 %v168, %v386
    %v388 = vpop.f32.mrb[0].mxu0
    %v389 = vadd.f32 %v172, %v388
    %390 = vmatprep.mubr.f32.mxu0 0.0
    %391 = vmatmul.mubr.f32.gmra.mrb[0].mxu0 %v89
    %v392 = vpop.f32.mrb[0].mxu0
    %v393 = vadd.f32 %v168, %v392
    %v394 = vpop.f32.mrb[0].mxu0
    %v395 = vadd.f32 %v172, %v394
    %396 = vmatprep.mubr.f32.mxu0 0.0
    %397 = vmatmul.mubr.f32.gmra.mrb[0].mxu0 %v90
    %v398 = vpop.f32.mrb[0].mxu0
    %v399 = vadd.f32 %v168, %v398
    %v400 = vpop.f32.mrb[0].mxu0
    %v401 = vadd.f32 %v172, %v400
    %402 = vdwg.mxu0
    %403 = vst [vmem:[#allocation2] sm:$0xff] %v244
    %404 = vst [vmem:[#allocation2 + $0x8] sm:$0xff] %v246
    %405 = vst [vmem:[#allocation2 + $0x10] sm:$0xff] %v357
    %406 = vst [vmem:[#allocation2 + $0x18] sm:$0xff] %v359
    %407 = vst [vmem:[#allocation2 + $0x20] sm:$0xff] %v250
    %408 = vst [vmem:[#allocation2 + $0x28] sm:$0xff] %v252
    %409 = vst [vmem:[#allocation2 + $0x30] sm:$0xff] %v363
    %410 = vst [vmem:[#allocation2 + $0x38] sm:$0xff] %v365
    %411 = vst [vmem:[#allocation2 + $0x40] sm:$0xff] %v256
    %412 = vst [vmem:[#allocation2 + $0x48] sm:$0xff] %v258
    %413 = vst [vmem:[#allocation2 + $0x50] sm:$0xff] %v369
    %414 = vst [vmem:[#allocation2 + $0x58] sm:$0xff] %v371
    %415 = vst [vmem:[#allocation2 + $0x60] sm:$0xff] %v262
    %416 = vst [vmem:[#allocation2 + $0x68] sm:$0xff] %v264
    %417 = vst [vmem:[#allocation2 + $0x70] sm:$0xff] %v375
    %418 = vst [vmem:[#allocation2 + $0x78] sm:$0xff] %v377
    %419 = vst [vmem:[#allocation2 + $0x80] sm:$0xff] %v268
    %420 = vst [vmem:[#allocation2 + $0x88] sm:$0xff] %v270
    %421 = vst [vmem:[#allocation2 + $0x90] sm:$0xff] %v381
    %422 = vst [vmem:[#allocation2 + $0x98] sm:$0xff] %v383
    %423 = vst [vmem:[#allocation2 + $0xa0] sm:$0xff] %v274
    %424 = vst [vmem:[#allocation2 + $0xa8] sm:$0xff] %v276
    %425 = vst [vmem:[#allocation2 + $0xb0] sm:$0xff] %v387
    %426 = vst [vmem:[#allocation2 + $0xb8] sm:$0xff] %v389
    %427 = vst [vmem:[#allocation2 + $0xc0] sm:$0xff] %v280
    %428 = vst [vmem:[#allocation2 + $0xc8] sm:$0xff] %v282
    %429 = vst [vmem:[#allocation2 + $0xd0] sm:$0xff] %v393
    %430 = vst [vmem:[#allocation2 + $0xd8] sm:$0xff] %v395
    %431 = vst [vmem:[#allocation2 + $0xe0] sm:$0xff] %v286
    %432 = vst [vmem:[#allocation2 + $0xe8] sm:$0xff] %v288
    %433 = vst [vmem:[#allocation2 + $0xf0] sm:$0xff] %v399
    %434 = vst [vmem:[#allocation2 + $0xf8] sm:$0xff] %v401
    %v435 = vld [vmem:[#allocation2] sm:$0xff]
    %v436 = vld [vmem:[#allocation2 + $0x8] sm:$0xff]
    %v437 = vld [vmem:[#allocation2 + $0x10] sm:$0xff]
    %v438 = vld [vmem:[#allocation2 + $0x18] sm:$0xff]
    %v439 = vld [vmem:[#allocation6] sm:$0xff]
    %v440 = vld [vmem:[#allocation6 + $0x8] sm:$0xff]
    %v441 = vld [vmem:[#allocation6 + $0x10] sm:$0xff]
    %v442 = vld [vmem:[#allocation6 + $0x18] sm:$0xff]
    %v443 = vld [vmem:[#allocation6 + $0x20] sm:$0xff]
    %v444 = vld [vmem:[#allocation6 + $0x28] sm:$0xff]
    %v445 = vld [vmem:[#allocation6 + $0x30] sm:$0xff]
    %v446 = vld [vmem:[#allocation6 + $0x38] sm:$0xff]
    %v447 = vld [vmem:[#allocation6 + $0x40] sm:$0xff]
    %v448 = vld [vmem:[#allocation6 + $0x48] sm:$0xff]
    %v449 = vld [vmem:[#allocation6 + $0x50] sm:$0xff]
    %v450 = vld [vmem:[#allocation6 + $0x58] sm:$0xff]
    %v451 = vld [vmem:[#allocation6 + $0x60] sm:$0xff]
    %v452 = vld [vmem:[#allocation6 + $0x68] sm:$0xff]
    %v453 = vld [vmem:[#allocation6 + $0x70] sm:$0xff]
    %v454 = vld [vmem:[#allocation6 + $0x78] sm:$0xff]
    %v455 = vld [vmem:[#allocation6 + $0x80] sm:$0xff]
    %v456 = vld [vmem:[#allocation6 + $0x88] sm:$0xff]
    %v457 = vld [vmem:[#allocation6 + $0x90] sm:$0xff]
    %v458 = vld [vmem:[#allocation6 + $0x98] sm:$0xff]
    %v459 = vld [vmem:[#allocation6 + $0xa0] sm:$0xff]
    %v460 = vld [vmem:[#allocation6 + $0xa8] sm:$0xff]
    %v461 = vld [vmem:[#allocation6 + $0xb0] sm:$0xff]
    %v462 = vld [vmem:[#allocation6 + $0xb8] sm:$0xff]
    %v463 = vld [vmem:[#allocation6 + $0xc0] sm:$0xff]
    %v464 = vld [vmem:[#allocation6 + $0xc8] sm:$0xff]
    %v465 = vld [vmem:[#allocation6 + $0xd0] sm:$0xff]
    %v466 = vld [vmem:[#allocation6 + $0xd8] sm:$0xff]
    %v467 = vld [vmem:[#allocation6 + $0xe0] sm:$0xff]
    %v468 = vld [vmem:[#allocation6 + $0xe8] sm:$0xff]
    %v469 = vld [vmem:[#allocation6 + $0xf0] sm:$0xff]
    %v470 = vld [vmem:[#allocation6 + $0xf8] sm:$0xff]
    %v471 = vld [vmem:[#allocation6 + $0x100] sm:$0xff]
    %v472 = vld [vmem:[#allocation6 + $0x108] sm:$0xff]
    %v473 = vld [vmem:[#allocation6 + $0x110] sm:$0xff]
    %v474 = vld [vmem:[#allocation6 + $0x118] sm:$0xff]
    %v475 = vld [vmem:[#allocation6 + $0x120] sm:$0xff]
    %v476 = vld [vmem:[#allocation6 + $0x128] sm:$0xff]
    %v477 = vld [vmem:[#allocation6 + $0x130] sm:$0xff]
    %v478 = vld [vmem:[#allocation6 + $0x138] sm:$0xff]
    %v479 = vld [vmem:[#allocation6 + $0x140] sm:$0xff]
    %v480 = vld [vmem:[#allocation6 + $0x148] sm:$0xff]
    %v481 = vld [vmem:[#allocation6 + $0x150] sm:$0xff]
    %v482 = vld [vmem:[#allocation6 + $0x158] sm:$0xff]
    %v483 = vld [vmem:[#allocation6 + $0x160] sm:$0xff]
    %v484 = vld [vmem:[#allocation6 + $0x168] sm:$0xff]
    %v485 = vld [vmem:[#allocation6 + $0x170] sm:$0xff]
    %v486 = vld [vmem:[#allocation6 + $0x178] sm:$0xff]
    %v487 = vld [vmem:[#allocation6 + $0x180] sm:$0xff]
    %v488 = vld [vmem:[#allocation6 + $0x188] sm:$0xff]
    %v489 = vld [vmem:[#allocation6 + $0x190] sm:$0xff]
    %v490 = vld [vmem:[#allocation6 + $0x198] sm:$0xff]
    %v491 = vld [vmem:[#allocation6 + $0x1a0] sm:$0xff]
    %v492 = vld [vmem:[#allocation6 + $0x1a8] sm:$0xff]
    %v493 = vld [vmem:[#allocation6 + $0x1b0] sm:$0xff]
    %v494 = vld [vmem:[#allocation6 + $0x1b8] sm:$0xff]
    %v495 = vld [vmem:[#allocation6 + $0x1c0] sm:$0xff]
    %v496 = vld [vmem:[#allocation6 + $0x1c8] sm:$0xff]
    %v497 = vld [vmem:[#allocation6 + $0x1d0] sm:$0xff]
    %v498 = vld [vmem:[#allocation6 + $0x1d8] sm:$0xff]
    %v499 = vld [vmem:[#allocation6 + $0x1e0] sm:$0xff]
    %v500 = vld [vmem:[#allocation6 + $0x1e8] sm:$0xff]
    %v501 = vld [vmem:[#allocation6 + $0x1f0] sm:$0xff]
    %v502 = vld [vmem:[#allocation6 + $0x1f8] sm:$0xff]
    %503 = vmatprep.subr.mxu0 %v440
    %504 = vmatpush1.msra.mxu0 %v439
    %505 = vmatprep.subr.mxu0 %v444
    %506 = vmatpush1.msra.mxu0 %v443
    %507 = vmatprep.subr.mxu0 %v448
    %508 = vmatpush1.msra.mxu0 %v447
    %509 = vmatprep.subr.mxu0 %v452
    %510 = vmatpush1.msra.mxu0 %v451
    %511 = vmatprep.subr.mxu0 %v456
    %512 = vmatpush1.msra.mxu0 %v455
    %513 = vmatprep.subr.mxu0 %v460
    %514 = vmatpush1.msra.mxu0 %v459
    %515 = vmatprep.subr.mxu0 %v464
    %516 = vmatpush1.msra.mxu0 %v463
    %517 = vmatprep.subr.mxu0 %v468
    %518 = vmatpush1.msra.mxu0 %v467
    %519 = vmatprep.subr.mxu0 %v472
    %520 = vmatpush1.msra.mxu0 %v471
    %521 = vmatprep.subr.mxu0 %v476
    %522 = vmatpush1.msra.mxu0 %v475
    %523 = vmatprep.subr.mxu0 %v480
    %524 = vmatpush1.msra.mxu0 %v479
    %525 = vmatprep.subr.mxu0 %v484
    %526 = vmatpush1.msra.mxu0 %v483
    %527 = vmatprep.subr.mxu0 %v488
    %528 = vmatpush1.msra.mxu0 %v487
    %529 = vmatprep.subr.mxu0 %v492
    %530 = vmatpush1.msra.mxu0 %v491
    %531 = vmatprep.subr.mxu0 %v496
    %532 = vmatpush1.msra.mxu0 %v495
    %533 = vmatprep.subr.mxu0 %v500
    %534 = vmatpush1.msra.mxu0 %v499
    %535 = vmatprep.subr.mxu0 0.0
    %536 = vmatpush1.msra.mxu0 0.0
    %537 = vmatprep.subr.mxu0 0.0
    %538 = vmatpush1.msra.mxu0 0.0
    %539 = vmatprep.subr.mxu0 0.0
    %540 = vmatpush1.msra.mxu0 0.0
    %541 = vmatprep.subr.mxu0 0.0
    %542 = vmatpush1.msra.mxu0 0.0
    %543 = vmatprep.subr.mxu0 0.0
    %544 = vmatpush1.msra.mxu0 0.0
    %545 = vmatprep.subr.mxu0 0.0
    %546 = vmatpush1.msra.mxu0 0.0
    %547 = vmatprep.subr.mxu0 0.0
    %548 = vmatpush1.msra.mxu0 0.0
    %549 = vmatprep.subr.mxu0 0.0
    %550 = vmatpush1.msra.mxu0 0.0
    %551 = vmatprep.subr.mxu0 0.0
    %552 = vmatpush1.msra.mxu0 0.0
    %553 = vmatprep.subr.mxu0 0.0
    %554 = vmatpush1.msra.mxu0 0.0
    %555 = vmatprep.subr.mxu0 0.0
    %556 = vmatpush1.msra.mxu0 0.0
    %557 = vmatprep.subr.mxu0 0.0
    %558 = vmatpush1.msra.mxu0 0.0
    %559 = vmatprep.subr.mxu0 0.0
    %560 = vmatpush1.msra.mxu0 0.0
    %561 = vmatprep.subr.mxu0 0.0
    %562 = vmatpush1.msra.mxu0 0.0
    %563 = vmatprep.subr.mxu0 0.0
    %564 = vmatpush1.msra.mxu0 0.0
    %565 = vmatprep.subr.mxu0 0.0
    %566 = vmatpush1.msra.mxu0 0.0
    %567 = vmatprep.mubr.f32.mxu0 0.0
    %568 = vmatmul.mubr.f32.gmra.mrb[0].mxu0 0.0
    %v569 = vpop.f32.mrb[0].mxu0
    %v570 = vadd.f32 0.0, %v569
    %v571 = vpop.f32.mrb[0].mxu0
    %v572 = vadd.f32 0.0, %v571
    %573 = vdwg.mxu0
    %574 = vmatprep.subr.mxu0 %v442
    %575 = vmatpush1.msra.mxu0 %v441
    %576 = vmatprep.subr.mxu0 %v446
    %577 = vmatpush1.msra.mxu0 %v445
    %578 = vmatprep.subr.mxu0 %v450
    %579 = vmatpush1.msra.mxu0 %v449
    %580 = vmatprep.subr.mxu0 %v454
    %581 = vmatpush1.msra.mxu0 %v453
    %582 = vmatprep.subr.mxu0 %v458
    %583 = vmatpush1.msra.mxu0 %v457
    %584 = vmatprep.subr.mxu0 %v462
    %585 = vmatpush1.msra.mxu0 %v461
    %586 = vmatprep.subr.mxu0 %v466
    %587 = vmatpush1.msra.mxu0 %v465
    %588 = vmatprep.subr.mxu0 %v470
    %589 = vmatpush1.msra.mxu0 %v469
    %590 = vmatprep.subr.mxu0 %v474
    %591 = vmatpush1.msra.mxu0 %v473
    %592 = vmatprep.subr.mxu0 %v478
    %593 = vmatpush1.msra.mxu0 %v477
    %594 = vmatprep.subr.mxu0 %v482
    %595 = vmatpush1.msra.mxu0 %v481
    %596 = vmatprep.subr.mxu0 %v486
    %597 = vmatpush1.msra.mxu0 %v485
    %598 = vmatprep.subr.mxu0 %v490
    %599 = vmatpush1.msra.mxu0 %v489
    %600 = vmatprep.subr.mxu0 %v494
    %601 = vmatpush1.msra.mxu0 %v493
    %602 = vmatprep.subr.mxu0 %v498
    %603 = vmatpush1.msra.mxu0 %v497
    %604 = vmatprep.subr.mxu0 %v502
    %605 = vmatpush1.msra.mxu0 %v501
    %606 = vmatprep.subr.mxu0 0.0
    %607 = vmatpush1.msra.mxu0 0.0
    %608 = vmatprep.subr.mxu0 0.0
    %609 = vmatpush1.msra.mxu0 0.0
    %610 = vmatprep.subr.mxu0 0.0
    %611 = vmatpush1.msra.mxu0 0.0
    %612 = vmatprep.subr.mxu0 0.0
    %613 = vmatpush1.msra.mxu0 0.0
    %614 = vmatprep.subr.mxu0 0.0
    %615 = vmatpush1.msra.mxu0 0.0
    %616 = vmatprep.subr.mxu0 0.0
    %617 = vmatpush1.msra.mxu0 0.0
    %618 = vmatprep.subr.mxu0 0.0
    %619 = vmatpush1.msra.mxu0 0.0
    %620 = vmatprep.subr.mxu0 0.0
    %621 = vmatpush1.msra.mxu0 0.0
    %622 = vmatprep.subr.mxu0 0.0
    %623 = vmatpush1.msra.mxu0 0.0
    %624 = vmatprep.subr.mxu0 0.0
    %625 = vmatpush1.msra.mxu0 0.0
    %626 = vmatprep.subr.mxu0 0.0
    %627 = vmatpush1.msra.mxu0 0.0
    %628 = vmatprep.subr.mxu0 0.0
    %629 = vmatpush1.msra.mxu0 0.0
    %630 = vmatprep.subr.mxu0 0.0
    %631 = vmatpush1.msra.mxu0 0.0
    %632 = vmatprep.subr.mxu0 0.0
    %633 = vmatpush1.msra.mxu0 0.0
    %634 = vmatprep.subr.mxu0 0.0
    %635 = vmatpush1.msra.mxu0 0.0
    %636 = vmatprep.subr.mxu0 0.0
    %637 = vmatpush1.msra.mxu0 0.0
    %638 = vmatprep.mubr.f32.mxu0 0.0
    %639 = vmatmul.mubr.f32.gmra.mrb[0].mxu0 0.0
    %v640 = vpop.f32.mrb[0].mxu0
    %v641 = vadd.f32 0.0, %v640
    %v642 = vpop.f32.mrb[0].mxu0
    %v643 = vadd.f32 0.0, %v642
    %644 = vdwg.mxu0
    %v645 = vadd.f32 %v435, %v570
    %v646 = vadd.f32 %v436, %v572
    %v647 = vadd.f32 %v437, %v641
    %v648 = vadd.f32 %v438, %v643
    %v649 = vmul.f32 %v645, 0.5
    %v650 = vtanh.pop %v649
    %v651 = vmul.f32 %v650, 0.5
    %v652 = vadd.f32 %v651, 0.5
    %v653 = vmul.f32 %v646, 0.5
    %v654 = vtanh.pop %v653
    %v655 = vmul.f32 %v654, 0.5
    %v656 = vadd.f32 %v655, 0.5
    %v657 = vtanh.pop %v647
    %v658 = vmul.f32 %v648, 0.5
    %v659 = vtanh.pop %v658
    %v660 = vmul.f32 %v659, 0.5
    %v661 = vadd.f32 %v660, 0.5
    %v662 = vmul.f32 %v656, 0.0
    %v663 = vmul.f32 %v652, %v657
    %v664 = vadd.f32 %v662, %v663
    %v665 = vtanh.pop %v664
    %v666 = vmul.f32 %v661, %v665
    %667 = vst [vmem:[#allocation3] sm:$0xff] %v666
    %v668 = vld [vmem:[#allocation2 + $0x20] sm:$0xff]
    %v669 = vld [vmem:[#allocation2 + $0x28] sm:$0xff]
    %v670 = vld [vmem:[#allocation2 + $0x30] sm:$0xff]
    %v671 = vld [vmem:[#allocation2 + $0x38] sm:$0xff]
    %v672 = vld [vmem:[#allocation6] sm:$0xff]
    %v673 = vld [vmem:[#allocation6 + $0x8] sm:$0xff]
    %v674 = vld [vmem:[#allocation6 + $0x10] sm:$0xff]
    %v675 = vld [vmem:[#allocation6 + $0x18] sm:$0xff]
    %v676 = vld [vmem:[#allocation6 + $0x20] sm:$0xff]
    %v677 = vld [vmem:[#allocation6 + $0x28] sm:$0xff]
    %v678 = vld [vmem:[#allocation6 + $0x30] sm:$0xff]
    %v679 = vld [vmem:[#allocation6 + $0x38] sm:$0xff]
    %v680 = vld [vmem:[#allocation6 + $0x40] sm:$0xff]
    %v681 = vld [vmem:[#allocation6 + $0x48] sm:$0xff]
    %v682 = vld [vmem:[#allocation6 + $0x50] sm:$0xff]
    %v683 = vld [vmem:[#allocation6 + $0x58] sm:$0xff]
    %v684 = vld [vmem:[#allocation6 + $0x60] sm:$0xff]
    %v685 = vld [vmem:[#allocation6 + $0x68] sm:$0xff]
    %v686 = vld [vmem:[#allocation6 + $0x70] sm:$0xff]
    %v687 = vld [vmem:[#allocation6 + $0x78] sm:$0xff]
    %v688 = vld [vmem:[#allocation6 + $0x80] sm:$0xff]
    %v689 = vld [vmem:[#allocation6 + $0x88] sm:$0xff]
    %v690 = vld [vmem:[#allocation6 + $0x90] sm:$0xff]
    %v691 = vld [vmem:[#allocation6 + $0x98] sm:$0xff]
    %v692 = vld [vmem:[#allocation6 + $0xa0] sm:$0xff]
    %v693 = vld [vmem:[#allocation6 + $0xa8] sm:$0xff]
    %v694 = vld [vmem:[#allocation6 + $0xb0] sm:$0xff]
    %v695 = vld [vmem:[#allocation6 + $0xb8] sm:$0xff]
    %v696 = vld [vmem:[#allocation6 + $0xc0] sm:$0xff]
    %v697 = vld [vmem:[#allocation6 + $0xc8] sm:$0xff]
    %v698 = vld [vmem:[#allocation6 + $0xd0] sm:$0xff]
    %v699 = vld [vmem:[#allocation6 + $0xd8] sm:$0xff]
    %v700 = vld [vmem:[#allocation6 + $0xe0] sm:$0xff]
    %v701 = vld [vmem:[#allocation6 + $0xe8] sm:$0xff]
    %v702 = vld [vmem:[#allocation6 + $0xf0] sm:$0xff]
    %v703 = vld [vmem:[#allocation6 + $0xf8] sm:$0xff]
    %v704 = vld [vmem:[#allocation6 + $0x100] sm:$0xff]
    %v705 = vld [vmem:[#allocation6 + $0x108] sm:$0xff]
    %v706 = vld [vmem:[#allocation6 + $0x110] sm:$0xff]
    %v707 = vld [vmem:[#allocation6 + $0x118] sm:$0xff]
    %v708 = vld [vmem:[#allocation6 + $0x120] sm:$0xff]
    %v709 = vld [vmem:[#allocation6 + $0x128] sm:$0xff]
    %v710 = vld [vmem:[#allocation6 + $0x130] sm:$0xff]
    %v711 = vld [vmem:[#allocation6 + $0x138] sm:$0xff]
    %v712 = vld [vmem:[#allocation6 + $0x140] sm:$0xff]
    %v713 = vld [vmem:[#allocation6 + $0x148] sm:$0xff]
    %v714 = vld [vmem:[#allocation6 + $0x150] sm:$0xff]
    %v715 = vld [vmem:[#allocation6 + $0x158] sm:$0xff]
    %v716 = vld [vmem:[#allocation6 + $0x160] sm:$0xff]
    %v717 = vld [vmem:[#allocation6 + $0x168] sm:$0xff]
    %v718 = vld [vmem:[#allocation6 + $0x170] sm:$0xff]
    %v719 = vld [vmem:[#allocation6 + $0x178] sm:$0xff]
    %v720 = vld [vmem:[#allocation6 + $0x180] sm:$0xff]
    %v721 = vld [vmem:[#allocation6 + $0x188] sm:$0xff]
    %v722 = vld [vmem:[#allocation6 + $0x190] sm:$0xff]
    %v723 = vld [vmem:[#allocation6 + $0x198] sm:$0xff]
    %v724 = vld [vmem:[#allocation6 + $0x1a0] sm:$0xff]
    %v725 = vld [vmem:[#allocation6 + $0x1a8] sm:$0xff]
    %v726 = vld [vmem:[#allocation6 + $0x1b0] sm:$0xff]
    %v727 = vld [vmem:[#allocation6 + $0x1b8] sm:$0xff]
    %v728 = vld [vmem:[#allocation6 + $0x1c0] sm:$0xff]
    %v729 = vld [vmem:[#allocation6 + $0x1c8] sm:$0xff]
    %v730 = vld [vmem:[#allocation6 + $0x1d0] sm:$0xff]
    %v731 = vld [vmem:[#allocation6 + $0x1d8] sm:$0xff]
    %v732 = vld [vmem:[#allocation6 + $0x1e0] sm:$0xff]
    %v733 = vld [vmem:[#allocation6 + $0x1e8] sm:$0xff]
    %v734 = vld [vmem:[#allocation6 + $0x1f0] sm:$0xff]
    %v735 = vld [vmem:[#allocation6 + $0x1f8] sm:$0xff]
    %736 = vmatprep.subr.mxu0 %v673
    %737 = vmatpush1.msra.mxu0 %v672
    %738 = vmatprep.subr.mxu0 %v677
    %739 = vmatpush1.msra.mxu0 %v676
    %740 = vmatprep.subr.mxu0 %v681
    %741 = vmatpush1.msra.mxu0 %v680
    %742 = vmatprep.subr.mxu0 %v685
    %743 = vmatpush1.msra.mxu0 %v684
    %744 = vmatprep.subr.mxu0 %v689
    %745 = vmatpush1.msra.mxu0 %v688
    %746 = vmatprep.subr.mxu0 %v693
    %747 = vmatpush1.msra.mxu0 %v692
    %748 = vmatprep.subr.mxu0 %v697
    %749 = vmatpush1.msra.mxu0 %v696
    %750 = vmatprep.subr.mxu0 %v701
    %751 = vmatpush1.msra.mxu0 %v700
    %752 = vmatprep.subr.mxu0 %v705
    %753 = vmatpush1.msra.mxu0 %v704
    %754 = vmatprep.subr.mxu0 %v709
    %755 = vmatpush1.msra.mxu0 %v708
    %756 = vmatprep.subr.mxu0 %v713
    %757 = vmatpush1.msra.mxu0 %v712
    %758 = vmatprep.subr.mxu0 %v717
    %759 = vmatpush1.msra.mxu0 %v716
    %760 = vmatprep.subr.mxu0 %v721
    %761 = vmatpush1.msra.mxu0 %v720
    %762 = vmatprep.subr.mxu0 %v725
    %763 = vmatpush1.msra.mxu0 %v724
    %764 = vmatprep.subr.mxu0 %v729
    %765 = vmatpush1.msra.mxu0 %v728
    %766 = vmatprep.subr.mxu0 %v733
    %767 = vmatpush1.msra.mxu0 %v732
    %768 = vmatprep.subr.mxu0 0.0
    %769 = vmatpush1.msra.mxu0 0.0
    %770 = vmatprep.subr.mxu0 0.0
    %771 = vmatpush1.msra.mxu0 0.0
    %772 = vmatprep.subr.mxu0 0.0
    %773 = vmatpush1.msra.mxu0 0.0
    %774 = vmatprep.subr.mxu0 0.0
    %775 = vmatpush1.msra.mxu0 0.0
    %776 = vmatprep.subr.mxu0 0.0
    %777 = vmatpush1.msra.mxu0 0.0
    %778 = vmatprep.subr.mxu0 0.0
    %779 = vmatpush1.msra.mxu0 0.0
    %780 = vmatprep.subr.mxu0 0.0
    %781 = vmatpush1.msra.mxu0 0.0
    %782 = vmatprep.subr.mxu0 0.0
    %783 = vmatpush1.msra.mxu0 0.0
    %784 = vmatprep.subr.mxu0 0.0
    %785 = vmatpush1.msra.mxu0 0.0
    %786 = vmatprep.subr.mxu0 0.0
    %787 = vmatpush1.msra.mxu0 0.0
    %788 = vmatprep.subr.mxu0 0.0
    %789 = vmatpush1.msra.mxu0 0.0
    %790 = vmatprep.subr.mxu0 0.0
    %791 = vmatpush1.msra.mxu0 0.0
    %792 = vmatprep.subr.mxu0 0.0
    %793 = vmatpush1.msra.mxu0 0.0
    %794 = vmatprep.subr.mxu0 0.0
    %795 = vmatpush1.msra.mxu0 0.0
    %796 = vmatprep.subr.mxu0 0.0
    %797 = vmatpush1.msra.mxu0 0.0
    %798 = vmatprep.subr.mxu0 0.0
    %799 = vmatpush1.msra.mxu0 0.0
    %800 = vmatprep.mubr.f32.mxu0 0.0
    %801 = vmatmul.mubr.f32.gmra.mrb[0].mxu0 %v666
    %v802 = vpop.f32.mrb[0].mxu0
    %v803 = vadd.f32 0.0, %v802
    %v804 = vpop.f32.mrb[0].mxu0
    %v805 = vadd.f32 0.0, %v804
    %806 = vdwg.mxu0
    %807 = vmatprep.subr.mxu0 %v675
    %808 = vmatpush1.msra.mxu0 %v674
    %809 = vmatprep.subr.mxu0 %v679
    %810 = vmatpush1.msra.mxu0 %v678
    %811 = vmatprep.subr.mxu0 %v683
    %812 = vmatpush1.msra.mxu0 %v682
    %813 = vmatprep.subr.mxu0 %v687
    %814 = vmatpush1.msra.mxu0 %v686
    %815 = vmatprep.subr.mxu0 %v691
    %816 = vmatpush1.msra.mxu0 %v690
    %817 = vmatprep.subr.mxu0 %v695
    %818 = vmatpush1.msra.mxu0 %v694
    %819 = vmatprep.subr.mxu0 %v699
    %820 = vmatpush1.msra.mxu0 %v698
    %821 = vmatprep.subr.mxu0 %v703
    %822 = vmatpush1.msra.mxu0 %v702
    %823 = vmatprep.subr.mxu0 %v707
    %824 = vmatpush1.msra.mxu0 %v706
    %825 = vmatprep.subr.mxu0 %v711
    %826 = vmatpush1.msra.mxu0 %v710
    %827 = vmatprep.subr.mxu0 %v715
    %828 = vmatpush1.msra.mxu0 %v714
    %829 = vmatprep.subr.mxu0 %v719
    %830 = vmatpush1.msra.mxu0 %v718
    %831 = vmatprep.subr.mxu0 %v723
    %832 = vmatpush1.msra.mxu0 %v722
    %833 = vmatprep.subr.mxu0 %v727
    %834 = vmatpush1.msra.mxu0 %v726
    %835 = vmatprep.subr.mxu0 %v731
    %836 = vmatpush1.msra.mxu0 %v730
    %837 = vmatprep.subr.mxu0 %v735
    %838 = vmatpush1.msra.mxu0 %v734
    %839 = vmatprep.subr.mxu0 0.0
    %840 = vmatpush1.msra.mxu0 0.0
    %841 = vmatprep.subr.mxu0 0.0
    %842 = vmatpush1.msra.mxu0 0.0
    %843 = vmatprep.subr.mxu0 0.0
    %844 = vmatpush1.msra.mxu0 0.0
    %845 = vmatprep.subr.mxu0 0.0
    %846 = vmatpush1.msra.mxu0 0.0
    %847 = vmatprep.subr.mxu0 0.0
    %848 = vmatpush1.msra.mxu0 0.0
    %849 = vmatprep.subr.mxu0 0.0
    %850 = vmatpush1.msra.mxu0 0.0
    %851 = vmatprep.subr.mxu0 0.0
    %852 = vmatpush1.msra.mxu0 0.0
    %853 = vmatprep.subr.mxu0 0.0
    %854 = vmatpush1.msra.mxu0 0.0
    %855 = vmatprep.subr.mxu0 0.0
    %856 = vmatpush1.msra.mxu0 0.0
    %857 = vmatprep.subr.mxu0 0.0
    %858 = vmatpush1.msra.mxu0 0.0
    %859 = vmatprep.subr.mxu0 0.0
    %860 = vmatpush1.msra.mxu0 0.0
    %861 = vmatprep.subr.mxu0 0.0
    %862 = vmatpush1.msra.mxu0 0.0
    %863 = vmatprep.subr.mxu0 0.0
    %864 = vmatpush1.msra.mxu0 0.0
    %865 = vmatprep.subr.mxu0 0.0
    %866 = vmatpush1.msra.mxu0 0.0
    %867 = vmatprep.subr.mxu0 0.0
    %868 = vmatpush1.msra.mxu0 0.0
    %869 = vmatprep.subr.mxu0 0.0
    %870 = vmatpush1.msra.mxu0 0.0
    %871 = vmatprep.mubr.f32.mxu0 0.0
    %872 = vmatmul.mubr.f32.gmra.mrb[0].mxu0 %v666
    %v873 = vpop.f32.mrb[0].mxu0
    %v874 = vadd.f32 0.0, %v873
    %v875 = vpop.f32.mrb[0].mxu0
    %v876 = vadd.f32 0.0, %v875
    %877 = vdwg.mxu0
    %v878 = vadd.f32 %v668, %v803
    %v879 = vadd.f32 %v669, %v805
    %v880 = vadd.f32 %v670, %v874
    %v881 = vadd.f32 %v671, %v876
    %v882 = vmul.f32 %v878, 0.5
    %v883 = vtanh.pop %v882
    %v884 = vmul.f32 %v883, 0.5
    %v885 = vadd.f32 %v884, 0.5
    %v886 = vmul.f32 %v879, 0.5
    %v887 = vtanh.pop %v886
    %v888 = vmul.f32 %v887, 0.5
    %v889 = vadd.f32 %v888, 0.5
    %v890 = vtanh.pop %v880
    %v891 = vmul.f32 %v881, 0.5
    %v892 = vtanh.pop %v891
    %v893 = vmul.f32 %v892, 0.5
    %v894 = vadd.f32 %v893, 0.5
    %v895 = vmul.f32 %v889, %v664
    %v896 = vmul.f32 %v885, %v890
    %v897 = vadd.f32 %v895, %v896
    %v898 = vtanh.pop %v897
    %v899 = vmul.f32 %v894, %v898
    %900 = vst [vmem:[#allocation3 + $0x8] sm:$0xff] %v899
    %v901 = vld [vmem:[#allocation2 + $0x40] sm:$0xff]
    %v902 = vld [vmem:[#allocation2 + $0x48] sm:$0xff]
    %v903 = vld [vmem:[#allocation2 + $0x50] sm:$0xff]
    %v904 = vld [vmem:[#allocation2 + $0x58] sm:$0xff]
    %v905 = vld [vmem:[#allocation6] sm:$0xff]
    %v906 = vld [vmem:[#allocation6 + $0x8] sm:$0xff]
    %v907 = vld [vmem:[#allocation6 + $0x10] sm:$0xff]
    %v908 = vld [vmem:[#allocation6 + $0x18] sm:$0xff]
    %v909 = vld [vmem:[#allocation6 + $0x20] sm:$0xff]
    %v910 = vld [vmem:[#allocation6 + $0x28] sm:$0xff]
    %v911 = vld [vmem:[#allocation6 + $0x30] sm:$0xff]
    %v912 = vld [vmem:[#allocation6 + $0x38] sm:$0xff]
    %v913 = vld [vmem:[#allocation6 + $0x40] sm:$0xff]
    %v914 = vld [vmem:[#allocation6 + $0x48] sm:$0xff]
    %v915 = vld [vmem:[#allocation6 + $0x50] sm:$0xff]
    %v916 = vld [vmem:[#allocation6 + $0x58] sm:$0xff]
    %v917 = vld [vmem:[#allocation6 + $0x60] sm:$0xff]
    %v918 = vld [vmem:[#allocation6 + $0x68] sm:$0xff]
    %v919 = vld [vmem:[#allocation6 + $0x70] sm:$0xff]
    %v920 = vld [vmem:[#allocation6 + $0x78] sm:$0xff]
    %v921 = vld [vmem:[#allocation6 + $0x80] sm:$0xff]
    %v922 = vld [vmem:[#allocation6 + $0x88] sm:$0xff]
    %v923 = vld [vmem:[#allocation6 + $0x90] sm:$0xff]
    %v924 = vld [vmem:[#allocation6 + $0x98] sm:$0xff]
    %v925 = vld [vmem:[#allocation6 + $0xa0] sm:$0xff]
    %v926 = vld [vmem:[#allocation6 + $0xa8] sm:$0xff]
    %v927 = vld [vmem:[#allocation6 + $0xb0] sm:$0xff]
    %v928 = vld [vmem:[#allocation6 + $0xb8] sm:$0xff]
    %v929 = vld [vmem:[#allocation6 + $0xc0] sm:$0xff]
    %v930 = vld [vmem:[#allocation6 + $0xc8] sm:$0xff]
    %v931 = vld [vmem:[#allocation6 + $0xd0] sm:$0xff]
    %v932 = vld [vmem:[#allocation6 + $0xd8] sm:$0xff]
    %v933 = vld [vmem:[#allocation6 + $0xe0] sm:$0xff]
    %v934 = vld [vmem:[#allocation6 + $0xe8] sm:$0xff]
    %v935 = vld [vmem:[#allocation6 + $0xf0] sm:$0xff]
    %v936 = vld [vmem:[#allocation6 + $0xf8] sm:$0xff]
    %v937 = vld [vmem:[#allocation6 + $0x100] sm:$0xff]
    %v938 = vld [vmem:[#allocation6 + $0x108] sm:$0xff]
    %v939 = vld [vmem:[#allocation6 + $0x110] sm:$0xff]
    %v940 = vld [vmem:[#allocation6 + $0x118] sm:$0xff]
    %v941 = vld [vmem:[#allocation6 + $0x120] sm:$0xff]
    %v942 = vld [vmem:[#allocation6 + $0x128] sm:$0xff]
    %v943 = vld [vmem:[#allocation6 + $0x130] sm:$0xff]
    %v944 = vld [vmem:[#allocation6 + $0x138] sm:$0xff]
    %v945 = vld [vmem:[#allocation6 + $0x140] sm:$0xff]
    %v946 = vld [vmem:[#allocation6 + $0x148] sm:$0xff]
    %v947 = vld [vmem:[#allocation6 + $0x150] sm:$0xff]
    %v948 = vld [vmem:[#allocation6 + $0x158] sm:$0xff]
    %v949 = vld [vmem:[#allocation6 + $0x160] sm:$0xff]
    %v950 = vld [vmem:[#allocation6 + $0x168] sm:$0xff]
    %v951 = vld [vmem:[#allocation6 + $0x170] sm:$0xff]
    %v952 = vld [vmem:[#allocation6 + $0x178] sm:$0xff]
    %v953 = vld [vmem:[#allocation6 + $0x180] sm:$0xff]
    %v954 = vld [vmem:[#allocation6 + $0x188] sm:$0xff]
    %v955 = vld [vmem:[#allocation6 + $0x190] sm:$0xff]
    %v956 = vld [vmem:[#allocation6 + $0x198] sm:$0xff]
    %v957 = vld [vmem:[#allocation6 + $0x1a0] sm:$0xff]
    %v958 = vld [vmem:[#allocation6 + $0x1a8] sm:$0xff]
    %v959 = vld [vmem:[#allocation6 + $0x1b0] sm:$0xff]
    %v960 = vld [vmem:[#allocation6 + $0x1b8] sm:$0xff]
    %v961 = vld [vmem:[#allocation6 + $0x1c0] sm:$0xff]
    %v962 = vld [vmem:[#allocation6 + $0x1c8] sm:$0xff]
    %v963 = vld [vmem:[#allocation6 + $0x1d0] sm:$0xff]
    %v964 = vld [vmem:[#allocation6 + $0x1d8] sm:$0xff]
    %v965 = vld [vmem:[#allocation6 + $0x1e0] sm:$0xff]
    %v966 = vld [vmem:[#allocation6 + $0x1e8] sm:$0xff]
    %v967 = vld [vmem:[#allocation6 + $0x1f0] sm:$0xff]
    %v968 = vld [vmem:[#allocation6 + $0x1f8] sm:$0xff]
    %969 = vmatprep.subr.mxu0 %v906
    %970 = vmatpush1.msra.mxu0 %v905
    %971 = vmatprep.subr.mxu0 %v910
    %972 = vmatpush1.msra.mxu0 %v909
    %973 = vmatprep.subr.mxu0 %v914
    %974 = vmatpush1.msra.mxu0 %v913
    %975 = vmatprep.subr.mxu0 %v918
    %976 = vmatpush1.msra.mxu0 %v917
    %977 = vmatprep.subr.mxu0 %v922
    %978 = vmatpush1.msra.mxu0 %v921
    %979 = vmatprep.subr.mxu0 %v926
    %980 = vmatpush1.msra.mxu0 %v925
    %981 = vmatprep.subr.mxu0 %v930
    %982 = vmatpush1.msra.mxu0 %v929
    %983 = vmatprep.subr.mxu0 %v934
    %984 = vmatpush1.msra.mxu0 %v933
    %985 = vmatprep.subr.mxu0 %v938
    %986 = vmatpush1.msra.mxu0 %v937
    %987 = vmatprep.subr.mxu0 %v942
    %988 = vmatpush1.msra.mxu0 %v941
    %989 = vmatprep.subr.mxu0 %v946
    %990 = vmatpush1.msra.mxu0 %v945
    %991 = vmatprep.subr.mxu0 %v950
    %992 = vmatpush1.msra.mxu0 %v949
    %993 = vmatprep.subr.mxu0 %v954
    %994 = vmatpush1.msra.mxu0 %v953
    %995 = vmatprep.subr.mxu0 %v958
    %996 = vmatpush1.msra.mxu0 %v957
    %997 = vmatprep.subr.mxu0 %v962
    %998 = vmatpush1.msra.mxu0 %v961
    %999 = vmatprep.subr.mxu0 %v966
    %1000 = vmatpush1.msra.mxu0 %v965
    %1001 = vmatprep.subr.mxu0 0.0
    %1002 = vmatpush1.msra.mxu0 0.0
    %1003 = vmatprep.subr.mxu0 0.0
    %1004 = vmatpush1.msra.mxu0 0.0
    %1005 = vmatprep.subr.mxu0 0.0
    %1006 = vmatpush1.msra.mxu0 0.0
    %1007 = vmatprep.subr.mxu0 0.0
    %1008 = vmatpush1.msra.mxu0 0.0
    %1009 = vmatprep.subr.mxu0 0.0
    %1010 = vmatpush1.msra.mxu0 0.0
    %1011 = vmatprep.subr.mxu0 0.0
    %1012 = vmatpush1.msra.mxu0 0.0
    %1013 = vmatprep.subr.mxu0 0.0
    %1014 = vmatpush1.msra.mxu0 0.0
    %1015 = vmatprep.subr.mxu0 0.0
    %1016 = vmatpush1.msra.mxu0 0.0
    %1017 = vmatprep.subr.mxu0 0.0
    %1018 = vmatpush1.msra.mxu0 0.0
    %1019 = vmatprep.subr.mxu0 0.0
    %1020 = vmatpush1.msra.mxu0 0.0
    %1021 = vmatprep.subr.mxu0 0.0
    %1022 = vmatpush1.msra.mxu0 0.0
    %1023 = vmatprep.subr.mxu0 0.0
    %1024 = vmatpush1.msra.mxu0 0.0
    %1025 = vmatprep.subr.mxu0 0.0
    %1026 = vmatpush1.msra.mxu0 0.0
    %1027 = vmatprep.subr.mxu0 0.0
    %1028 = vmatpush1.msra.mxu0 0.0
    %1029 = vmatprep.subr.mxu0 0.0
    %1030 = vmatpush1.msra.mxu0 0.0
    %1031 = vmatprep.subr.mxu0 0.0
    %1032 = vmatpush1.msra.mxu0 0.0
    %1033 = vmatprep.mubr.f32.mxu0 0.0
    %1034 = vmatmul.mubr.f32.gmra.mrb[0].mxu0 %v899
    %v1035 = vpop.f32.mrb[0].mxu0
    %v1036 = vadd.f32 0.0, %v1035
    %v1037 = vpop.f32.mrb[0].mxu0
    %v1038 = vadd.f32 0.0, %v1037
    %1039 = vdwg.mxu0
    %1040 = vmatprep.subr.mxu0 %v908
    %1041 = vmatpush1.msra.mxu0 %v907
    %1042 = vmatprep.subr.mxu0 %v912
    %1043 = vmatpush1.msra.mxu0 %v911
    %1044 = vmatprep.subr.mxu0 %v916
    %1045 = vmatpush1.msra.mxu0 %v915
    %1046 = vmatprep.subr.mxu0 %v920
    %1047 = vmatpush1.msra.mxu0 %v919
    %1048 = vmatprep.subr.mxu0 %v924
    %1049 = vmatpush1.msra.mxu0 %v923
    %1050 = vmatprep.subr.mxu0 %v928
    %1051 = vmatpush1.msra.mxu0 %v927
    %1052 = vmatprep.subr.mxu0 %v932
    %1053 = vmatpush1.msra.mxu0 %v931
    %1054 = vmatprep.subr.mxu0 %v936
    %1055 = vmatpush1.msra.mxu0 %v935
    %1056 = vmatprep.subr.mxu0 %v940
    %1057 = vmatpush1.msra.mxu0 %v939
    %1058 = vmatprep.subr.mxu0 %v944
    %1059 = vmatpush1.msra.mxu0 %v943
    %1060 = vmatprep.subr.mxu0 %v948
    %1061 = vmatpush1.msra.mxu0 %v947
    %1062 = vmatprep.subr.mxu0 %v952
    %1063 = vmatpush1.msra.mxu0 %v951
    %1064 = vmatprep.subr.mxu0 %v956
    %1065 = vmatpush1.msra.mxu0 %v955
    %1066 = vmatprep.subr.mxu0 %v960
    %1067 = vmatpush1.msra.mxu0 %v959
    %1068 = vmatprep.subr.mxu0 %v964
    %1069 = vmatpush1.msra.mxu0 %v963
    %1070 = vmatprep.subr.mxu0 %v968
    %1071 = vmatpush1.msra.mxu0 %v967
    %1072 = vmatprep.subr.mxu0 0.0
    %1073 = vmatpush1.msra.mxu0 0.0
    %1074 = vmatprep.subr.mxu0 0.0
    %1075 = vmatpush1.msra.mxu0 0.0
    %1076 = vmatprep.subr.mxu0 0.0
    %1077 = vmatpush1.msra.mxu0 0.0
    %1078 = vmatprep.subr.mxu0 0.0
    %1079 = vmatpush1.msra.mxu0 0.0
    %1080 = vmatprep.subr.mxu0 0.0
    %1081 = vmatpush1.msra.mxu0 0.0
    %1082 = vmatprep.subr.mxu0 0.0
    %1083 = vmatpush1.msra.mxu0 0.0
    %1084 = vmatprep.subr.mxu0 0.0
    %1085 = vmatpush1.msra.mxu0 0.0
    %1086 = vmatprep.subr.mxu0 0.0
    %1087 = vmatpush1.msra.mxu0 0.0
    %1088 = vmatprep.subr.mxu0 0.0
    %1089 = vmatpush1.msra.mxu0 0.0
    %1090 = vmatprep.subr.mxu0 0.0
    %1091 = vmatpush1.msra.mxu0 0.0
    %1092 = vmatprep.subr.mxu0 0.0
    %1093 = vmatpush1.msra.mxu0 0.0
    %1094 = vmatprep.subr.mxu0 0.0
    %1095 = vmatpush1.msra.mxu0 0.0
    %1096 = vmatprep.subr.mxu0 0.0
    %1097 = vmatpush1.msra.mxu0 0.0
    %1098 = vmatprep.subr.mxu0 0.0
    %1099 = vmatpush1.msra.mxu0 0.0
    %1100 = vmatprep.subr.mxu0 0.0
    %1101 = vmatpush1.msra.mxu0 0.0
    %1102 = vmatprep.subr.mxu0 0.0
    %1103 = vmatpush1.msra.mxu0 0.0
    %1104 = vmatprep.mubr.f32.mxu0 0.0
    %1105 = vmatmul.mubr.f32.gmra.mrb[0].mxu0 %v899
    %v1106 = vpop.f32.mrb[0].mxu0
    %v1107 = vadd.f32 0.0, %v1106
    %v1108 = vpop.f32.mrb[0].mxu0
    %v1109 = vadd.f32 0.0, %v1108
    %1110 = vdwg.mxu0
    %v1111 = vadd.f32 %v901, %v1036
    %v1112 = vadd.f32 %v902, %v1038
    %v1113 = vadd.f32 %v903, %v1107
    %v1114 = vadd.f32 %v904, %v1109
    %v1115 = vmul.f32 %v1111, 0.5
    %v1116 = vtanh.pop %v1115
    %v1117 = vmul.f32 %v1116, 0.5
    %v1118 = vadd.f32 %v1117, 0.5
    %v1119 = vmul.f32 %v1112, 0.5
    %v1120 = vtanh.pop %v1119
    %v1121 = vmul.f32 %v1120, 0.5
    %v1122 = vadd.f32 %v1121, 0.5
    %v1123 = vtanh.pop %v1113
    %v1124 = vmul.f32 %v1114, 0.5
    %v1125 = vtanh.pop %v1124
    %v1126 = vmul.f32 %v1125, 0.5
    %v1127 = vadd.f32 %v1126, 0.5
    %v1128 = vmul.f32 %v1122, %v897
    %v1129 = vmul.f32 %v1118, %v1123
    %v1130 = vadd.f32 %v1128, %v1129
    %v1131 = vtanh.pop %v1130
    %v1132 = vmul.f32 %v1127, %v1131
    %1133 = vst [vmem:[#allocation3 + $0x10] sm:$0xff] %v1132
    %v1134 = vld [vmem:[#allocation2 + $0x60] sm:$0xff]
    %v1135 = vld [vmem:[#allocation2 + $0x68] sm:$0xff]
    %v1136 = vld [vmem:[#allocation2 + $0x70] sm:$0xff]
    %v1137 = vld [vmem:[#allocation2 + $0x78] sm:$0xff]
    %v1138 = vld [vmem:[#allocation6] sm:$0xff]
    %v1139 = vld [vmem:[#allocation6 + $0x8] sm:$0xff]
    %v1140 = vld [vmem:[#allocation6 + $0x10] sm:$0xff]
    %v1141 = vld [vmem:[#allocation6 + $0x18] sm:$0xff]
    %v1142 = vld [vmem:[#allocation6 + $0x20] sm:$0xff]
    %v1143 = vld [vmem:[#allocation6 + $0x28] sm:$0xff]
    %v1144 = vld [vmem:[#allocation6 + $0x30] sm:$0xff]
    %v1145 = vld [vmem:[#allocation6 + $0x38] sm:$0xff]
    %v1146 = vld [vmem:[#allocation6 + $0x40] sm:$0xff]
    %v1147 = vld [vmem:[#allocation6 + $0x48] sm:$0xff]
    %v1148 = vld [vmem:[#allocation6 + $0x50] sm:$0xff]
    %v1149 = vld [vmem:[#allocation6 + $0x58] sm:$0xff]
    %v1150 = vld [vmem:[#allocation6 + $0x60] sm:$0xff]
    %v1151 = vld [vmem:[#allocation6 + $0x68] sm:$0xff]
    %v1152 = vld [vmem:[#allocation6 + $0x70] sm:$0xff]
    %v1153 = vld [vmem:[#allocation6 + $0x78] sm:$0xff]
    %v1154 = vld [vmem:[#allocation6 + $0x80] sm:$0xff]
    %v1155 = vld [vmem:[#allocation6 + $0x88] sm:$0xff]
    %v1156 = vld [vmem:[#allocation6 + $0x90] sm:$0xff]
    %v1157 = vld [vmem:[#allocation6 + $0x98] sm:$0xff]
    %v1158 = vld [vmem:[#allocation6 + $0xa0] sm:$0xff]
    %v1159 = vld [vmem:[#allocation6 + $0xa8] sm:$0xff]
    %v1160 = vld [vmem:[#allocation6 + $0xb0] sm:$0xff]
    %v1161 = vld [vmem:[#allocation6 + $0xb8] sm:$0xff]
    %v1162 = vld [vmem:[#allocation6 + $0xc0] sm:$0xff]
    %v1163 = vld [vmem:[#allocation6 + $0xc8] sm:$0xff]
    %v1164 = vld [vmem:[#allocation6 + $0xd0] sm:$0xff]
    %v1165 = vld [vmem:[#allocation6 + $0xd8] sm:$0xff]
    %v1166 = vld [vmem:[#allocation6 + $0xe0] sm:$0xff]
    %v1167 = vld [vmem:[#allocation6 + $0xe8] sm:$0xff]
    %v1168 = vld [vmem:[#allocation6 + $0xf0] sm:$0xff]
    %v1169 = vld [vmem:[#allocation6 + $0xf8] sm:$0xff]
    %v1170 = vld [vmem:[#allocation6 + $0x100] sm:$0xff]
    %v1171 = vld [vmem:[#allocation6 + $0x108] sm:$0xff]
    %v1172 = vld [vmem:[#allocation6 + $0x110] sm:$0xff]
    %v1173 = vld [vmem:[#allocation6 + $0x118] sm:$0xff]
    %v1174 = vld [vmem:[#allocation6 + $0x120] sm:$0xff]
    %v1175 = vld [vmem:[#allocation6 + $0x128] sm:$0xff]
    %v1176 = vld [vmem:[#allocation6 + $0x130] sm:$0xff]
    %v1177 = vld [vmem:[#allocation6 + $0x138] sm:$0xff]
    %v1178 = vld [vmem:[#allocation6 + $0x140] sm:$0xff]
    %v1179 = vld [vmem:[#allocation6 + $0x148] sm:$0xff]
    %v1180 = vld [vmem:[#allocation6 + $0x150] sm:$0xff]
    %v1181 = vld [vmem:[#allocation6 + $0x158] sm:$0xff]
    %v1182 = vld [vmem:[#allocation6 + $0x160] sm:$0xff]
    %v1183 = vld [vmem:[#allocation6 + $0x168] sm:$0xff]
    %v1184 = vld [vmem:[#allocation6 + $0x170] sm:$0xff]
    %v1185 = vld [vmem:[#allocation6 + $0x178] sm:$0xff]
    %v1186 = vld [vmem:[#allocation6 + $0x180] sm:$0xff]
    %v1187 = vld [vmem:[#allocation6 + $0x188] sm:$0xff]
    %v1188 = vld [vmem:[#allocation6 + $0x190] sm:$0xff]
    %v1189 = vld [vmem:[#allocation6 + $0x198] sm:$0xff]
    %v1190 = vld [vmem:[#allocation6 + $0x1a0] sm:$0xff]
    %v1191 = vld [vmem:[#allocation6 + $0x1a8] sm:$0xff]
    %v1192 = vld [vmem:[#allocation6 + $0x1b0] sm:$0xff]
    %v1193 = vld [vmem:[#allocation6 + $0x1b8] sm:$0xff]
    %v1194 = vld [vmem:[#allocation6 + $0x1c0] sm:$0xff]
    %v1195 = vld [vmem:[#allocation6 + $0x1c8] sm:$0xff]
    %v1196 = vld [vmem:[#allocation6 + $0x1d0] sm:$0xff]
    %v1197 = vld [vmem:[#allocation6 + $0x1d8] sm:$0xff]
    %v1198 = vld [vmem:[#allocation6 + $0x1e0] sm:$0xff]
    %v1199 = vld [vmem:[#allocation6 + $0x1e8] sm:$0xff]
    %v1200 = vld [vmem:[#allocation6 + $0x1f0] sm:$0xff]
    %v1201 = vld [vmem:[#allocation6 + $0x1f8] sm:$0xff]
    %1202 = vmatprep.subr.mxu0 %v1139
    %1203 = vmatpush1.msra.mxu0 %v1138
    %1204 = vmatprep.subr.mxu0 %v1143
    %1205 = vmatpush1.msra.mxu0 %v1142
    %1206 = vmatprep.subr.mxu0 %v1147
    %1207 = vmatpush1.msra.mxu0 %v1146
    %1208 = vmatprep.subr.mxu0 %v1151
    %1209 = vmatpush1.msra.mxu0 %v1150
    %1210 = vmatprep.subr.mxu0 %v1155
    %1211 = vmatpush1.msra.mxu0 %v1154
    %1212 = vmatprep.subr.mxu0 %v1159
    %1213 = vmatpush1.msra.mxu0 %v1158
    %1214 = vmatprep.subr.mxu0 %v1163
    %1215 = vmatpush1.msra.mxu0 %v1162
    %1216 = vmatprep.subr.mxu0 %v1167
    %1217 = vmatpush1.msra.mxu0 %v1166
    %1218 = vmatprep.subr.mxu0 %v1171
    %1219 = vmatpush1.msra.mxu0 %v1170
    %1220 = vmatprep.subr.mxu0 %v1175
    %1221 = vmatpush1.msra.mxu0 %v1174
    %1222 = vmatprep.subr.mxu0 %v1179
    %1223 = vmatpush1.msra.mxu0 %v1178
    %1224 = vmatprep.subr.mxu0 %v1183
    %1225 = vmatpush1.msra.mxu0 %v1182
    %1226 = vmatprep.subr.mxu0 %v1187
    %1227 = vmatpush1.msra.mxu0 %v1186
    %1228 = vmatprep.subr.mxu0 %v1191
    %1229 = vmatpush1.msra.mxu0 %v1190
    %1230 = vmatprep.subr.mxu0 %v1195
    %1231 = vmatpush1.msra.mxu0 %v1194
    %1232 = vmatprep.subr.mxu0 %v1199
    %1233 = vmatpush1.msra.mxu0 %v1198
    %1234 = vmatprep.subr.mxu0 0.0
    %1235 = vmatpush1.msra.mxu0 0.0
    %1236 = vmatprep.subr.mxu0 0.0
    %1237 = vmatpush1.msra.mxu0 0.0
    %1238 = vmatprep.subr.mxu0 0.0
    %1239 = vmatpush1.msra.mxu0 0.0
    %1240 = vmatprep.subr.mxu0 0.0
    %1241 = vmatpush1.msra.mxu0 0.0
    %1242 = vmatprep.subr.mxu0 0.0
    %1243 = vmatpush1.msra.mxu0 0.0
    %1244 = vmatprep.subr.mxu0 0.0
    %1245 = vmatpush1.msra.mxu0 0.0
    %1246 = vmatprep.subr.mxu0 0.0
    %1247 = vmatpush1.msra.mxu0 0.0
    %1248 = vmatprep.subr.mxu0 0.0
    %1249 = vmatpush1.msra.mxu0 0.0
    %1250 = vmatprep.subr.mxu0 0.0
    %1251 = vmatpush1.msra.mxu0 0.0
    %1252 = vmatprep.subr.mxu0 0.0
    %1253 = vmatpush1.msra.mxu0 0.0
    %1254 = vmatprep.subr.mxu0 0.0
    %1255 = vmatpush1.msra.mxu0 0.0
    %1256 = vmatprep.subr.mxu0 0.0
    %1257 = vmatpush1.msra.mxu0 0.0
    %1258 = vmatprep.subr.mxu0 0.0
    %1259 = vmatpush1.msra.mxu0 0.0
    %1260 = vmatprep.subr.mxu0 0.0
    %1261 = vmatpush1.msra.mxu0 0.0
    %1262 = vmatprep.subr.mxu0 0.0
    %1263 = vmatpush1.msra.mxu0 0.0
    %1264 = vmatprep.subr.mxu0 0.0
    %1265 = vmatpush1.msra.mxu0 0.0
    %1266 = vmatprep.mubr.f32.mxu0 0.0
    %1267 = vmatmul.mubr.f32.gmra.mrb[0].mxu0 %v1132
    %v1268 = vpop.f32.mrb[0].mxu0
    %v1269 = vadd.f32 0.0, %v1268
    %v1270 = vpop.f32.mrb[0].mxu0
    %v1271 = vadd.f32 0.0, %v1270
    %1272 = vdwg.mxu0
    %1273 = vmatprep.subr.mxu0 %v1141
    %1274 = vmatpush1.msra.mxu0 %v1140
    %1275 = vmatprep.subr.mxu0 %v1145
    %1276 = vmatpush1.msra.mxu0 %v1144
    %1277 = vmatprep.subr.mxu0 %v1149
    %1278 = vmatpush1.msra.mxu0 %v1148
    %1279 = vmatprep.subr.mxu0 %v1153
    %1280 = vmatpush1.msra.mxu0 %v1152
    %1281 = vmatprep.subr.mxu0 %v1157
    %1282 = vmatpush1.msra.mxu0 %v1156
    %1283 = vmatprep.subr.mxu0 %v1161
    %1284 = vmatpush1.msra.mxu0 %v1160
    %1285 = vmatprep.subr.mxu0 %v1165
    %1286 = vmatpush1.msra.mxu0 %v1164
    %1287 = vmatprep.subr.mxu0 %v1169
    %1288 = vmatpush1.msra.mxu0 %v1168
    %1289 = vmatprep.subr.mxu0 %v1173
    %1290 = vmatpush1.msra.mxu0 %v1172
    %1291 = vmatprep.subr.mxu0 %v1177
    %1292 = vmatpush1.msra.mxu0 %v1176
    %1293 = vmatprep.subr.mxu0 %v1181
    %1294 = vmatpush1.msra.mxu0 %v1180
    %1295 = vmatprep.subr.mxu0 %v1185
    %1296 = vmatpush1.msra.mxu0 %v1184
    %1297 = vmatprep.subr.mxu0 %v1189
    %1298 = vmatpush1.msra.mxu0 %v1188
    %1299 = vmatprep.subr.mxu0 %v1193
    %1300 = vmatpush1.msra.mxu0 %v1192
    %1301 = vmatprep.subr.mxu0 %v1197
    %1302 = vmatpush1.msra.mxu0 %v1196
    %1303 = vmatprep.subr.mxu0 %v1201
    %1304 = vmatpush1.msra.mxu0 %v1200
    %1305 = vmatprep.subr.mxu0 0.0
    %1306 = vmatpush1.msra.mxu0 0.0
    %1307 = vmatprep.subr.mxu0 0.0
    %1308 = vmatpush1.msra.mxu0 0.0
    %1309 = vmatprep.subr.mxu0 0.0
    %1310 = vmatpush1.msra.mxu0 0.0
    %1311 = vmatprep.subr.mxu0 0.0
    %1312 = vmatpush1.msra.mxu0 0.0
    %1313 = vmatprep.subr.mxu0 0.0
    %1314 = vmatpush1.msra.mxu0 0.0
    %1315 = vmatprep.subr.mxu0 0.0
    %1316 = vmatpush1.msra.mxu0 0.0
    %1317 = vmatprep.subr.mxu0 0.0
    %1318 = vmatpush1.msra.mxu0 0.0
    %1319 = vmatprep.subr.mxu0 0.0
    %1320 = vmatpush1.msra.mxu0 0.0
    %1321 = vmatprep.subr.mxu0 0.0
    %1322 = vmatpush1.msra.mxu0 0.0
    %1323 = vmatprep.subr.mxu0 0.0
    %1324 = vmatpush1.msra.mxu0 0.0
    %1325 = vmatprep.subr.mxu0 0.0
    %1326 = vmatpush1.msra.mxu0 0.0
    %1327 = vmatprep.subr.mxu0 0.0
    %1328 = vmatpush1.msra.mxu0 0.0
    %1329 = vmatprep.subr.mxu0 0.0
    %1330 = vmatpush1.msra.mxu0 0.0
    %1331 = vmatprep.subr.mxu0 0.0
    %1332 = vmatpush1.msra.mxu0 0.0
    %1333 = vmatprep.subr.mxu0 0.0
    %1334 = vmatpush1.msra.mxu0 0.0
    %1335 = vmatprep.subr.mxu0 0.0
    %1336 = vmatpush1.msra.mxu0 0.0
    %1337 = vmatprep.mubr.f32.mxu0 0.0
    %1338 = vmatmul.mubr.f32.gmra.mrb[0].mxu0 %v1132
    %v1339 = vpop.f32.mrb[0].mxu0
    %v1340 = vadd.f32 0.0, %v1339
    %v1341 = vpop.f32.mrb[0].mxu0
    %v1342 = vadd.f32 0.0, %v1341
    %1343 = vdwg.mxu0
    %v1344 = vadd.f32 %v1134, %v1269
    %v1345 = vadd.f32 %v1135, %v1271
    %v1346 = vadd.f32 %v1136, %v1340
    %v1347 = vadd.f32 %v1137, %v1342
    %v1348 = vmul.f32 %v1344, 0.5
    %v1349 = vtanh.pop %v1348
    %v1350 = vmul.f32 %v1349, 0.5
    %v1351 = vadd.f32 %v1350, 0.5
    %v1352 = vmul.f32 %v1345, 0.5
    %v1353 = vtanh.pop %v1352
    %v1354 = vmul.f32 %v1353, 0.5
    %v1355 = vadd.f32 %v1354, 0.5
    %v1356 = vtanh.pop %v1346
    %v1357 = vmul.f32 %v1347, 0.5
    %v1358 = vtanh.pop %v1357
    %v1359 = vmul.f32 %v1358, 0.5
    %v1360 = vadd.f32 %v1359, 0.5
    %v1361 = vmul.f32 %v1355, %v1130
    %v1362 = vmul.f32 %v1351, %v1356
    %v1363 = vadd.f32 %v1361, %v1362
    %v1364 = vtanh.pop %v1363
    %v1365 = vmul.f32 %v1360, %v1364
    %1366 = vst [vmem:[#allocation3 + $0x18] sm:$0xff] %v1365
    %v1367 = vld [vmem:[#allocation2 + $0x80] sm:$0xff]
    %v1368 = vld [vmem:[#allocation2 + $0x88] sm:$0xff]
    %v1369 = vld [vmem:[#allocation2 + $0x90] sm:$0xff]
    %v1370 = vld [vmem:[#allocation2 + $0x98] sm:$0xff]
    %v1371 = vld [vmem:[#allocation6] sm:$0xff]
    %v1372 = vld [vmem:[#allocation6 + $0x8] sm:$0xff]
    %v1373 = vld [vmem:[#allocation6 + $0x10] sm:$0xff]
    %v1374 = vld [vmem:[#allocation6 + $0x18] sm:$0xff]
    %v1375 = vld [vmem:[#allocation6 + $0x20] sm:$0xff]
    %v1376 = vld [vmem:[#allocation6 + $0x28] sm:$0xff]
    %v1377 = vld [vmem:[#allocation6 + $0x30] sm:$0xff]
    %v1378 = vld [vmem:[#allocation6 + $0x38] sm:$0xff]
    %v1379 = vld [vmem:[#allocation6 + $0x40] sm:$0xff]
    %v1380 = vld [vmem:[#allocation6 + $0x48] sm:$0xff]
    %v1381 = vld [vmem:[#allocation6 + $0x50] sm:$0xff]
    %v1382 = vld [vmem:[#allocation6 + $0x58] sm:$0xff]
    %v1383 = vld [vmem:[#allocation6 + $0x60] sm:$0xff]
    %v1384 = vld [vmem:[#allocation6 + $0x68] sm:$0xff]
    %v1385 = vld [vmem:[#allocation6 + $0x70] sm:$0xff]
    %v1386 = vld [vmem:[#allocation6 + $0x78] sm:$0xff]
    %v1387 = vld [vmem:[#allocation6 + $0x80] sm:$0xff]
    %v1388 = vld [vmem:[#allocation6 + $0x88] sm:$0xff]
    %v1389 = vld [vmem:[#allocation6 + $0x90] sm:$0xff]
    %v1390 = vld [vmem:[#allocation6 + $0x98] sm:$0xff]
    %v1391 = vld [vmem:[#allocation6 + $0xa0] sm:$0xff]
    %v1392 = vld [vmem:[#allocation6 + $0xa8] sm:$0xff]
    %v1393 = vld [vmem:[#allocation6 + $0xb0] sm:$0xff]
    %v1394 = vld [vmem:[#allocation6 + $0xb8] sm:$0xff]
    %v1395 = vld [vmem:[#allocation6 + $0xc0] sm:$0xff]
    %v1396 = vld [vmem:[#allocation6 + $0xc8] sm:$0xff]
    %v1397 = vld [vmem:[#allocation6 + $0xd0] sm:$0xff]
    %v1398 = vld [vmem:[#allocation6 + $0xd8] sm:$0xff]
    %v1399 = vld [vmem:[#allocation6 + $0xe0] sm:$0xff]
    %v1400 = vld [vmem:[#allocation6 + $0xe8] sm:$0xff]
    %v1401 = vld [vmem:[#allocation6 + $0xf0] sm:$0xff]
    %v1402 = vld [vmem:[#allocation6 + $0xf8] sm:$0xff]
    %v1403 = vld [vmem:[#allocation6 + $0x100] sm:$0xff]
    %v1404 = vld [vmem:[#allocation6 + $0x108] sm:$0xff]
    %v1405 = vld [vmem:[#allocation6 + $0x110] sm:$0xff]
    %v1406 = vld [vmem:[#allocation6 + $0x118] sm:$0xff]
    %v1407 = vld [vmem:[#allocation6 + $0x120] sm:$0xff]
    %v1408 = vld [vmem:[#allocation6 + $0x128] sm:$0xff]
    %v1409 = vld [vmem:[#allocation6 + $0x130] sm:$0xff]
    %v1410 = vld [vmem:[#allocation6 + $0x138] sm:$0xff]
    %v1411 = vld [vmem:[#allocation6 + $0x140] sm:$0xff]
    %v1412 = vld [vmem:[#allocation6 + $0x148] sm:$0xff]
    %v1413 = vld [vmem:[#allocation6 + $0x150] sm:$0xff]
    %v1414 = vld [vmem:[#allocation6 + $0x158] sm:$0xff]
    %v1415 = vld [vmem:[#allocation6 + $0x160] sm:$0xff]
    %v1416 = vld [vmem:[#allocation6 + $0x168] sm:$0xff]
    %v1417 = vld [vmem:[#allocation6 + $0x170] sm:$0xff]
    %v1418 = vld [vmem:[#allocation6 + $0x178] sm:$0xff]
    %v1419 = vld [vmem:[#allocation6 + $0x180] sm:$0xff]
    %v1420 = vld [vmem:[#allocation6 + $0x188] sm:$0xff]
    %v1421 = vld [vmem:[#allocation6 + $0x190] sm:$0xff]
    %v1422 = vld [vmem:[#allocation6 + $0x198] sm:$0xff]
    %v1423 = vld [vmem:[#allocation6 + $0x1a0] sm:$0xff]
    %v1424 = vld [vmem:[#allocation6 + $0x1a8] sm:$0xff]
    %v1425 = vld [vmem:[#allocation6 + $0x1b0] sm:$0xff]
    %v1426 = vld [vmem:[#allocation6 + $0x1b8] sm:$0xff]
    %v1427 = vld [vmem:[#allocation6 + $0x1c0] sm:$0xff]
    %v1428 = vld [vmem:[#allocation6 + $0x1c8] sm:$0xff]
    %v1429 = vld [vmem:[#allocation6 + $0x1d0] sm:$0xff]
    %v1430 = vld [vmem:[#allocation6 + $0x1d8] sm:$0xff]
    %v1431 = vld [vmem:[#allocation6 + $0x1e0] sm:$0xff]
    %v1432 = vld [vmem:[#allocation6 + $0x1e8] sm:$0xff]
    %v1433 = vld [vmem:[#allocation6 + $0x1f0] sm:$0xff]
    %v1434 = vld [vmem:[#allocation6 + $0x1f8] sm:$0xff]
    %1435 = vmatprep.subr.mxu0 %v1372
    %1436 = vmatpush1.msra.mxu0 %v1371
    %1437 = vmatprep.subr.mxu0 %v1376
    %1438 = vmatpush1.msra.mxu0 %v1375
    %1439 = vmatprep.subr.mxu0 %v1380
    %1440 = vmatpush1.msra.mxu0 %v1379
    %1441 = vmatprep.subr.mxu0 %v1384
    %1442 = vmatpush1.msra.mxu0 %v1383
    %1443 = vmatprep.subr.mxu0 %v1388
    %1444 = vmatpush1.msra.mxu0 %v1387
    %1445 = vmatprep.subr.mxu0 %v1392
    %1446 = vmatpush1.msra.mxu0 %v1391
    %1447 = vmatprep.subr.mxu0 %v1396
    %1448 = vmatpush1.msra.mxu0 %v1395
    %1449 = vmatprep.subr.mxu0 %v1400
    %1450 = vmatpush1.msra.mxu0 %v1399
    %1451 = vmatprep.subr.mxu0 %v1404
    %1452 = vmatpush1.msra.mxu0 %v1403
    %1453 = vmatprep.subr.mxu0 %v1408
    %1454 = vmatpush1.msra.mxu0 %v1407
    %1455 = vmatprep.subr.mxu0 %v1412
    %1456 = vmatpush1.msra.mxu0 %v1411
    %1457 = vmatprep.subr.mxu0 %v1416
    %1458 = vmatpush1.msra.mxu0 %v1415
    %1459 = vmatprep.subr.mxu0 %v1420
    %1460 = vmatpush1.msra.mxu0 %v1419
    %1461 = vmatprep.subr.mxu0 %v1424
    %1462 = vmatpush1.msra.mxu0 %v1423
    %1463 = vmatprep.subr.mxu0 %v1428
    %1464 = vmatpush1.msra.mxu0 %v1427
    %1465 = vmatprep.subr.mxu0 %v1432
    %1466 = vmatpush1.msra.mxu0 %v1431
    %1467 = vmatprep.subr.mxu0 0.0
    %1468 = vmatpush1.msra.mxu0 0.0
    %1469 = vmatprep.subr.mxu0 0.0
    %1470 = vmatpush1.msra.mxu0 0.0
    %1471 = vmatprep.subr.mxu0 0.0
    %1472 = vmatpush1.msra.mxu0 0.0
    %1473 = vmatprep.subr.mxu0 0.0
    %1474 = vmatpush1.msra.mxu0 0.0
    %1475 = vmatprep.subr.mxu0 0.0
    %1476 = vmatpush1.msra.mxu0 0.0
    %1477 = vmatprep.subr.mxu0 0.0
    %1478 = vmatpush1.msra.mxu0 0.0
    %1479 = vmatprep.subr.mxu0 0.0
    %1480 = vmatpush1.msra.mxu0 0.0
    %1481 = vmatprep.subr.mxu0 0.0
    %1482 = vmatpush1.msra.mxu0 0.0
    %1483 = vmatprep.subr.mxu0 0.0
    %1484 = vmatpush1.msra.mxu0 0.0
    %1485 = vmatprep.subr.mxu0 0.0
    %1486 = vmatpush1.msra.mxu0 0.0
    %1487 = vmatprep.subr.mxu0 0.0
    %1488 = vmatpush1.msra.mxu0 0.0
    %1489 = vmatprep.subr.mxu0 0.0
    %1490 = vmatpush1.msra.mxu0 0.0
    %1491 = vmatprep.subr.mxu0 0.0
    %1492 = vmatpush1.msra.mxu0 0.0
    %1493 = vmatprep.subr.mxu0 0.0
    %1494 = vmatpush1.msra.mxu0 0.0
    %1495 = vmatprep.subr.mxu0 0.0
    %1496 = vmatpush1.msra.mxu0 0.0
    %1497 = vmatprep.subr.mxu0 0.0
    %1498 = vmatpush1.msra.mxu0 0.0
    %1499 = vmatprep.mubr.f32.mxu0 0.0
    %1500 = vmatmul.mubr.f32.gmra.mrb[0].mxu0 %v1365
    %v1501 = vpop.f32.mrb[0].mxu0
    %v1502 = vadd.f32 0.0, %v1501
    %v1503 = vpop.f32.mrb[0].mxu0
    %v1504 = vadd.f32 0.0, %v1503
    %1505 = vdwg.mxu0
    %1506 = vmatprep.subr.mxu0 %v1374
    %1507 = vmatpush1.msra.mxu0 %v1373
    %1508 = vmatprep.subr.mxu0 %v1378
    %1509 = vmatpush1.msra.mxu0 %v1377
    %1510 = vmatprep.subr.mxu0 %v1382
    %1511 = vmatpush1.msra.mxu0 %v1381
    %1512 = vmatprep.subr.mxu0 %v1386
    %1513 = vmatpush1.msra.mxu0 %v1385
    %1514 = vmatprep.subr.mxu0 %v1390
    %1515 = vmatpush1.msra.mxu0 %v1389
    %1516 = vmatprep.subr.mxu0 %v1394
    %1517 = vmatpush1.msra.mxu0 %v1393
    %1518 = vmatprep.subr.mxu0 %v1398
    %1519 = vmatpush1.msra.mxu0 %v1397
    %1520 = vmatprep.subr.mxu0 %v1402
    %1521 = vmatpush1.msra.mxu0 %v1401
    %1522 = vmatprep.subr.mxu0 %v1406
    %1523 = vmatpush1.msra.mxu0 %v1405
    %1524 = vmatprep.subr.mxu0 %v1410
    %1525 = vmatpush1.msra.mxu0 %v1409
    %1526 = vmatprep.subr.mxu0 %v1414
    %1527 = vmatpush1.msra.mxu0 %v1413
    %1528 = vmatprep.subr.mxu0 %v1418
    %1529 = vmatpush1.msra.mxu0 %v1417
    %1530 = vmatprep.subr.mxu0 %v1422
    %1531 = vmatpush1.msra.mxu0 %v1421
    %1532 = vmatprep.subr.mxu0 %v1426
    %1533 = vmatpush1.msra.mxu0 %v1425
    %1534 = vmatprep.subr.mxu0 %v1430
    %1535 = vmatpush1.msra.mxu0 %v1429
    %1536 = vmatprep.subr.mxu0 %v1434
    %1537 = vmatpush1.msra.mxu0 %v1433
    %1538 = vmatprep.subr.mxu0 0.0
    %1539 = vmatpush1.msra.mxu0 0.0
    %1540 = vmatprep.subr.mxu0 0.0
    %1541 = vmatpush1.msra.mxu0 0.0
    %1542 = vmatprep.subr.mxu0 0.0
    %1543 = vmatpush1.msra.mxu0 0.0
    %1544 = vmatprep.subr.mxu0 0.0
    %1545 = vmatpush1.msra.mxu0 0.0
    %1546 = vmatprep.subr.mxu0 0.0
    %1547 = vmatpush1.msra.mxu0 0.0
    %1548 = vmatprep.subr.mxu0 0.0
    %1549 = vmatpush1.msra.mxu0 0.0
    %1550 = vmatprep.subr.mxu0 0.0
    %1551 = vmatpush1.msra.mxu0 0.0
    %1552 = vmatprep.subr.mxu0 0.0
    %1553 = vmatpush1.msra.mxu0 0.0
    %1554 = vmatprep.subr.mxu0 0.0
    %1555 = vmatpush1.msra.mxu0 0.0
    %1556 = vmatprep.subr.mxu0 0.0
    %1557 = vmatpush1.msra.mxu0 0.0
    %1558 = vmatprep.subr.mxu0 0.0
    %1559 = vmatpush1.msra.mxu0 0.0
    %1560 = vmatprep.subr.mxu0 0.0
    %1561 = vmatpush1.msra.mxu0 0.0
    %1562 = vmatprep.subr.mxu0 0.0
    %1563 = vmatpush1.msra.mxu0 0.0
    %1564 = vmatprep.subr.mxu0 0.0
    %1565 = vmatpush1.msra.mxu0 0.0
    %1566 = vmatprep.subr.mxu0 0.0
    %1567 = vmatpush1.msra.mxu0 0.0
    %1568 = vmatprep.subr.mxu0 0.0
    %1569 = vmatpush1.msra.mxu0 0.0
    %1570 = vmatprep.mubr.f32.mxu0 0.0
    %1571 = vmatmul.mubr.f32.gmra.mrb[0].mxu0 %v1365
    %v1572 = vpop.f32.mrb[0].mxu0
    %v1573 = vadd.f32 0.0, %v1572
    %v1574 = vpop.f32.mrb[0].mxu0
    %v1575 = vadd.f32 0.0, %v1574
    %1576 = vdwg.mxu0
    %v1577 = vadd.f32 %v1367, %v1502
    %v1578 = vadd.f32 %v1368, %v1504
    %v1579 = vadd.f32 %v1369, %v1573
    %v1580 = vadd.f32 %v1370, %v1575
    %v1581 = vmul.f32 %v1577, 0.5
    %v1582 = vtanh.pop %v1581
    %v1583 = vmul.f32 %v1582, 0.5
    %v1584 = vadd.f32 %v1583, 0.5
    %v1585 = vmul.f32 %v1578, 0.5
    %v1586 = vtanh.pop %v1585
    %v1587 = vmul.f32 %v1586, 0.5
    %v1588 = vadd.f32 %v1587, 0.5
    %v1589 = vtanh.pop %v1579
    %v1590 = vmul.f32 %v1580, 0.5
    %v1591 = vtanh.pop %v1590
    %v1592 = vmul.f32 %v1591, 0.5
    %v1593 = vadd.f32 %v1592, 0.5
    %v1594 = vmul.f32 %v1588, %v1363
    %v1595 = vmul.f32 %v1584, %v1589
    %v1596 = vadd.f32 %v1594, %v1595
    %v1597 = vtanh.pop %v1596
    %v1598 = vmul.f32 %v1593, %v1597
    %1599 = vst [vmem:[#allocation3 + $0x20] sm:$0xff] %v1598
    %v1600 = vld [vmem:[#allocation2 + $0xa0] sm:$0xff]
    %v1601 = vld [vmem:[#allocation2 + $0xa8] sm:$0xff]
    %v1602 = vld [vmem:[#allocation2 + $0xb0] sm:$0xff]
    %v1603 = vld [vmem:[#allocation2 + $0xb8] sm:$0xff]
    %v1604 = vld [vmem:[#allocation6] sm:$0xff]
    %v1605 = vld [vmem:[#allocation6 + $0x8] sm:$0xff]
    %v1606 = vld [vmem:[#allocation6 + $0x10] sm:$0xff]
    %v1607 = vld [vmem:[#allocation6 + $0x18] sm:$0xff]
    %v1608 = vld [vmem:[#allocation6 + $0x20] sm:$0xff]
    %v1609 = vld [vmem:[#allocation6 + $0x28] sm:$0xff]
    %v1610 = vld [vmem:[#allocation6 + $0x30] sm:$0xff]
    %v1611 = vld [vmem:[#allocation6 + $0x38] sm:$0xff]
    %v1612 = vld [vmem:[#allocation6 + $0x40] sm:$0xff]
    %v1613 = vld [vmem:[#allocation6 + $0x48] sm:$0xff]
    %v1614 = vld [vmem:[#allocation6 + $0x50] sm:$0xff]
    %v1615 = vld [vmem:[#allocation6 + $0x58] sm:$0xff]
    %v1616 = vld [vmem:[#allocation6 + $0x60] sm:$0xff]
    %v1617 = vld [vmem:[#allocation6 + $0x68] sm:$0xff]
    %v1618 = vld [vmem:[#allocation6 + $0x70] sm:$0xff]
    %v1619 = vld [vmem:[#allocation6 + $0x78] sm:$0xff]
    %v1620 = vld [vmem:[#allocation6 + $0x80] sm:$0xff]
    %v1621 = vld [vmem:[#allocation6 + $0x88] sm:$0xff]
    %v1622 = vld [vmem:[#allocation6 + $0x90] sm:$0xff]
    %v1623 = vld [vmem:[#allocation6 + $0x98] sm:$0xff]
    %v1624 = vld [vmem:[#allocation6 + $0xa0] sm:$0xff]
    %v1625 = vld [vmem:[#allocation6 + $0xa8] sm:$0xff]
    %v1626 = vld [vmem:[#allocation6 + $0xb0] sm:$0xff]
    %v1627 = vld [vmem:[#allocation6 + $0xb8] sm:$0xff]
    %v1628 = vld [vmem:[#allocation6 + $0xc0] sm:$0xff]
    %v1629 = vld [vmem:[#allocation6 + $0xc8] sm:$0xff]
    %v1630 = vld [vmem:[#allocation6 + $0xd0] sm:$0xff]
    %v1631 = vld [vmem:[#allocation6 + $0xd8] sm:$0xff]
    %v1632 = vld [vmem:[#allocation6 + $0xe0] sm:$0xff]
    %v1633 = vld [vmem:[#allocation6 + $0xe8] sm:$0xff]
    %v1634 = vld [vmem:[#allocation6 + $0xf0] sm:$0xff]
    %v1635 = vld [vmem:[#allocation6 + $0xf8] sm:$0xff]
    %v1636 = vld [vmem:[#allocation6 + $0x100] sm:$0xff]
    %v1637 = vld [vmem:[#allocation6 + $0x108] sm:$0xff]
    %v1638 = vld [vmem:[#allocation6 + $0x110] sm:$0xff]
    %v1639 = vld [vmem:[#allocation6 + $0x118] sm:$0xff]
    %v1640 = vld [vmem:[#allocation6 + $0x120] sm:$0xff]
    %v1641 = vld [vmem:[#allocation6 + $0x128] sm:$0xff]
    %v1642 = vld [vmem:[#allocation6 + $0x130] sm:$0xff]
    %v1643 = vld [vmem:[#allocation6 + $0x138] sm:$0xff]
    %v1644 = vld [vmem:[#allocation6 + $0x140] sm:$0xff]
    %v1645 = vld [vmem:[#allocation6 + $0x148] sm:$0xff]
    %v1646 = vld [vmem:[#allocation6 + $0x150] sm:$0xff]
    %v1647 = vld [vmem:[#allocation6 + $0x158] sm:$0xff]
    %v1648 = vld [vmem:[#allocation6 + $0x160] sm:$0xff]
    %v1649 = vld [vmem:[#allocation6 + $0x168] sm:$0xff]
    %v1650 = vld [vmem:[#allocation6 + $0x170] sm:$0xff]
    %v1651 = vld [vmem:[#allocation6 + $0x178] sm:$0xff]
    %v1652 = vld [vmem:[#allocation6 + $0x180] sm:$0xff]
    %v1653 = vld [vmem:[#allocation6 + $0x188] sm:$0xff]
    %v1654 = vld [vmem:[#allocation6 + $0x190] sm:$0xff]
    %v1655 = vld [vmem:[#allocation6 + $0x198] sm:$0xff]
    %v1656 = vld [vmem:[#allocation6 + $0x1a0] sm:$0xff]
    %v1657 = vld [vmem:[#allocation6 + $0x1a8] sm:$0xff]
    %v1658 = vld [vmem:[#allocation6 + $0x1b0] sm:$0xff]
    %v1659 = vld [vmem:[#allocation6 + $0x1b8] sm:$0xff]
    %v1660 = vld [vmem:[#allocation6 + $0x1c0] sm:$0xff]
    %v1661 = vld [vmem:[#allocation6 + $0x1c8] sm:$0xff]
    %v1662 = vld [vmem:[#allocation6 + $0x1d0] sm:$0xff]
    %v1663 = vld [vmem:[#allocation6 + $0x1d8] sm:$0xff]
    %v1664 = vld [vmem:[#allocation6 + $0x1e0] sm:$0xff]
    %v1665 = vld [vmem:[#allocation6 + $0x1e8] sm:$0xff]
    %v1666 = vld [vmem:[#allocation6 + $0x1f0] sm:$0xff]
    %v1667 = vld [vmem:[#allocation6 + $0x1f8] sm:$0xff]
    %1668 = vmatprep.subr.mxu0 %v1605
    %1669 = vmatpush1.msra.mxu0 %v1604
    %1670 = vmatprep.subr.mxu0 %v1609
    %1671 = vmatpush1.msra.mxu0 %v1608
    %1672 = vmatprep.subr.mxu0 %v1613
    %1673 = vmatpush1.msra.mxu0 %v1612
    %1674 = vmatprep.subr.mxu0 %v1617
    %1675 = vmatpush1.msra.mxu0 %v1616
    %1676 = vmatprep.subr.mxu0 %v1621
    %1677 = vmatpush1.msra.mxu0 %v1620
    %1678 = vmatprep.subr.mxu0 %v1625
    %1679 = vmatpush1.msra.mxu0 %v1624
    %1680 = vmatprep.subr.mxu0 %v1629
    %1681 = vmatpush1.msra.mxu0 %v1628
    %1682 = vmatprep.subr.mxu0 %v1633
    %1683 = vmatpush1.msra.mxu0 %v1632
    %1684 = vmatprep.subr.mxu0 %v1637
    %1685 = vmatpush1.msra.mxu0 %v1636
    %1686 = vmatprep.subr.mxu0 %v1641
    %1687 = vmatpush1.msra.mxu0 %v1640
    %1688 = vmatprep.subr.mxu0 %v1645
    %1689 = vmatpush1.msra.mxu0 %v1644
    %1690 = vmatprep.subr.mxu0 %v1649
    %1691 = vmatpush1.msra.mxu0 %v1648
    %1692 = vmatprep.subr.mxu0 %v1653
    %1693 = vmatpush1.msra.mxu0 %v1652
    %1694 = vmatprep.subr.mxu0 %v1657
    %1695 = vmatpush1.msra.mxu0 %v1656
    %1696 = vmatprep.subr.mxu0 %v1661
    %1697 = vmatpush1.msra.mxu0 %v1660
    %1698 = vmatprep.subr.mxu0 %v1665
    %1699 = vmatpush1.msra.mxu0 %v1664
    %1700 = vmatprep.subr.mxu0 0.0
    %1701 = vmatpush1.msra.mxu0 0.0
    %1702 = vmatprep.subr.mxu0 0.0
    %1703 = vmatpush1.msra.mxu0 0.0
    %1704 = vmatprep.subr.mxu0 0.0
    %1705 = vmatpush1.msra.mxu0 0.0
    %1706 = vmatprep.subr.mxu0 0.0
    %1707 = vmatpush1.msra.mxu0 0.0
    %1708 = vmatprep.subr.mxu0 0.0
    %1709 = vmatpush1.msra.mxu0 0.0
    %1710 = vmatprep.subr.mxu0 0.0
    %1711 = vmatpush1.msra.mxu0 0.0
    %1712 = vmatprep.subr.mxu0 0.0
    %1713 = vmatpush1.msra.mxu0 0.0
    %1714 = vmatprep.subr.mxu0 0.0
    %1715 = vmatpush1.msra.mxu0 0.0
    %1716 = vmatprep.subr.mxu0 0.0
    %1717 = vmatpush1.msra.mxu0 0.0
    %1718 = vmatprep.subr.mxu0 0.0
    %1719 = vmatpush1.msra.mxu0 0.0
    %1720 = vmatprep.subr.mxu0 0.0
    %1721 = vmatpush1.msra.mxu0 0.0
    %1722 = vmatprep.subr.mxu0 0.0
    %1723 = vmatpush1.msra.mxu0 0.0
    %1724 = vmatprep.subr.mxu0 0.0
    %1725 = vmatpush1.msra.mxu0 0.0
    %1726 = vmatprep.subr.mxu0 0.0
    %1727 = vmatpush1.msra.mxu0 0.0
    %1728 = vmatprep.subr.mxu0 0.0
    %1729 = vmatpush1.msra.mxu0 0.0
    %1730 = vmatprep.subr.mxu0 0.0
    %1731 = vmatpush1.msra.mxu0 0.0
    %1732 = vmatprep.mubr.f32.mxu0 0.0
    %1733 = vmatmul.mubr.f32.gmra.mrb[0].mxu0 %v1598
    %v1734 = vpop.f32.mrb[0].mxu0
    %v1735 = vadd.f32 0.0, %v1734
    %v1736 = vpop.f32.mrb[0].mxu0
    %v1737 = vadd.f32 0.0, %v1736
    %1738 = vdwg.mxu0
    %1739 = vmatprep.subr.mxu0 %v1607
    %1740 = vmatpush1.msra.mxu0 %v1606
    %1741 = vmatprep.subr.mxu0 %v1611
    %1742 = vmatpush1.msra.mxu0 %v1610
    %1743 = vmatprep.subr.mxu0 %v1615
    %1744 = vmatpush1.msra.mxu0 %v1614
    %1745 = vmatprep.subr.mxu0 %v1619
    %1746 = vmatpush1.msra.mxu0 %v1618
    %1747 = vmatprep.subr.mxu0 %v1623
    %1748 = vmatpush1.msra.mxu0 %v1622
    %1749 = vmatprep.subr.mxu0 %v1627
    %1750 = vmatpush1.msra.mxu0 %v1626
    %1751 = vmatprep.subr.mxu0 %v1631
    %1752 = vmatpush1.msra.mxu0 %v1630
    %1753 = vmatprep.subr.mxu0 %v1635
    %1754 = vmatpush1.msra.mxu0 %v1634
    %1755 = vmatprep.subr.mxu0 %v1639
    %1756 = vmatpush1.msra.mxu0 %v1638
    %1757 = vmatprep.subr.mxu0 %v1643
    %1758 = vmatpush1.msra.mxu0 %v1642
    %1759 = vmatprep.subr.mxu0 %v1647
    %1760 = vmatpush1.msra.mxu0 %v1646
    %1761 = vmatprep.subr.mxu0 %v1651
    %1762 = vmatpush1.msra.mxu0 %v1650
    %1763 = vmatprep.subr.mxu0 %v1655
    %1764 = vmatpush1.msra.mxu0 %v1654
    %1765 = vmatprep.subr.mxu0 %v1659
    %1766 = vmatpush1.msra.mxu0 %v1658
    %1767 = vmatprep.subr.mxu0 %v1663
    %1768 = vmatpush1.msra.mxu0 %v1662
    %1769 = vmatprep.subr.mxu0 %v1667
    %1770 = vmatpush1.msra.mxu0 %v1666
    %1771 = vmatprep.subr.mxu0 0.0
    %1772 = vmatpush1.msra.mxu0 0.0
    %1773 = vmatprep.subr.mxu0 0.0
    %1774 = vmatpush1.msra.mxu0 0.0
    %1775 = vmatprep.subr.mxu0 0.0
    %1776 = vmatpush1.msra.mxu0 0.0
    %1777 = vmatprep.subr.mxu0 0.0
    %1778 = vmatpush1.msra.mxu0 0.0
    %1779 = vmatprep.subr.mxu0 0.0
    %1780 = vmatpush1.msra.mxu0 0.0
    %1781 = vmatprep.subr.mxu0 0.0
    %1782 = vmatpush1.msra.mxu0 0.0
    %1783 = vmatprep.subr.mxu0 0.0
    %1784 = vmatpush1.msra.mxu0 0.0
    %1785 = vmatprep.subr.mxu0 0.0
    %1786 = vmatpush1.msra.mxu0 0.0
    %1787 = vmatprep.subr.mxu0 0.0
    %1788 = vmatpush1.msra.mxu0 0.0
    %1789 = vmatprep.subr.mxu0 0.0
    %1790 = vmatpush1.msra.mxu0 0.0
    %1791 = vmatprep.subr.mxu0 0.0
    %1792 = vmatpush1.msra.mxu0 0.0
    %1793 = vmatprep.subr.mxu0 0.0
    %1794 = vmatpush1.msra.mxu0 0.0
    %1795 = vmatprep.subr.mxu0 0.0
    %1796 = vmatpush1.msra.mxu0 0.0
    %1797 = vmatprep.subr.mxu0 0.0
    %1798 = vmatpush1.msra.mxu0 0.0
    %1799 = vmatprep.subr.mxu0 0.0
    %1800 = vmatpush1.msra.mxu0 0.0
    %1801 = vmatprep.subr.mxu0 0.0
    %1802 = vmatpush1.msra.mxu0 0.0
    %1803 = vmatprep.mubr.f32.mxu0 0.0
    %1804 = vmatmul.mubr.f32.gmra.mrb[0].mxu0 %v1598
    %v1805 = vpop.f32.mrb[0].mxu0
    %v1806 = vadd.f32 0.0, %v1805
    %v1807 = vpop.f32.mrb[0].mxu0
    %v1808 = vadd.f32 0.0, %v1807
    %1809 = vdwg.mxu0
    %v1810 = vadd.f32 %v1600, %v1735
    %v1811 = vadd.f32 %v1601, %v1737
    %v1812 = vadd.f32 %v1602, %v1806
    %v1813 = vadd.f32 %v1603, %v1808
    %v1814 = vmul.f32 %v1810, 0.5
    %v1815 = vtanh.pop %v1814
    %v1816 = vmul.f32 %v1815, 0.5
    %v1817 = vadd.f32 %v1816, 0.5
    %v1818 = vmul.f32 %v1811, 0.5
    %v1819 = vtanh.pop %v1818
    %v1820 = vmul.f32 %v1819, 0.5
    %v1821 = vadd.f32 %v1820, 0.5
    %v1822 = vtanh.pop %v1812
    %v1823 = vmul.f32 %v1813, 0.5
    %v1824 = vtanh.pop %v1823
    %v1825 = vmul.f32 %v1824, 0.5
    %v1826 = vadd.f32 %v1825, 0.5
    %v1827 = vmul.f32 %v1821, %v1596
    %v1828 = vmul.f32 %v1817, %v1822
    %v1829 = vadd.f32 %v1827, %v1828
    %v1830 = vtanh.pop %v1829
    %v1831 = vmul.f32 %v1826, %v1830
    %1832 = vst [vmem:[#allocation3 + $0x28] sm:$0xff] %v1831
    %v1833 = vld [vmem:[#allocation2 + $0xc0] sm:$0xff]
    %v1834 = vld [vmem:[#allocation2 + $0xc8] sm:$0xff]
    %v1835 = vld [vmem:[#allocation2 + $0xd0] sm:$0xff]
    %v1836 = vld [vmem:[#allocation2 + $0xd8] sm:$0xff]
    %v1837 = vld [vmem:[#allocation6] sm:$0xff]
    %v1838 = vld [vmem:[#allocation6 + $0x8] sm:$0xff]
    %v1839 = vld [vmem:[#allocation6 + $0x10] sm:$0xff]
    %v1840 = vld [vmem:[#allocation6 + $0x18] sm:$0xff]
    %v1841 = vld [vmem:[#allocation6 + $0x20] sm:$0xff]
    %v1842 = vld [vmem:[#allocation6 + $0x28] sm:$0xff]
    %v1843 = vld [vmem:[#allocation6 + $0x30] sm:$0xff]
    %v1844 = vld [vmem:[#allocation6 + $0x38] sm:$0xff]
    %v1845 = vld [vmem:[#allocation6 + $0x40] sm:$0xff]
    %v1846 = vld [vmem:[#allocation6 + $0x48] sm:$0xff]
    %v1847 = vld [vmem:[#allocation6 + $0x50] sm:$0xff]
    %v1848 = vld [vmem:[#allocation6 + $0x58] sm:$0xff]
    %v1849 = vld [vmem:[#allocation6 + $0x60] sm:$0xff]
    %v1850 = vld [vmem:[#allocation6 + $0x68] sm:$0xff]
    %v1851 = vld [vmem:[#allocation6 + $0x70] sm:$0xff]
    %v1852 = vld [vmem:[#allocation6 + $0x78] sm:$0xff]
    %v1853 = vld [vmem:[#allocation6 + $0x80] sm:$0xff]
    %v1854 = vld [vmem:[#allocation6 + $0x88] sm:$0xff]
    %v1855 = vld [vmem:[#allocation6 + $0x90] sm:$0xff]
    %v1856 = vld [vmem:[#allocation6 + $0x98] sm:$0xff]
    %v1857 = vld [vmem:[#allocation6 + $0xa0] sm:$0xff]
    %v1858 = vld [vmem:[#allocation6 + $0xa8] sm:$0xff]
    %v1859 = vld [vmem:[#allocation6 + $0xb0] sm:$0xff]
    %v1860 = vld [vmem:[#allocation6 + $0xb8] sm:$0xff]
    %v1861 = vld [vmem:[#allocation6 + $0xc0] sm:$0xff]
    %v1862 = vld [vmem:[#allocation6 + $0xc8] sm:$0xff]
    %v1863 = vld [vmem:[#allocation6 + $0xd0] sm:$0xff]
    %v1864 = vld [vmem:[#allocation6 + $0xd8] sm:$0xff]
    %v1865 = vld [vmem:[#allocation6 + $0xe0] sm:$0xff]
    %v1866 = vld [vmem:[#allocation6 + $0xe8] sm:$0xff]
    %v1867 = vld [vmem:[#allocation6 + $0xf0] sm:$0xff]
    %v1868 = vld [vmem:[#allocation6 + $0xf8] sm:$0xff]
    %v1869 = vld [vmem:[#allocation6 + $0x100] sm:$0xff]
    %v1870 = vld [vmem:[#allocation6 + $0x108] sm:$0xff]
    %v1871 = vld [vmem:[#allocation6 + $0x110] sm:$0xff]
    %v1872 = vld [vmem:[#allocation6 + $0x118] sm:$0xff]
    %v1873 = vld [vmem:[#allocation6 + $0x120] sm:$0xff]
    %v1874 = vld [vmem:[#allocation6 + $0x128] sm:$0xff]
    %v1875 = vld [vmem:[#allocation6 + $0x130] sm:$0xff]
    %v1876 = vld [vmem:[#allocation6 + $0x138] sm:$0xff]
    %v1877 = vld [vmem:[#allocation6 + $0x140] sm:$0xff]
    %v1878 = vld [vmem:[#allocation6 + $0x148] sm:$0xff]
    %v1879 = vld [vmem:[#allocation6 + $0x150] sm:$0xff]
    %v1880 = vld [vmem:[#allocation6 + $0x158] sm:$0xff]
    %v1881 = vld [vmem:[#allocation6 + $0x160] sm:$0xff]
    %v1882 = vld [vmem:[#allocation6 + $0x168] sm:$0xff]
    %v1883 = vld [vmem:[#allocation6 + $0x170] sm:$0xff]
    %v1884 = vld [vmem:[#allocation6 + $0x178] sm:$0xff]
    %v1885 = vld [vmem:[#allocation6 + $0x180] sm:$0xff]
    %v1886 = vld [vmem:[#allocation6 + $0x188] sm:$0xff]
    %v1887 = vld [vmem:[#allocation6 + $0x190] sm:$0xff]
    %v1888 = vld [vmem:[#allocation6 + $0x198] sm:$0xff]
    %v1889 = vld [vmem:[#allocation6 + $0x1a0] sm:$0xff]
    %v1890 = vld [vmem:[#allocation6 + $0x1a8] sm:$0xff]
    %v1891 = vld [vmem:[#allocation6 + $0x1b0] sm:$0xff]
    %v1892 = vld [vmem:[#allocation6 + $0x1b8] sm:$0xff]
    %v1893 = vld [vmem:[#allocation6 + $0x1c0] sm:$0xff]
    %v1894 = vld [vmem:[#allocation6 + $0x1c8] sm:$0xff]
    %v1895 = vld [vmem:[#allocation6 + $0x1d0] sm:$0xff]
    %v1896 = vld [vmem:[#allocation6 + $0x1d8] sm:$0xff]
    %v1897 = vld [vmem:[#allocation6 + $0x1e0] sm:$0xff]
    %v1898 = vld [vmem:[#allocation6 + $0x1e8] sm:$0xff]
    %v1899 = vld [vmem:[#allocation6 + $0x1f0] sm:$0xff]
    %v1900 = vld [vmem:[#allocation6 + $0x1f8] sm:$0xff]
    %1901 = vmatprep.subr.mxu0 %v1838
    %1902 = vmatpush1.msra.mxu0 %v1837
    %1903 = vmatprep.subr.mxu0 %v1842
    %1904 = vmatpush1.msra.mxu0 %v1841
    %1905 = vmatprep.subr.mxu0 %v1846
    %1906 = vmatpush1.msra.mxu0 %v1845
    %1907 = vmatprep.subr.mxu0 %v1850
    %1908 = vmatpush1.msra.mxu0 %v1849
    %1909 = vmatprep.subr.mxu0 %v1854
    %1910 = vmatpush1.msra.mxu0 %v1853
    %1911 = vmatprep.subr.mxu0 %v1858
    %1912 = vmatpush1.msra.mxu0 %v1857
    %1913 = vmatprep.subr.mxu0 %v1862
    %1914 = vmatpush1.msra.mxu0 %v1861
    %1915 = vmatprep.subr.mxu0 %v1866
    %1916 = vmatpush1.msra.mxu0 %v1865
    %1917 = vmatprep.subr.mxu0 %v1870
    %1918 = vmatpush1.msra.mxu0 %v1869
    %1919 = vmatprep.subr.mxu0 %v1874
    %1920 = vmatpush1.msra.mxu0 %v1873
    %1921 = vmatprep.subr.mxu0 %v1878
    %1922 = vmatpush1.msra.mxu0 %v1877
    %1923 = vmatprep.subr.mxu0 %v1882
    %1924 = vmatpush1.msra.mxu0 %v1881
    %1925 = vmatprep.subr.mxu0 %v1886
    %1926 = vmatpush1.msra.mxu0 %v1885
    %1927 = vmatprep.subr.mxu0 %v1890
    %1928 = vmatpush1.msra.mxu0 %v1889
    %1929 = vmatprep.subr.mxu0 %v1894
    %1930 = vmatpush1.msra.mxu0 %v1893
    %1931 = vmatprep.subr.mxu0 %v1898
    %1932 = vmatpush1.msra.mxu0 %v1897
    %1933 = vmatprep.subr.mxu0 0.0
    %1934 = vmatpush1.msra.mxu0 0.0
    %1935 = vmatprep.subr.mxu0 0.0
    %1936 = vmatpush1.msra.mxu0 0.0
    %1937 = vmatprep.subr.mxu0 0.0
    %1938 = vmatpush1.msra.mxu0 0.0
    %1939 = vmatprep.subr.mxu0 0.0
    %1940 = vmatpush1.msra.mxu0 0.0
    %1941 = vmatprep.subr.mxu0 0.0
    %1942 = vmatpush1.msra.mxu0 0.0
    %1943 = vmatprep.subr.mxu0 0.0
    %1944 = vmatpush1.msra.mxu0 0.0
    %1945 = vmatprep.subr.mxu0 0.0
    %1946 = vmatpush1.msra.mxu0 0.0
    %1947 = vmatprep.subr.mxu0 0.0
    %1948 = vmatpush1.msra.mxu0 0.0
    %1949 = vmatprep.subr.mxu0 0.0
    %1950 = vmatpush1.msra.mxu0 0.0
    %1951 = vmatprep.subr.mxu0 0.0
    %1952 = vmatpush1.msra.mxu0 0.0
    %1953 = vmatprep.subr.mxu0 0.0
    %1954 = vmatpush1.msra.mxu0 0.0
    %1955 = vmatprep.subr.mxu0 0.0
    %1956 = vmatpush1.msra.mxu0 0.0
    %1957 = vmatprep.subr.mxu0 0.0
    %1958 = vmatpush1.msra.mxu0 0.0
    %1959 = vmatprep.subr.mxu0 0.0
    %1960 = vmatpush1.msra.mxu0 0.0
    %1961 = vmatprep.subr.mxu0 0.0
    %1962 = vmatpush1.msra.mxu0 0.0
    %1963 = vmatprep.subr.mxu0 0.0
    %1964 = vmatpush1.msra.mxu0 0.0
    %1965 = vmatprep.mubr.f32.mxu0 0.0
    %1966 = vmatmul.mubr.f32.gmra.mrb[0].mxu0 %v1831
    %v1967 = vpop.f32.mrb[0].mxu0
    %v1968 = vadd.f32 0.0, %v1967
    %v1969 = vpop.f32.mrb[0].mxu0
    %v1970 = vadd.f32 0.0, %v1969
    %1971 = vdwg.mxu0
    %1972 = vmatprep.subr.mxu0 %v1840
    %1973 = vmatpush1.msra.mxu0 %v1839
    %1974 = vmatprep.subr.mxu0 %v1844
    %1975 = vmatpush1.msra.mxu0 %v1843
    %1976 = vmatprep.subr.mxu0 %v1848
    %1977 = vmatpush1.msra.mxu0 %v1847
    %1978 = vmatprep.subr.mxu0 %v1852
    %1979 = vmatpush1.msra.mxu0 %v1851
    %1980 = vmatprep.subr.mxu0 %v1856
    %1981 = vmatpush1.msra.mxu0 %v1855
    %1982 = vmatprep.subr.mxu0 %v1860
    %1983 = vmatpush1.msra.mxu0 %v1859
    %1984 = vmatprep.subr.mxu0 %v1864
    %1985 = vmatpush1.msra.mxu0 %v1863
    %1986 = vmatprep.subr.mxu0 %v1868
    %1987 = vmatpush1.msra.mxu0 %v1867
    %1988 = vmatprep.subr.mxu0 %v1872
    %1989 = vmatpush1.msra.mxu0 %v1871
    %1990 = vmatprep.subr.mxu0 %v1876
    %1991 = vmatpush1.msra.mxu0 %v1875
    %1992 = vmatprep.subr.mxu0 %v1880
    %1993 = vmatpush1.msra.mxu0 %v1879
    %1994 = vmatprep.subr.mxu0 %v1884
    %1995 = vmatpush1.msra.mxu0 %v1883
    %1996 = vmatprep.subr.mxu0 %v1888
    %1997 = vmatpush1.msra.mxu0 %v1887
    %1998 = vmatprep.subr.mxu0 %v1892
    %1999 = vmatpush1.msra.mxu0 %v1891
    %2000 = vmatprep.subr.mxu0 %v1896
    %2001 = vmatpush1.msra.mxu0 %v1895
    %2002 = vmatprep.subr.mxu0 %v1900
    %2003 = vmatpush1.msra.mxu0 %v1899
    %2004 = vmatprep.subr.mxu0 0.0
    %2005 = vmatpush1.msra.mxu0 0.0
    %2006 = vmatprep.subr.mxu0 0.0
    %2007 = vmatpush1.msra.mxu0 0.0
    %2008 = vmatprep.subr.mxu0 0.0
    %2009 = vmatpush1.msra.mxu0 0.0
    %2010 = vmatprep.subr.mxu0 0.0
    %2011 = vmatpush1.msra.mxu0 0.0
    %2012 = vmatprep.subr.mxu0 0.0
    %2013 = vmatpush1.msra.mxu0 0.0
    %2014 = vmatprep.subr.mxu0 0.0
    %2015 = vmatpush1.msra.mxu0 0.0
    %2016 = vmatprep.subr.mxu0 0.0
    %2017 = vmatpush1.msra.mxu0 0.0
    %2018 = vmatprep.subr.mxu0 0.0
    %2019 = vmatpush1.msra.mxu0 0.0
    %2020 = vmatprep.subr.mxu0 0.0
    %2021 = vmatpush1.msra.mxu0 0.0
    %2022 = vmatprep.subr.mxu0 0.0
    %2023 = vmatpush1.msra.mxu0 0.0
    %2024 = vmatprep.subr.mxu0 0.0
    %2025 = vmatpush1.msra.mxu0 0.0
    %2026 = vmatprep.subr.mxu0 0.0
    %2027 = vmatpush1.msra.mxu0 0.0
    %2028 = vmatprep.subr.mxu0 0.0
    %2029 = vmatpush1.msra.mxu0 0.0
    %2030 = vmatprep.subr.mxu0 0.0
    %2031 = vmatpush1.msra.mxu0 0.0
    %2032 = vmatprep.subr.mxu0 0.0
    %2033 = vmatpush1.msra.mxu0 0.0
    %2034 = vmatprep.subr.mxu0 0.0
    %2035 = vmatpush1.msra.mxu0 0.0
    %2036 = vmatprep.mubr.f32.mxu0 0.0
    %2037 = vmatmul.mubr.f32.gmra.mrb[0].mxu0 %v1831
    %v2038 = vpop.f32.mrb[0].mxu0
    %v2039 = vadd.f32 0.0, %v2038
    %v2040 = vpop.f32.mrb[0].mxu0
    %v2041 = vadd.f32 0.0, %v2040
    %2042 = vdwg.mxu0
    %v2043 = vadd.f32 %v1833, %v1968
    %v2044 = vadd.f32 %v1834, %v1970
    %v2045 = vadd.f32 %v1835, %v2039
    %v2046 = vadd.f32 %v1836, %v2041
    %v2047 = vmul.f32 %v2043, 0.5
    %v2048 = vtanh.pop %v2047
    %v2049 = vmul.f32 %v2048, 0.5
    %v2050 = vadd.f32 %v2049, 0.5
    %v2051 = vmul.f32 %v2044, 0.5
    %v2052 = vtanh.pop %v2051
    %v2053 = vmul.f32 %v2052, 0.5
    %v2054 = vadd.f32 %v2053, 0.5
    %v2055 = vtanh.pop %v2045
    %v2056 = vmul.f32 %v2046, 0.5
    %v2057 = vtanh.pop %v2056
    %v2058 = vmul.f32 %v2057, 0.5
    %v2059 = vadd.f32 %v2058, 0.5
    %v2060 = vmul.f32 %v2054, %v1829
    %v2061 = vmul.f32 %v2050, %v2055
    %v2062 = vadd.f32 %v2060, %v2061
    %v2063 = vtanh.pop %v2062
    %v2064 = vmul.f32 %v2059, %v2063
    %2065 = vst [vmem:[#allocation3 + $0x30] sm:$0xff] %v2064
    %v2066 = vld [vmem:[#allocation2 + $0xe0] sm:$0xff]
    %v2067 = vld [vmem:[#allocation2 + $0xe8] sm:$0xff]
    %v2068 = vld [vmem:[#allocation2 + $0xf0] sm:$0xff]
    %v2069 = vld [vmem:[#allocation2 + $0xf8] sm:$0xff]
    %v2070 = vld [vmem:[#allocation6] sm:$0xff]
    %v2071 = vld [vmem:[#allocation6 + $0x8] sm:$0xff]
    %v2072 = vld [vmem:[#allocation6 + $0x10] sm:$0xff]
    %v2073 = vld [vmem:[#allocation6 + $0x18] sm:$0xff]
    %v2074 = vld [vmem:[#allocation6 + $0x20] sm:$0xff]
    %v2075 = vld [vmem:[#allocation6 + $0x28] sm:$0xff]
    %v2076 = vld [vmem:[#allocation6 + $0x30] sm:$0xff]
    %v2077 = vld [vmem:[#allocation6 + $0x38] sm:$0xff]
    %v2078 = vld [vmem:[#allocation6 + $0x40] sm:$0xff]
    %v2079 = vld [vmem:[#allocation6 + $0x48] sm:$0xff]
    %v2080 = vld [vmem:[#allocation6 + $0x50] sm:$0xff]
    %v2081 = vld [vmem:[#allocation6 + $0x58] sm:$0xff]
    %v2082 = vld [vmem:[#allocation6 + $0x60] sm:$0xff]
    %v2083 = vld [vmem:[#allocation6 + $0x68] sm:$0xff]
    %v2084 = vld [vmem:[#allocation6 + $0x70] sm:$0xff]
    %v2085 = vld [vmem:[#allocation6 + $0x78] sm:$0xff]
    %v2086 = vld [vmem:[#allocation6 + $0x80] sm:$0xff]
    %v2087 = vld [vmem:[#allocation6 + $0x88] sm:$0xff]
    %v2088 = vld [vmem:[#allocation6 + $0x90] sm:$0xff]
    %v2089 = vld [vmem:[#allocation6 + $0x98] sm:$0xff]
    %v2090 = vld [vmem:[#allocation6 + $0xa0] sm:$0xff]
    %v2091 = vld [vmem:[#allocation6 + $0xa8] sm:$0xff]
    %v2092 = vld [vmem:[#allocation6 + $0xb0] sm:$0xff]
    %v2093 = vld [vmem:[#allocation6 + $0xb8] sm:$0xff]
    %v2094 = vld [vmem:[#allocation6 + $0xc0] sm:$0xff]
    %v2095 = vld [vmem:[#allocation6 + $0xc8] sm:$0xff]
    %v2096 = vld [vmem:[#allocation6 + $0xd0] sm:$0xff]
    %v2097 = vld [vmem:[#allocation6 + $0xd8] sm:$0xff]
    %v2098 = vld [vmem:[#allocation6 + $0xe0] sm:$0xff]
    %v2099 = vld [vmem:[#allocation6 + $0xe8] sm:$0xff]
    %v2100 = vld [vmem:[#allocation6 + $0xf0] sm:$0xff]
    %v2101 = vld [vmem:[#allocation6 + $0xf8] sm:$0xff]
    %v2102 = vld [vmem:[#allocation6 + $0x100] sm:$0xff]
    %v2103 = vld [vmem:[#allocation6 + $0x108] sm:$0xff]
    %v2104 = vld [vmem:[#allocation6 + $0x110] sm:$0xff]
    %v2105 = vld [vmem:[#allocation6 + $0x118] sm:$0xff]
    %v2106 = vld [vmem:[#allocation6 + $0x120] sm:$0xff]
    %v2107 = vld [vmem:[#allocation6 + $0x128] sm:$0xff]
    %v2108 = vld [vmem:[#allocation6 + $0x130] sm:$0xff]
    %v2109 = vld [vmem:[#allocation6 + $0x138] sm:$0xff]
    %v2110 = vld [vmem:[#allocation6 + $0x140] sm:$0xff]
    %v2111 = vld [vmem:[#allocation6 + $0x148] sm:$0xff]
    %v2112 = vld [vmem:[#allocation6 + $0x150] sm:$0xff]
    %v2113 = vld [vmem:[#allocation6 + $0x158] sm:$0xff]
    %v2114 = vld [vmem:[#allocation6 + $0x160] sm:$0xff]
    %v2115 = vld [vmem:[#allocation6 + $0x168] sm:$0xff]
    %v2116 = vld [vmem:[#allocation6 + $0x170] sm:$0xff]
    %v2117 = vld [vmem:[#allocation6 + $0x178] sm:$0xff]
    %v2118 = vld [vmem:[#allocation6 + $0x180] sm:$0xff]
    %v2119 = vld [vmem:[#allocation6 + $0x188] sm:$0xff]
    %v2120 = vld [vmem:[#allocation6 + $0x190] sm:$0xff]
    %v2121 = vld [vmem:[#allocation6 + $0x198] sm:$0xff]
    %v2122 = vld [vmem:[#allocation6 + $0x1a0] sm:$0xff]
    %v2123 = vld [vmem:[#allocation6 + $0x1a8] sm:$0xff]
    %v2124 = vld [vmem:[#allocation6 + $0x1b0] sm:$0xff]
    %v2125 = vld [vmem:[#allocation6 + $0x1b8] sm:$0xff]
    %v2126 = vld [vmem:[#allocation6 + $0x1c0] sm:$0xff]
    %v2127 = vld [vmem:[#allocation6 + $0x1c8] sm:$0xff]
    %v2128 = vld [vmem:[#allocation6 + $0x1d0] sm:$0xff]
    %v2129 = vld [vmem:[#allocation6 + $0x1d8] sm:$0xff]
    %v2130 = vld [vmem:[#allocation6 + $0x1e0] sm:$0xff]
    %v2131 = vld [vmem:[#allocation6 + $0x1e8] sm:$0xff]
    %v2132 = vld [vmem:[#allocation6 + $0x1f0] sm:$0xff]
    %v2133 = vld [vmem:[#allocation6 + $0x1f8] sm:$0xff]
    %2134 = vmatprep.subr.mxu0 %v2071
    %2135 = vmatpush1.msra.mxu0 %v2070
    %2136 = vmatprep.subr.mxu0 %v2075
    %2137 = vmatpush1.msra.mxu0 %v2074
    %2138 = vmatprep.subr.mxu0 %v2079
    %2139 = vmatpush1.msra.mxu0 %v2078
    %2140 = vmatprep.subr.mxu0 %v2083
    %2141 = vmatpush1.msra.mxu0 %v2082
    %2142 = vmatprep.subr.mxu0 %v2087
    %2143 = vmatpush1.msra.mxu0 %v2086
    %2144 = vmatprep.subr.mxu0 %v2091
    %2145 = vmatpush1.msra.mxu0 %v2090
    %2146 = vmatprep.subr.mxu0 %v2095
    %2147 = vmatpush1.msra.mxu0 %v2094
    %2148 = vmatprep.subr.mxu0 %v2099
    %2149 = vmatpush1.msra.mxu0 %v2098
    %2150 = vmatprep.subr.mxu0 %v2103
    %2151 = vmatpush1.msra.mxu0 %v2102
    %2152 = vmatprep.subr.mxu0 %v2107
    %2153 = vmatpush1.msra.mxu0 %v2106
    %2154 = vmatprep.subr.mxu0 %v2111
    %2155 = vmatpush1.msra.mxu0 %v2110
    %2156 = vmatprep.subr.mxu0 %v2115
    %2157 = vmatpush1.msra.mxu0 %v2114
    %2158 = vmatprep.subr.mxu0 %v2119
    %2159 = vmatpush1.msra.mxu0 %v2118
    %2160 = vmatprep.subr.mxu0 %v2123
    %2161 = vmatpush1.msra.mxu0 %v2122
    %2162 = vmatprep.subr.mxu0 %v2127
    %2163 = vmatpush1.msra.mxu0 %v2126
    %2164 = vmatprep.subr.mxu0 %v2131
    %2165 = vmatpush1.msra.mxu0 %v2130
    %2166 = vmatprep.subr.mxu0 0.0
    %2167 = vmatpush1.msra.mxu0 0.0
    %2168 = vmatprep.subr.mxu0 0.0
    %2169 = vmatpush1.msra.mxu0 0.0
    %2170 = vmatprep.subr.mxu0 0.0
    %2171 = vmatpush1.msra.mxu0 0.0
    %2172 = vmatprep.subr.mxu0 0.0
    %2173 = vmatpush1.msra.mxu0 0.0
    %2174 = vmatprep.subr.mxu0 0.0
    %2175 = vmatpush1.msra.mxu0 0.0
    %2176 = vmatprep.subr.mxu0 0.0
    %2177 = vmatpush1.msra.mxu0 0.0
    %2178 = vmatprep.subr.mxu0 0.0
    %2179 = vmatpush1.msra.mxu0 0.0
    %2180 = vmatprep.subr.mxu0 0.0
    %2181 = vmatpush1.msra.mxu0 0.0
    %2182 = vmatprep.subr.mxu0 0.0
    %2183 = vmatpush1.msra.mxu0 0.0
    %2184 = vmatprep.subr.mxu0 0.0
    %2185 = vmatpush1.msra.mxu0 0.0
    %2186 = vmatprep.subr.mxu0 0.0
    %2187 = vmatpush1.msra.mxu0 0.0
    %2188 = vmatprep.subr.mxu0 0.0
    %2189 = vmatpush1.msra.mxu0 0.0
    %2190 = vmatprep.subr.mxu0 0.0
    %2191 = vmatpush1.msra.mxu0 0.0
    %2192 = vmatprep.subr.mxu0 0.0
    %2193 = vmatpush1.msra.mxu0 0.0
    %2194 = vmatprep.subr.mxu0 0.0
    %2195 = vmatpush1.msra.mxu0 0.0
    %2196 = vmatprep.subr.mxu0 0.0
    %2197 = vmatpush1.msra.mxu0 0.0
    %2198 = vmatprep.mubr.f32.mxu0 0.0
    %2199 = vmatmul.mubr.f32.gmra.mrb[0].mxu0 %v2064
    %v2200 = vpop.f32.mrb[0].mxu0
    %v2201 = vadd.f32 0.0, %v2200
    %v2202 = vpop.f32.mrb[0].mxu0
    %v2203 = vadd.f32 0.0, %v2202
    %2204 = vdwg.mxu0
    %2205 = vmatprep.subr.mxu0 %v2073
    %2206 = vmatpush1.msra.mxu0 %v2072
    %2207 = vmatprep.subr.mxu0 %v2077
    %2208 = vmatpush1.msra.mxu0 %v2076
    %2209 = vmatprep.subr.mxu0 %v2081
    %2210 = vmatpush1.msra.mxu0 %v2080
    %2211 = vmatprep.subr.mxu0 %v2085
    %2212 = vmatpush1.msra.mxu0 %v2084
    %2213 = vmatprep.subr.mxu0 %v2089
    %2214 = vmatpush1.msra.mxu0 %v2088
    %2215 = vmatprep.subr.mxu0 %v2093
    %2216 = vmatpush1.msra.mxu0 %v2092
    %2217 = vmatprep.subr.mxu0 %v2097
    %2218 = vmatpush1.msra.mxu0 %v2096
    %2219 = vmatprep.subr.mxu0 %v2101
    %2220 = vmatpush1.msra.mxu0 %v2100
    %2221 = vmatprep.subr.mxu0 %v2105
    %2222 = vmatpush1.msra.mxu0 %v2104
    %2223 = vmatprep.subr.mxu0 %v2109
    %2224 = vmatpush1.msra.mxu0 %v2108
    %2225 = vmatprep.subr.mxu0 %v2113
    %2226 = vmatpush1.msra.mxu0 %v2112
    %2227 = vmatprep.subr.mxu0 %v2117
    %2228 = vmatpush1.msra.mxu0 %v2116
    %2229 = vmatprep.subr.mxu0 %v2121
    %2230 = vmatpush1.msra.mxu0 %v2120
    %2231 = vmatprep.subr.mxu0 %v2125
    %2232 = vmatpush1.msra.mxu0 %v2124
    %2233 = vmatprep.subr.mxu0 %v2129
    %2234 = vmatpush1.msra.mxu0 %v2128
    %2235 = vmatprep.subr.mxu0 %v2133
    %2236 = vmatpush1.msra.mxu0 %v2132
    %2237 = vmatprep.subr.mxu0 0.0
    %2238 = vmatpush1.msra.mxu0 0.0
    %2239 = vmatprep.subr.mxu0 0.0
    %2240 = vmatpush1.msra.mxu0 0.0
    %2241 = vmatprep.subr.mxu0 0.0
    %2242 = vmatpush1.msra.mxu0 0.0
    %2243 = vmatprep.subr.mxu0 0.0
    %2244 = vmatpush1.msra.mxu0 0.0
    %2245 = vmatprep.subr.mxu0 0.0
    %2246 = vmatpush1.msra.mxu0 0.0
    %2247 = vmatprep.subr.mxu0 0.0
    %2248 = vmatpush1.msra.mxu0 0.0
    %2249 = vmatprep.subr.mxu0 0.0
    %2250 = vmatpush1.msra.mxu0 0.0
    %2251 = vmatprep.subr.mxu0 0.0
    %2252 = vmatpush1.msra.mxu0 0.0
    %2253 = vmatprep.subr.mxu0 0.0
    %2254 = vmatpush1.msra.mxu0 0.0
    %2255 = vmatprep.subr.mxu0 0.0
    %2256 = vmatpush1.msra.mxu0 0.0
    %2257 = vmatprep.subr.mxu0 0.0
    %2258 = vmatpush1.msra.mxu0 0.0
    %2259 = vmatprep.subr.mxu0 0.0
    %2260 = vmatpush1.msra.mxu0 0.0
    %2261 = vmatprep.subr.mxu0 0.0
    %2262 = vmatpush1.msra.mxu0 0.0
    %2263 = vmatprep.subr.mxu0 0.0
    %2264 = vmatpush1.msra.mxu0 0.0
    %2265 = vmatprep.subr.mxu0 0.0
    %2266 = vmatpush1.msra.mxu0 0.0
    %2267 = vmatprep.subr.mxu0 0.0
    %2268 = vmatpush1.msra.mxu0 0.0
    %2269 = vmatprep.mubr.f32.mxu0 0.0
    %2270 = vmatmul.mubr.f32.gmra.mrb[0].mxu0 %v2064
    %v2271 = vpop.f32.mrb[0].mxu0
    %v2272 = vadd.f32 0.0, %v2271
    %v2273 = vpop.f32.mrb[0].mxu0
    %v2274 = vadd.f32 0.0, %v2273
    %2275 = vdwg.mxu0
    %v2276 = vadd.f32 %v2066, %v2201
    %v2277 = vadd.f32 %v2067, %v2203
    %v2278 = vadd.f32 %v2068, %v2272
    %v2279 = vadd.f32 %v2069, %v2274
    %v2280 = vmul.f32 %v2276, 0.5
    %v2281 = vtanh.pop %v2280
    %v2282 = vmul.f32 %v2281, 0.5
    %v2283 = vadd.f32 %v2282, 0.5
    %v2284 = vmul.f32 %v2277, 0.5
    %v2285 = vtanh.pop %v2284
    %v2286 = vmul.f32 %v2285, 0.5
    %v2287 = vadd.f32 %v2286, 0.5
    %v2288 = vtanh.pop %v2278
    %v2289 = vmul.f32 %v2279, 0.5
    %v2290 = vtanh.pop %v2289
    %v2291 = vmul.f32 %v2290, 0.5
    %v2292 = vadd.f32 %v2291, 0.5
    %v2293 = vmul.f32 %v2287, %v2062
    %v2294 = vmul.f32 %v2283, %v2288
    %v2295 = vadd.f32 %v2293, %v2294
    %v2296 = vtanh.pop %v2295
    %v2297 = vmul.f32 %v2292, %v2296
    %2298 = vst [vmem:[#allocation3 + $0x38] sm:$0xff] %v2297
    %v2299 = vld [vmem:[#allocation3] sm:$0xff]
    %v2300 = vld [vmem:[#allocation3 + $0x8] sm:$0xff]
    %v2301 = vld [vmem:[#allocation3 + $0x10] sm:$0xff]
    %v2302 = vld [vmem:[#allocation3 + $0x18] sm:$0xff]
    %v2303 = vld [vmem:[#allocation3 + $0x20] sm:$0xff]
    %v2304 = vld [vmem:[#allocation3 + $0x28] sm:$0xff]
    %v2305 = vld [vmem:[#allocation3 + $0x30] sm:$0xff]
    %v2306 = vld [vmem:[#allocation3 + $0x38] sm:$0xff]
    %v2307 = vld [vmem:[#allocation8] sm:$0xff]
    %v2308 = vld [vmem:[#allocation8 + $0x8] sm:$0xff]
    %v2309 = vld [vmem:[#allocation8 + $0x10] sm:$0xff]
    %v2310 = vld [vmem:[#allocation8 + $0x18] sm:$0xff]
    %v2311 = vld [vmem:[#allocation8 + $0x20] sm:$0xff]
    %v2312 = vld [vmem:[#allocation8 + $0x28] sm:$0xff]
    %v2313 = vld [vmem:[#allocation8 + $0x30] sm:$0xff]
    %v2314 = vld [vmem:[#allocation8 + $0x38] sm:$0xff]
    %v2315 = vld [vmem:[#allocation8 + $0x40] sm:$0xff]
    %v2316 = vld [vmem:[#allocation8 + $0x48] sm:$0xff]
    %v2317 = vld [vmem:[#allocation8 + $0x50] sm:$0xff]
    %v2318 = vld [vmem:[#allocation8 + $0x58] sm:$0xff]
    %v2319 = vld [vmem:[#allocation8 + $0x60] sm:$0xff]
    %v2320 = vld [vmem:[#allocation8 + $0x68] sm:$0xff]
    %v2321 = vld [vmem:[#allocation8 + $0x70] sm:$0xff]
    %v2322 = vld [vmem:[#allocation8 + $0x78] sm:$0xff]
    %v2323 = vld [vmem:[#allocation8 + $0x80] sm:$0xff]
    %v2324 = vld [vmem:[#allocation8 + $0x88] sm:$0xff]
    %v2325 = vld [vmem:[#allocation8 + $0x90] sm:$0xff]
    %v2326 = vld [vmem:[#allocation8 + $0x98] sm:$0xff]
    %v2327 = vld [vmem:[#allocation8 + $0xa0] sm:$0xff]
    %v2328 = vld [vmem:[#allocation8 + $0xa8] sm:$0xff]
    %v2329 = vld [vmem:[#allocation8 + $0xb0] sm:$0xff]
    %v2330 = vld [vmem:[#allocation8 + $0xb8] sm:$0xff]
    %v2331 = vld [vmem:[#allocation8 + $0xc0] sm:$0xff]
    %v2332 = vld [vmem:[#allocation8 + $0xc8] sm:$0xff]
    %v2333 = vld [vmem:[#allocation8 + $0xd0] sm:$0xff]
    %v2334 = vld [vmem:[#allocation8 + $0xd8] sm:$0xff]
    %v2335 = vld [vmem:[#allocation8 + $0xe0] sm:$0xff]
    %v2336 = vld [vmem:[#allocation8 + $0xe8] sm:$0xff]
    %v2337 = vld [vmem:[#allocation8 + $0xf0] sm:$0xff]
    %v2338 = vld [vmem:[#allocation8 + $0xf8] sm:$0xff]
    %v2339 = vld [vmem:[#allocation8 + $0x100] sm:$0xff]
    %v2340 = vld [vmem:[#allocation8 + $0x108] sm:$0xff]
    %v2341 = vld [vmem:[#allocation8 + $0x110] sm:$0xff]
    %v2342 = vld [vmem:[#allocation8 + $0x118] sm:$0xff]
    %v2343 = vld [vmem:[#allocation8 + $0x120] sm:$0xff]
    %v2344 = vld [vmem:[#allocation8 + $0x128] sm:$0xff]
    %v2345 = vld [vmem:[#allocation8 + $0x130] sm:$0xff]
    %v2346 = vld [vmem:[#allocation8 + $0x138] sm:$0xff]
    %v2347 = vld [vmem:[#allocation8 + $0x140] sm:$0xff]
    %v2348 = vld [vmem:[#allocation8 + $0x148] sm:$0xff]
    %v2349 = vld [vmem:[#allocation8 + $0x150] sm:$0xff]
    %v2350 = vld [vmem:[#allocation8 + $0x158] sm:$0xff]
    %v2351 = vld [vmem:[#allocation8 + $0x160] sm:$0xff]
    %v2352 = vld [vmem:[#allocation8 + $0x168] sm:$0xff]
    %v2353 = vld [vmem:[#allocation8 + $0x170] sm:$0xff]
    %v2354 = vld [vmem:[#allocation8 + $0x178] sm:$0xff]
    %v2355 = vld [vmem:[#allocation8 + $0x180] sm:$0xff]
    %v2356 = vld [vmem:[#allocation8 + $0x188] sm:$0xff]
    %v2357 = vld [vmem:[#allocation8 + $0x190] sm:$0xff]
    %v2358 = vld [vmem:[#allocation8 + $0x198] sm:$0xff]
    %v2359 = vld [vmem:[#allocation8 + $0x1a0] sm:$0xff]
    %v2360 = vld [vmem:[#allocation8 + $0x1a8] sm:$0xff]
    %v2361 = vld [vmem:[#allocation8 + $0x1b0] sm:$0xff]
    %v2362 = vld [vmem:[#allocation8 + $0x1b8] sm:$0xff]
    %v2363 = vld [vmem:[#allocation8 + $0x1c0] sm:$0xff]
    %v2364 = vld [vmem:[#allocation8 + $0x1c8] sm:$0xff]
    %v2365 = vld [vmem:[#allocation8 + $0x1d0] sm:$0xff]
    %v2366 = vld [vmem:[#allocation8 + $0x1d8] sm:$0xff]
    %v2367 = vld [vmem:[#allocation8 + $0x1e0] sm:$0xff]
    %v2368 = vld [vmem:[#allocation8 + $0x1e8] sm:$0xff]
    %v2369 = vld [vmem:[#allocation8 + $0x1f0] sm:$0xff]
    %v2370 = vld [vmem:[#allocation8 + $0x1f8] sm:$0xff]
    %v2371 = vld [vmem:[%s6] sm:$0xf]
    %v2373 = vlaneseq
    %v2374 = vshrl.u32 %v2373, 7
    %v2375 = vsub.s32 0, %v2374
    %v2376 = vrot.slane %v2371, %v2375
    %v2377 = vlaneseq
    %v2378 = vshrl.u32 %v2377, 7
    %v2379 = vsub.s32 1, %v2378
    %v2380 = vrot.slane %v2371, %v2379
    %v2381 = vlaneseq
    %v2382 = vshrl.u32 %v2381, 7
    %v2383 = vsub.s32 2, %v2382
    %v2384 = vrot.slane %v2371, %v2383
    %v2385 = vlaneseq
    %v2386 = vshrl.u32 %v2385, 7
    %v2387 = vsub.s32 3, %v2386
    %v2388 = vrot.slane %v2371, %v2387
    %2393 = vmatprep.subr.mxu0 %v2308
    %2394 = vmatpush1.msra.mxu0 %v2307
    %2395 = vmatprep.subr.mxu0 %v2312
    %2396 = vmatpush1.msra.mxu0 %v2311
    %2397 = vmatprep.subr.mxu0 %v2316
    %2398 = vmatpush1.msra.mxu0 %v2315
    %2399 = vmatprep.subr.mxu0 %v2320
    %2400 = vmatpush1.msra.mxu0 %v2319
    %2401 = vmatprep.subr.mxu0 %v2324
    %2402 = vmatpush1.msra.mxu0 %v2323
    %2403 = vmatprep.subr.mxu0 %v2328
    %2404 = vmatpush1.msra.mxu0 %v2327
    %2405 = vmatprep.subr.mxu0 %v2332
    %2406 = vmatpush1.msra.mxu0 %v2331
    %2407 = vmatprep.subr.mxu0 %v2336
    %2408 = vmatpush1.msra.mxu0 %v2335
    %2409 = vmatprep.subr.mxu0 %v2340
    %2410 = vmatpush1.msra.mxu0 %v2339
    %2411 = vmatprep.subr.mxu0 %v2344
    %2412 = vmatpush1.msra.mxu0 %v2343
    %2413 = vmatprep.subr.mxu0 %v2348
    %2414 = vmatpush1.msra.mxu0 %v2347
    %2415 = vmatprep.subr.mxu0 %v2352
    %2416 = vmatpush1.msra.mxu0 %v2351
    %2417 = vmatprep.subr.mxu0 %v2356
    %2418 = vmatpush1.msra.mxu0 %v2355
    %2419 = vmatprep.subr.mxu0 %v2360
    %2420 = vmatpush1.msra.mxu0 %v2359
    %2421 = vmatprep.subr.mxu0 %v2364
    %2422 = vmatpush1.msra.mxu0 %v2363
    %2423 = vmatprep.subr.mxu0 %v2368
    %2424 = vmatpush1.msra.mxu0 %v2367
    %2425 = vmatprep.subr.mxu0 0.0
    %2426 = vmatpush1.msra.mxu0 0.0
    %2427 = vmatprep.subr.mxu0 0.0
    %2428 = vmatpush1.msra.mxu0 0.0
    %2429 = vmatprep.subr.mxu0 0.0
    %2430 = vmatpush1.msra.mxu0 0.0
    %2431 = vmatprep.subr.mxu0 0.0
    %2432 = vmatpush1.msra.mxu0 0.0
    %2433 = vmatprep.subr.mxu0 0.0
    %2434 = vmatpush1.msra.mxu0 0.0
    %2435 = vmatprep.subr.mxu0 0.0
    %2436 = vmatpush1.msra.mxu0 0.0
    %2437 = vmatprep.subr.mxu0 0.0
    %2438 = vmatpush1.msra.mxu0 0.0
    %2439 = vmatprep.subr.mxu0 0.0
    %2440 = vmatpush1.msra.mxu0 0.0
    %2441 = vmatprep.subr.mxu0 0.0
    %2442 = vmatpush1.msra.mxu0 0.0
    %2443 = vmatprep.subr.mxu0 0.0
    %2444 = vmatpush1.msra.mxu0 0.0
    %2445 = vmatprep.subr.mxu0 0.0
    %2446 = vmatpush1.msra.mxu0 0.0
    %2447 = vmatprep.subr.mxu0 0.0
    %2448 = vmatpush1.msra.mxu0 0.0
    %2449 = vmatprep.subr.mxu0 0.0
    %2450 = vmatpush1.msra.mxu0 0.0
    %2451 = vmatprep.subr.mxu0 0.0
    %2452 = vmatpush1.msra.mxu0 0.0
    %2453 = vmatprep.subr.mxu0 0.0
    %2454 = vmatpush1.msra.mxu0 0.0
    %2455 = vmatprep.subr.mxu0 0.0
    %2456 = vmatpush1.msra.mxu0 0.0
    %2457 = vmatprep.mubr.f32.mxu0 0.0
    %2458 = vmatmul.mubr.f32.gmra.mrb[0].mxu0 %v2299
    %v2459 = vpop.f32.mrb[0].mxu0
    %v2460 = vadd.f32 %v2376, %v2459
    %v2461 = vpop.f32.mrb[0].mxu0
    %v2462 = vadd.f32 %v2380, %v2461
    %2463 = vmatprep.mubr.f32.mxu0 0.0
    %2464 = vmatmul.mubr.f32.gmra.mrb[0].mxu0 %v2300
    %v2465 = vpop.f32.mrb[0].mxu0
    %v2466 = vadd.f32 %v2376, %v2465
    %v2467 = vpop.f32.mrb[0].mxu0
    %v2468 = vadd.f32 %v2380, %v2467
    %2469 = vmatprep.mubr.f32.mxu0 0.0
    %2470 = vmatmul.mubr.f32.gmra.mrb[0].mxu0 %v2301
    %v2471 = vpop.f32.mrb[0].mxu0
    %v2472 = vadd.f32 %v2376, %v2471
    %v2473 = vpop.f32.mrb[0].mxu0
    %v2474 = vadd.f32 %v2380, %v2473
    %2475 = vmatprep.mubr.f32.mxu0 0.0
    %2476 = vmatmul.mubr.f32.gmra.mrb[0].mxu0 %v2302
    %v2477 = vpop.f32.mrb[0].mxu0
    %v2478 = vadd.f32 %v2376, %v2477
    %v2479 = vpop.f32.mrb[0].mxu0
    %v2480 = vadd.f32 %v2380, %v2479
    %2481 = vmatprep.mubr.f32.mxu0 0.0
    %2482 = vmatmul.mubr.f32.gmra.mrb[0].mxu0 %v2303
    %v2483 = vpop.f32.mrb[0].mxu0
    %v2484 = vadd.f32 %v2376, %v2483
    %v2485 = vpop.f32.mrb[0].mxu0
    %v2486 = vadd.f32 %v2380, %v2485
    %2487 = vmatprep.mubr.f32.mxu0 0.0
    %2488 = vmatmul.mubr.f32.gmra.mrb[0].mxu0 %v2304
    %v2489 = vpop.f32.mrb[0].mxu0
    %v2490 = vadd.f32 %v2376, %v2489
    %v2491 = vpop.f32.mrb[0].mxu0
    %v2492 = vadd.f32 %v2380, %v2491
    %2493 = vmatprep.mubr.f32.mxu0 0.0
    %2494 = vmatmul.mubr.f32.gmra.mrb[0].mxu0 %v2305
    %v2495 = vpop.f32.mrb[0].mxu0
    %v2496 = vadd.f32 %v2376, %v2495
    %v2497 = vpop.f32.mrb[0].mxu0
    %v2498 = vadd.f32 %v2380, %v2497
    %2499 = vmatprep.mubr.f32.mxu0 0.0
    %2500 = vmatmul.mubr.f32.gmra.mrb[0].mxu0 %v2306
    %v2501 = vpop.f32.mrb[0].mxu0
    %v2502 = vadd.f32 %v2376, %v2501
    %v2503 = vpop.f32.mrb[0].mxu0
    %v2504 = vadd.f32 %v2380, %v2503
    %2505 = vdwg.mxu0
    %2506 = vmatprep.subr.mxu0 %v2310
    %2507 = vmatpush1.msra.mxu0 %v2309
    %2508 = vmatprep.subr.mxu0 %v2314
    %2509 = vmatpush1.msra.mxu0 %v2313
    %2510 = vmatprep.subr.mxu0 %v2318
    %2511 = vmatpush1.msra.mxu0 %v2317
    %2512 = vmatprep.subr.mxu0 %v2322
    %2513 = vmatpush1.msra.mxu0 %v2321
    %2514 = vmatprep.subr.mxu0 %v2326
    %2515 = vmatpush1.msra.mxu0 %v2325
    %2516 = vmatprep.subr.mxu0 %v2330
    %2517 = vmatpush1.msra.mxu0 %v2329
    %2518 = vmatprep.subr.mxu0 %v2334
    %2519 = vmatpush1.msra.mxu0 %v2333
    %2520 = vmatprep.subr.mxu0 %v2338
    %2521 = vmatpush1.msra.mxu0 %v2337
    %2522 = vmatprep.subr.mxu0 %v2342
    %2523 = vmatpush1.msra.mxu0 %v2341
    %2524 = vmatprep.subr.mxu0 %v2346
    %2525 = vmatpush1.msra.mxu0 %v2345
    %2526 = vmatprep.subr.mxu0 %v2350
    %2527 = vmatpush1.msra.mxu0 %v2349
    %2528 = vmatprep.subr.mxu0 %v2354
    %2529 = vmatpush1.msra.mxu0 %v2353
    %2530 = vmatprep.subr.mxu0 %v2358
    %2531 = vmatpush1.msra.mxu0 %v2357
    %2532 = vmatprep.subr.mxu0 %v2362
    %2533 = vmatpush1.msra.mxu0 %v2361
    %2534 = vmatprep.subr.mxu0 %v2366
    %2535 = vmatpush1.msra.mxu0 %v2365
    %2536 = vmatprep.subr.mxu0 %v2370
    %2537 = vmatpush1.msra.mxu0 %v2369
    %2538 = vmatprep.subr.mxu0 0.0
    %2539 = vmatpush1.msra.mxu0 0.0
    %2540 = vmatprep.subr.mxu0 0.0
    %2541 = vmatpush1.msra.mxu0 0.0
    %2542 = vmatprep.subr.mxu0 0.0
    %2543 = vmatpush1.msra.mxu0 0.0
    %2544 = vmatprep.subr.mxu0 0.0
    %2545 = vmatpush1.msra.mxu0 0.0
    %2546 = vmatprep.subr.mxu0 0.0
    %2547 = vmatpush1.msra.mxu0 0.0
    %2548 = vmatprep.subr.mxu0 0.0
    %2549 = vmatpush1.msra.mxu0 0.0
    %2550 = vmatprep.subr.mxu0 0.0
    %2551 = vmatpush1.msra.mxu0 0.0
    %2552 = vmatprep.subr.mxu0 0.0
    %2553 = vmatpush1.msra.mxu0 0.0
    %2554 = vmatprep.subr.mxu0 0.0
    %2555 = vmatpush1.msra.mxu0 0.0
    %2556 = vmatprep.subr.mxu0 0.0
    %2557 = vmatpush1.msra.mxu0 0.0
    %2558 = vmatprep.subr.mxu0 0.0
    %2559 = vmatpush1.msra.mxu0 0.0
    %2560 = vmatprep.subr.mxu0 0.0
    %2561 = vmatpush1.msra.mxu0 0.0
    %2562 = vmatprep.subr.mxu0 0.0
    %2563 = vmatpush1.msra.mxu0 0.0
    %2564 = vmatprep.subr.mxu0 0.0
    %2565 = vmatpush1.msra.mxu0 0.0
    %2566 = vmatprep.subr.mxu0 0.0
    %2567 = vmatpush1.msra.mxu0 0.0
    %2568 = vmatprep.subr.mxu0 0.0
    %2569 = vmatpush1.msra.mxu0 0.0
    %2570 = vmatprep.mubr.f32.mxu0 0.0
    %2571 = vmatmul.mubr.f32.gmra.mrb[0].mxu0 %v2299
    %v2572 = vpop.f32.mrb[0].mxu0
    %v2573 = vadd.f32 %v2384, %v2572
    %v2574 = vpop.f32.mrb[0].mxu0
    %v2575 = vadd.f32 %v2388, %v2574
    %2576 = vmatprep.mubr.f32.mxu0 0.0
    %2577 = vmatmul.mubr.f32.gmra.mrb[0].mxu0 %v2300
    %v2578 = vpop.f32.mrb[0].mxu0
    %v2579 = vadd.f32 %v2384, %v2578
    %v2580 = vpop.f32.mrb[0].mxu0
    %v2581 = vadd.f32 %v2388, %v2580
    %2582 = vmatprep.mubr.f32.mxu0 0.0
    %2583 = vmatmul.mubr.f32.gmra.mrb[0].mxu0 %v2301
    %v2584 = vpop.f32.mrb[0].mxu0
    %v2585 = vadd.f32 %v2384, %v2584
    %v2586 = vpop.f32.mrb[0].mxu0
    %v2587 = vadd.f32 %v2388, %v2586
    %2588 = vmatprep.mubr.f32.mxu0 0.0
    %2589 = vmatmul.mubr.f32.gmra.mrb[0].mxu0 %v2302
    %v2590 = vpop.f32.mrb[0].mxu0
    %v2591 = vadd.f32 %v2384, %v2590
    %v2592 = vpop.f32.mrb[0].mxu0
    %v2593 = vadd.f32 %v2388, %v2592
    %2594 = vmatprep.mubr.f32.mxu0 0.0
    %2595 = vmatmul.mubr.f32.gmra.mrb[0].mxu0 %v2303
    %v2596 = vpop.f32.mrb[0].mxu0
    %v2597 = vadd.f32 %v2384, %v2596
    %v2598 = vpop.f32.mrb[0].mxu0
    %v2599 = vadd.f32 %v2388, %v2598
    %2600 = vmatprep.mubr.f32.mxu0 0.0
    %2601 = vmatmul.mubr.f32.gmra.mrb[0].mxu0 %v2304
    %v2602 = vpop.f32.mrb[0].mxu0
    %v2603 = vadd.f32 %v2384, %v2602
    %v2604 = vpop.f32.mrb[0].mxu0
    %v2605 = vadd.f32 %v2388, %v2604
    %2606 = vmatprep.mubr.f32.mxu0 0.0
    %2607 = vmatmul.mubr.f32.gmra.mrb[0].mxu0 %v2305
    %v2608 = vpop.f32.mrb[0].mxu0
    %v2609 = vadd.f32 %v2384, %v2608
    %v2610 = vpop.f32.mrb[0].mxu0
    %v2611 = vadd.f32 %v2388, %v2610
    %2612 = vmatprep.mubr.f32.mxu0 0.0
    %2613 = vmatmul.mubr.f32.gmra.mrb[0].mxu0 %v2306
    %v2614 = vpop.f32.mrb[0].mxu0
    %v2615 = vadd.f32 %v2384, %v2614
    %v2616 = vpop.f32.mrb[0].mxu0
    %v2617 = vadd.f32 %v2388, %v2616
    %2618 = vdwg.mxu0
    %2619 = vst [vmem:[#allocation2] sm:$0xff] %v2460
    %2620 = vst [vmem:[#allocation2 + $0x8] sm:$0xff] %v2462
    %2621 = vst [vmem:[#allocation2 + $0x10] sm:$0xff] %v2573
    %2622 = vst [vmem:[#allocation2 + $0x18] sm:$0xff] %v2575
    %2623 = vst [vmem:[#allocation2 + $0x20] sm:$0xff] %v2466
    %2624 = vst [vmem:[#allocation2 + $0x28] sm:$0xff] %v2468
    %2625 = vst [vmem:[#allocation2 + $0x30] sm:$0xff] %v2579
    %2626 = vst [vmem:[#allocation2 + $0x38] sm:$0xff] %v2581
    %2627 = vst [vmem:[#allocation2 + $0x40] sm:$0xff] %v2472
    %2628 = vst [vmem:[#allocation2 + $0x48] sm:$0xff] %v2474
    %2629 = vst [vmem:[#allocation2 + $0x50] sm:$0xff] %v2585
    %2630 = vst [vmem:[#allocation2 + $0x58] sm:$0xff] %v2587
    %2631 = vst [vmem:[#allocation2 + $0x60] sm:$0xff] %v2478
    %2632 = vst [vmem:[#allocation2 + $0x68] sm:$0xff] %v2480
    %2633 = vst [vmem:[#allocation2 + $0x70] sm:$0xff] %v2591
    %2634 = vst [vmem:[#allocation2 + $0x78] sm:$0xff] %v2593
    %2635 = vst [vmem:[#allocation2 + $0x80] sm:$0xff] %v2484
    %2636 = vst [vmem:[#allocation2 + $0x88] sm:$0xff] %v2486
    %2637 = vst [vmem:[#allocation2 + $0x90] sm:$0xff] %v2597
    %2638 = vst [vmem:[#allocation2 + $0x98] sm:$0xff] %v2599
    %2639 = vst [vmem:[#allocation2 + $0xa0] sm:$0xff] %v2490
    %2640 = vst [vmem:[#allocation2 + $0xa8] sm:$0xff] %v2492
    %2641 = vst [vmem:[#allocation2 + $0xb0] sm:$0xff] %v2603
    %2642 = vst [vmem:[#allocation2 + $0xb8] sm:$0xff] %v2605
    %2643 = vst [vmem:[#allocation2 + $0xc0] sm:$0xff] %v2496
    %2644 = vst [vmem:[#allocation2 + $0xc8] sm:$0xff] %v2498
    %2645 = vst [vmem:[#allocation2 + $0xd0] sm:$0xff] %v2609
    %2646 = vst [vmem:[#allocation2 + $0xd8] sm:$0xff] %v2611
    %2647 = vst [vmem:[#allocation2 + $0xe0] sm:$0xff] %v2502
    %2648 = vst [vmem:[#allocation2 + $0xe8] sm:$0xff] %v2504
    %2649 = vst [vmem:[#allocation2 + $0xf0] sm:$0xff] %v2615
    %2650 = vst [vmem:[#allocation2 + $0xf8] sm:$0xff] %v2617
    %v2651 = vld [vmem:[#allocation2] sm:$0xff]
    %v2652 = vld [vmem:[#allocation2 + $0x8] sm:$0xff]
    %v2653 = vld [vmem:[#allocation2 + $0x10] sm:$0xff]
    %v2654 = vld [vmem:[#allocation2 + $0x18] sm:$0xff]
    %v2655 = vld [vmem:[#allocation9] sm:$0xff]
    %v2656 = vld [vmem:[#allocation9 + $0x8] sm:$0xff]
    %v2657 = vld [vmem:[#allocation9 + $0x10] sm:$0xff]
    %v2658 = vld [vmem:[#allocation9 + $0x18] sm:$0xff]
    %v2659 = vld [vmem:[#allocation9 + $0x20] sm:$0xff]
    %v2660 = vld [vmem:[#allocation9 + $0x28] sm:$0xff]
    %v2661 = vld [vmem:[#allocation9 + $0x30] sm:$0xff]
    %v2662 = vld [vmem:[#allocation9 + $0x38] sm:$0xff]
    %v2663 = vld [vmem:[#allocation9 + $0x40] sm:$0xff]
    %v2664 = vld [vmem:[#allocation9 + $0x48] sm:$0xff]
    %v2665 = vld [vmem:[#allocation9 + $0x50] sm:$0xff]
    %v2666 = vld [vmem:[#allocation9 + $0x58] sm:$0xff]
    %v2667 = vld [vmem:[#allocation9 + $0x60] sm:$0xff]
    %v2668 = vld [vmem:[#allocation9 + $0x68] sm:$0xff]
    %v2669 = vld [vmem:[#allocation9 + $0x70] sm:$0xff]
    %v2670 = vld [vmem:[#allocation9 + $0x78] sm:$0xff]
    %v2671 = vld [vmem:[#allocation9 + $0x80] sm:$0xff]
    %v2672 = vld [vmem:[#allocation9 + $0x88] sm:$0xff]
    %v2673 = vld [vmem:[#allocation9 + $0x90] sm:$0xff]
    %v2674 = vld [vmem:[#allocation9 + $0x98] sm:$0xff]
    %v2675 = vld [vmem:[#allocation9 + $0xa0] sm:$0xff]
    %v2676 = vld [vmem:[#allocation9 + $0xa8] sm:$0xff]
    %v2677 = vld [vmem:[#allocation9 + $0xb0] sm:$0xff]
    %v2678 = vld [vmem:[#allocation9 + $0xb8] sm:$0xff]
    %v2679 = vld [vmem:[#allocation9 + $0xc0] sm:$0xff]
    %v2680 = vld [vmem:[#allocation9 + $0xc8] sm:$0xff]
    %v2681 = vld [vmem:[#allocation9 + $0xd0] sm:$0xff]
    %v2682 = vld [vmem:[#allocation9 + $0xd8] sm:$0xff]
    %v2683 = vld [vmem:[#allocation9 + $0xe0] sm:$0xff]
    %v2684 = vld [vmem:[#allocation9 + $0xe8] sm:$0xff]
    %v2685 = vld [vmem:[#allocation9 + $0xf0] sm:$0xff]
    %v2686 = vld [vmem:[#allocation9 + $0xf8] sm:$0xff]
    %v2687 = vld [vmem:[#allocation9 + $0x100] sm:$0xff]
    %v2688 = vld [vmem:[#allocation9 + $0x108] sm:$0xff]
    %v2689 = vld [vmem:[#allocation9 + $0x110] sm:$0xff]
    %v2690 = vld [vmem:[#allocation9 + $0x118] sm:$0xff]
    %v2691 = vld [vmem:[#allocation9 + $0x120] sm:$0xff]
    %v2692 = vld [vmem:[#allocation9 + $0x128] sm:$0xff]
    %v2693 = vld [vmem:[#allocation9 + $0x130] sm:$0xff]
    %v2694 = vld [vmem:[#allocation9 + $0x138] sm:$0xff]
    %v2695 = vld [vmem:[#allocation9 + $0x140] sm:$0xff]
    %v2696 = vld [vmem:[#allocation9 + $0x148] sm:$0xff]
    %v2697 = vld [vmem:[#allocation9 + $0x150] sm:$0xff]
    %v2698 = vld [vmem:[#allocation9 + $0x158] sm:$0xff]
    %v2699 = vld [vmem:[#allocation9 + $0x160] sm:$0xff]
    %v2700 = vld [vmem:[#allocation9 + $0x168] sm:$0xff]
    %v2701 = vld [vmem:[#allocation9 + $0x170] sm:$0xff]
    %v2702 = vld [vmem:[#allocation9 + $0x178] sm:$0xff]
    %v2703 = vld [vmem:[#allocation9 + $0x180] sm:$0xff]
    %v2704 = vld [vmem:[#allocation9 + $0x188] sm:$0xff]
    %v2705 = vld [vmem:[#allocation9 + $0x190] sm:$0xff]
    %v2706 = vld [vmem:[#allocation9 + $0x198] sm:$0xff]
    %v2707 = vld [vmem:[#allocation9 + $0x1a0] sm:$0xff]
    %v2708 = vld [vmem:[#allocation9 + $0x1a8] sm:$0xff]
    %v2709 = vld [vmem:[#allocation9 + $0x1b0] sm:$0xff]
    %v2710 = vld [vmem:[#allocation9 + $0x1b8] sm:$0xff]
    %v2711 = vld [vmem:[#allocation9 + $0x1c0] sm:$0xff]
    %v2712 = vld [vmem:[#allocation9 + $0x1c8] sm:$0xff]
    %v2713 = vld [vmem:[#allocation9 + $0x1d0] sm:$0xff]
    %v2714 = vld [vmem:[#allocation9 + $0x1d8] sm:$0xff]
    %v2715 = vld [vmem:[#allocation9 + $0x1e0] sm:$0xff]
    %v2716 = vld [vmem:[#allocation9 + $0x1e8] sm:$0xff]
    %v2717 = vld [vmem:[#allocation9 + $0x1f0] sm:$0xff]
    %v2718 = vld [vmem:[#allocation9 + $0x1f8] sm:$0xff]
    %2719 = vmatprep.subr.mxu0 %v2656
    %2720 = vmatpush1.msra.mxu0 %v2655
    %2721 = vmatprep.subr.mxu0 %v2660
    %2722 = vmatpush1.msra.mxu0 %v2659
    %2723 = vmatprep.subr.mxu0 %v2664
    %2724 = vmatpush1.msra.mxu0 %v2663
    %2725 = vmatprep.subr.mxu0 %v2668
    %2726 = vmatpush1.msra.mxu0 %v2667
    %2727 = vmatprep.subr.mxu0 %v2672
    %2728 = vmatpush1.msra.mxu0 %v2671
    %2729 = vmatprep.subr.mxu0 %v2676
    %2730 = vmatpush1.msra.mxu0 %v2675
    %2731 = vmatprep.subr.mxu0 %v2680
    %2732 = vmatpush1.msra.mxu0 %v2679
    %2733 = vmatprep.subr.mxu0 %v2684
    %2734 = vmatpush1.msra.mxu0 %v2683
    %2735 = vmatprep.subr.mxu0 %v2688
    %2736 = vmatpush1.msra.mxu0 %v2687
    %2737 = vmatprep.subr.mxu0 %v2692
    %2738 = vmatpush1.msra.mxu0 %v2691
    %2739 = vmatprep.subr.mxu0 %v2696
    %2740 = vmatpush1.msra.mxu0 %v2695
    %2741 = vmatprep.subr.mxu0 %v2700
    %2742 = vmatpush1.msra.mxu0 %v2699
    %2743 = vmatprep.subr.mxu0 %v2704
    %2744 = vmatpush1.msra.mxu0 %v2703
    %2745 = vmatprep.subr.mxu0 %v2708
    %2746 = vmatpush1.msra.mxu0 %v2707
    %2747 = vmatprep.subr.mxu0 %v2712
    %2748 = vmatpush1.msra.mxu0 %v2711
    %2749 = vmatprep.subr.mxu0 %v2716
    %2750 = vmatpush1.msra.mxu0 %v2715
    %2751 = vmatprep.subr.mxu0 0.0
    %2752 = vmatpush1.msra.mxu0 0.0
    %2753 = vmatprep.subr.mxu0 0.0
    %2754 = vmatpush1.msra.mxu0 0.0
    %2755 = vmatprep.subr.mxu0 0.0
    %2756 = vmatpush1.msra.mxu0 0.0
    %2757 = vmatprep.subr.mxu0 0.0
    %2758 = vmatpush1.msra.mxu0 0.0
    %2759 = vmatprep.subr.mxu0 0.0
    %2760 = vmatpush1.msra.mxu0 0.0
    %2761 = vmatprep.subr.mxu0 0.0
    %2762 = vmatpush1.msra.mxu0 0.0
    %2763 = vmatprep.subr.mxu0 0.0
    %2764 = vmatpush1.msra.mxu0 0.0
    %2765 = vmatprep.subr.mxu0 0.0
    %2766 = vmatpush1.msra.mxu0 0.0
    %2767 = vmatprep.subr.mxu0 0.0
    %2768 = vmatpush1.msra.mxu0 0.0
    %2769 = vmatprep.subr.mxu0 0.0
    %2770 = vmatpush1.msra.mxu0 0.0
    %2771 = vmatprep.subr.mxu0 0.0
    %2772 = vmatpush1.msra.mxu0 0.0
    %2773 = vmatprep.subr.mxu0 0.0
    %2774 = vmatpush1.msra.mxu0 0.0
    %2775 = vmatprep.subr.mxu0 0.0
    %2776 = vmatpush1.msra.mxu0 0.0
    %2777 = vmatprep.subr.mxu0 0.0
    %2778 = vmatpush1.msra.mxu0 0.0
    %2779 = vmatprep.subr.mxu0 0.0
    %2780 = vmatpush1.msra.mxu0 0.0
    %2781 = vmatprep.subr.mxu0 0.0
    %2782 = vmatpush1.msra.mxu0 0.0
    %2783 = vmatprep.mubr.f32.mxu0 0.0
    %2784 = vmatmul.mubr.f32.gmra.mrb[0].mxu0 0.0
    %v2785 = vpop.f32.mrb[0].mxu0
    %v2786 = vadd.f32 0.0, %v2785
    %v2787 = vpop.f32.mrb[0].mxu0
    %v2788 = vadd.f32 0.0, %v2787
    %2789 = vdwg.mxu0
    %2790 = vmatprep.subr.mxu0 %v2658
    %2791 = vmatpush1.msra.mxu0 %v2657
    %2792 = vmatprep.subr.mxu0 %v2662
    %2793 = vmatpush1.msra.mxu0 %v2661
    %2794 = vmatprep.subr.mxu0 %v2666
    %2795 = vmatpush1.msra.mxu0 %v2665
    %2796 = vmatprep.subr.mxu0 %v2670
    %2797 = vmatpush1.msra.mxu0 %v2669
    %2798 = vmatprep.subr.mxu0 %v2674
    %2799 = vmatpush1.msra.mxu0 %v2673
    %2800 = vmatprep.subr.mxu0 %v2678
    %2801 = vmatpush1.msra.mxu0 %v2677
    %2802 = vmatprep.subr.mxu0 %v2682
    %2803 = vmatpush1.msra.mxu0 %v2681
    %2804 = vmatprep.subr.mxu0 %v2686
    %2805 = vmatpush1.msra.mxu0 %v2685
    %2806 = vmatprep.subr.mxu0 %v2690
    %2807 = vmatpush1.msra.mxu0 %v2689
    %2808 = vmatprep.subr.mxu0 %v2694
    %2809 = vmatpush1.msra.mxu0 %v2693
    %2810 = vmatprep.subr.mxu0 %v2698
    %2811 = vmatpush1.msra.mxu0 %v2697
    %2812 = vmatprep.subr.mxu0 %v2702
    %2813 = vmatpush1.msra.mxu0 %v2701
    %2814 = vmatprep.subr.mxu0 %v2706
    %2815 = vmatpush1.msra.mxu0 %v2705
    %2816 = vmatprep.subr.mxu0 %v2710
    %2817 = vmatpush1.msra.mxu0 %v2709
    %2818 = vmatprep.subr.mxu0 %v2714
    %2819 = vmatpush1.msra.mxu0 %v2713
    %2820 = vmatprep.subr.mxu0 %v2718
    %2821 = vmatpush1.msra.mxu0 %v2717
    %2822 = vmatprep.subr.mxu0 0.0
    %2823 = vmatpush1.msra.mxu0 0.0
    %2824 = vmatprep.subr.mxu0 0.0
    %2825 = vmatpush1.msra.mxu0 0.0
    %2826 = vmatprep.subr.mxu0 0.0
    %2827 = vmatpush1.msra.mxu0 0.0
    %2828 = vmatprep.subr.mxu0 0.0
    %2829 = vmatpush1.msra.mxu0 0.0
    %2830 = vmatprep.subr.mxu0 0.0
    %2831 = vmatpush1.msra.mxu0 0.0
    %2832 = vmatprep.subr.mxu0 0.0
    %2833 = vmatpush1.msra.mxu0 0.0
    %2834 = vmatprep.subr.mxu0 0.0
    %2835 = vmatpush1.msra.mxu0 0.0
    %2836 = vmatprep.subr.mxu0 0.0
    %2837 = vmatpush1.msra.mxu0 0.0
    %2838 = vmatprep.subr.mxu0 0.0
    %2839 = vmatpush1.msra.mxu0 0.0
    %2840 = vmatprep.subr.mxu0 0.0
    %2841 = vmatpush1.msra.mxu0 0.0
    %2842 = vmatprep.subr.mxu0 0.0
    %2843 = vmatpush1.msra.mxu0 0.0
    %2844 = vmatprep.subr.mxu0 0.0
    %2845 = vmatpush1.msra.mxu0 0.0
    %2846 = vmatprep.subr.mxu0 0.0
    %2847 = vmatpush1.msra.mxu0 0.0
    %2848 = vmatprep.subr.mxu0 0.0
    %2849 = vmatpush1.msra.mxu0 0.0
    %2850 = vmatprep.subr.mxu0 0.0
    %2851 = vmatpush1.msra.mxu0 0.0
    %2852 = vmatprep.subr.mxu0 0.0
    %2853 = vmatpush1.msra.mxu0 0.0
    %2854 = vmatprep.mubr.f32.mxu0 0.0
    %2855 = vmatmul.mubr.f32.gmra.mrb[0].mxu0 0.0
    %v2856 = vpop.f32.mrb[0].mxu0
    %v2857 = vadd.f32 0.0, %v2856
    %v2858 = vpop.f32.mrb[0].mxu0
    %v2859 = vadd.f32 0.0, %v2858
    %2860 = vdwg.mxu0
    %v2861 = vadd.f32 %v2651, %v2786
    %v2862 = vadd.f32 %v2652, %v2788
    %v2863 = vadd.f32 %v2653, %v2857
    %v2864 = vadd.f32 %v2654, %v2859
    %v2865 = vmul.f32 %v2861, 0.5
    %v2866 = vtanh.pop %v2865
    %v2867 = vmul.f32 %v2866, 0.5
    %v2868 = vadd.f32 %v2867, 0.5
    %v2869 = vmul.f32 %v2862, 0.5
    %v2870 = vtanh.pop %v2869
    %v2871 = vmul.f32 %v2870, 0.5
    %v2872 = vadd.f32 %v2871, 0.5
    %v2873 = vtanh.pop %v2863
    %v2874 = vmul.f32 %v2864, 0.5
    %v2875 = vtanh.pop %v2874
    %v2876 = vmul.f32 %v2875, 0.5
    %v2877 = vadd.f32 %v2876, 0.5
    %v2878 = vmul.f32 %v2872, 0.0
    %v2879 = vmul.f32 %v2868, %v2873
    %v2880 = vadd.f32 %v2878, %v2879
    %v2881 = vtanh.pop %v2880
    %v2882 = vmul.f32 %v2877, %v2881
    %2883 = vst [vmem:[%s7] sm:$0xff] %v2882
    %v2884 = vld [vmem:[#allocation2 + $0x20] sm:$0xff]
    %v2885 = vld [vmem:[#allocation2 + $0x28] sm:$0xff]
    %v2886 = vld [vmem:[#allocation2 + $0x30] sm:$0xff]
    %v2887 = vld [vmem:[#allocation2 + $0x38] sm:$0xff]
    %v2888 = vld [vmem:[#allocation9] sm:$0xff]
    %v2889 = vld [vmem:[#allocation9 + $0x8] sm:$0xff]
    %v2890 = vld [vmem:[#allocation9 + $0x10] sm:$0xff]
    %v2891 = vld [vmem:[#allocation9 + $0x18] sm:$0xff]
    %v2892 = vld [vmem:[#allocation9 + $0x20] sm:$0xff]
    %v2893 = vld [vmem:[#allocation9 + $0x28] sm:$0xff]
    %v2894 = vld [vmem:[#allocation9 + $0x30] sm:$0xff]
    %v2895 = vld [vmem:[#allocation9 + $0x38] sm:$0xff]
    %v2896 = vld [vmem:[#allocation9 + $0x40] sm:$0xff]
    %v2897 = vld [vmem:[#allocation9 + $0x48] sm:$0xff]
    %v2898 = vld [vmem:[#allocation9 + $0x50] sm:$0xff]
    %v2899 = vld [vmem:[#allocation9 + $0x58] sm:$0xff]
    %v2900 = vld [vmem:[#allocation9 + $0x60] sm:$0xff]
    %v2901 = vld [vmem:[#allocation9 + $0x68] sm:$0xff]
    %v2902 = vld [vmem:[#allocation9 + $0x70] sm:$0xff]
    %v2903 = vld [vmem:[#allocation9 + $0x78] sm:$0xff]
    %v2904 = vld [vmem:[#allocation9 + $0x80] sm:$0xff]
    %v2905 = vld [vmem:[#allocation9 + $0x88] sm:$0xff]
    %v2906 = vld [vmem:[#allocation9 + $0x90] sm:$0xff]
    %v2907 = vld [vmem:[#allocation9 + $0x98] sm:$0xff]
    %v2908 = vld [vmem:[#allocation9 + $0xa0] sm:$0xff]
    %v2909 = vld [vmem:[#allocation9 + $0xa8] sm:$0xff]
    %v2910 = vld [vmem:[#allocation9 + $0xb0] sm:$0xff]
    %v2911 = vld [vmem:[#allocation9 + $0xb8] sm:$0xff]
    %v2912 = vld [vmem:[#allocation9 + $0xc0] sm:$0xff]
    %v2913 = vld [vmem:[#allocation9 + $0xc8] sm:$0xff]
    %v2914 = vld [vmem:[#allocation9 + $0xd0] sm:$0xff]
    %v2915 = vld [vmem:[#allocation9 + $0xd8] sm:$0xff]
    %v2916 = vld [vmem:[#allocation9 + $0xe0] sm:$0xff]
    %v2917 = vld [vmem:[#allocation9 + $0xe8] sm:$0xff]
    %v2918 = vld [vmem:[#allocation9 + $0xf0] sm:$0xff]
    %v2919 = vld [vmem:[#allocation9 + $0xf8] sm:$0xff]
    %v2920 = vld [vmem:[#allocation9 + $0x100] sm:$0xff]
    %v2921 = vld [vmem:[#allocation9 + $0x108] sm:$0xff]
    %v2922 = vld [vmem:[#allocation9 + $0x110] sm:$0xff]
    %v2923 = vld [vmem:[#allocation9 + $0x118] sm:$0xff]
    %v2924 = vld [vmem:[#allocation9 + $0x120] sm:$0xff]
    %v2925 = vld [vmem:[#allocation9 + $0x128] sm:$0xff]
    %v2926 = vld [vmem:[#allocation9 + $0x130] sm:$0xff]
    %v2927 = vld [vmem:[#allocation9 + $0x138] sm:$0xff]
    %v2928 = vld [vmem:[#allocation9 + $0x140] sm:$0xff]
    %v2929 = vld [vmem:[#allocation9 + $0x148] sm:$0xff]
    %v2930 = vld [vmem:[#allocation9 + $0x150] sm:$0xff]
    %v2931 = vld [vmem:[#allocation9 + $0x158] sm:$0xff]
    %v2932 = vld [vmem:[#allocation9 + $0x160] sm:$0xff]
    %v2933 = vld [vmem:[#allocation9 + $0x168] sm:$0xff]
    %v2934 = vld [vmem:[#allocation9 + $0x170] sm:$0xff]
    %v2935 = vld [vmem:[#allocation9 + $0x178] sm:$0xff]
    %v2936 = vld [vmem:[#allocation9 + $0x180] sm:$0xff]
    %v2937 = vld [vmem:[#allocation9 + $0x188] sm:$0xff]
    %v2938 = vld [vmem:[#allocation9 + $0x190] sm:$0xff]
    %v2939 = vld [vmem:[#allocation9 + $0x198] sm:$0xff]
    %v2940 = vld [vmem:[#allocation9 + $0x1a0] sm:$0xff]
    %v2941 = vld [vmem:[#allocation9 + $0x1a8] sm:$0xff]
    %v2942 = vld [vmem:[#allocation9 + $0x1b0] sm:$0xff]
    %v2943 = vld [vmem:[#allocation9 + $0x1b8] sm:$0xff]
    %v2944 = vld [vmem:[#allocation9 + $0x1c0] sm:$0xff]
    %v2945 = vld [vmem:[#allocation9 + $0x1c8] sm:$0xff]
    %v2946 = vld [vmem:[#allocation9 + $0x1d0] sm:$0xff]
    %v2947 = vld [vmem:[#allocation9 + $0x1d8] sm:$0xff]
    %v2948 = vld [vmem:[#allocation9 + $0x1e0] sm:$0xff]
    %v2949 = vld [vmem:[#allocation9 + $0x1e8] sm:$0xff]
    %v2950 = vld [vmem:[#allocation9 + $0x1f0] sm:$0xff]
    %v2951 = vld [vmem:[#allocation9 + $0x1f8] sm:$0xff]
    %2952 = vmatprep.subr.mxu0 %v2889
    %2953 = vmatpush1.msra.mxu0 %v2888
    %2954 = vmatprep.subr.mxu0 %v2893
    %2955 = vmatpush1.msra.mxu0 %v2892
    %2956 = vmatprep.subr.mxu0 %v2897
    %2957 = vmatpush1.msra.mxu0 %v2896
    %2958 = vmatprep.subr.mxu0 %v2901
    %2959 = vmatpush1.msra.mxu0 %v2900
    %2960 = vmatprep.subr.mxu0 %v2905
    %2961 = vmatpush1.msra.mxu0 %v2904
    %2962 = vmatprep.subr.mxu0 %v2909
    %2963 = vmatpush1.msra.mxu0 %v2908
    %2964 = vmatprep.subr.mxu0 %v2913
    %2965 = vmatpush1.msra.mxu0 %v2912
    %2966 = vmatprep.subr.mxu0 %v2917
    %2967 = vmatpush1.msra.mxu0 %v2916
    %2968 = vmatprep.subr.mxu0 %v2921
    %2969 = vmatpush1.msra.mxu0 %v2920
    %2970 = vmatprep.subr.mxu0 %v2925
    %2971 = vmatpush1.msra.mxu0 %v2924
    %2972 = vmatprep.subr.mxu0 %v2929
    %2973 = vmatpush1.msra.mxu0 %v2928
    %2974 = vmatprep.subr.mxu0 %v2933
    %2975 = vmatpush1.msra.mxu0 %v2932
    %2976 = vmatprep.subr.mxu0 %v2937
    %2977 = vmatpush1.msra.mxu0 %v2936
    %2978 = vmatprep.subr.mxu0 %v2941
    %2979 = vmatpush1.msra.mxu0 %v2940
    %2980 = vmatprep.subr.mxu0 %v2945
    %2981 = vmatpush1.msra.mxu0 %v2944
    %2982 = vmatprep.subr.mxu0 %v2949
    %2983 = vmatpush1.msra.mxu0 %v2948
    %2984 = vmatprep.subr.mxu0 0.0
    %2985 = vmatpush1.msra.mxu0 0.0
    %2986 = vmatprep.subr.mxu0 0.0
    %2987 = vmatpush1.msra.mxu0 0.0
    %2988 = vmatprep.subr.mxu0 0.0
    %2989 = vmatpush1.msra.mxu0 0.0
    %2990 = vmatprep.subr.mxu0 0.0
    %2991 = vmatpush1.msra.mxu0 0.0
    %2992 = vmatprep.subr.mxu0 0.0
    %2993 = vmatpush1.msra.mxu0 0.0
    %2994 = vmatprep.subr.mxu0 0.0
    %2995 = vmatpush1.msra.mxu0 0.0
    %2996 = vmatprep.subr.mxu0 0.0
    %2997 = vmatpush1.msra.mxu0 0.0
    %2998 = vmatprep.subr.mxu0 0.0
    %2999 = vmatpush1.msra.mxu0 0.0
    %3000 = vmatprep.subr.mxu0 0.0
    %3001 = vmatpush1.msra.mxu0 0.0
    %3002 = vmatprep.subr.mxu0 0.0
    %3003 = vmatpush1.msra.mxu0 0.0
    %3004 = vmatprep.subr.mxu0 0.0
    %3005 = vmatpush1.msra.mxu0 0.0
    %3006 = vmatprep.subr.mxu0 0.0
    %3007 = vmatpush1.msra.mxu0 0.0
    %3008 = vmatprep.subr.mxu0 0.0
    %3009 = vmatpush1.msra.mxu0 0.0
    %3010 = vmatprep.subr.mxu0 0.0
    %3011 = vmatpush1.msra.mxu0 0.0
    %3012 = vmatprep.subr.mxu0 0.0
    %3013 = vmatpush1.msra.mxu0 0.0
    %3014 = vmatprep.subr.mxu0 0.0
    %3015 = vmatpush1.msra.mxu0 0.0
    %3016 = vmatprep.mubr.f32.mxu0 0.0
    %3017 = vmatmul.mubr.f32.gmra.mrb[0].mxu0 %v2882
    %v3018 = vpop.f32.mrb[0].mxu0
    %v3019 = vadd.f32 0.0, %v3018
    %v3020 = vpop.f32.mrb[0].mxu0
    %v3021 = vadd.f32 0.0, %v3020
    %3022 = vdwg.mxu0
    %3023 = vmatprep.subr.mxu0 %v2891
    %3024 = vmatpush1.msra.mxu0 %v2890
    %3025 = vmatprep.subr.mxu0 %v2895
    %3026 = vmatpush1.msra.mxu0 %v2894
    %3027 = vmatprep.subr.mxu0 %v2899
    %3028 = vmatpush1.msra.mxu0 %v2898
    %3029 = vmatprep.subr.mxu0 %v2903
    %3030 = vmatpush1.msra.mxu0 %v2902
    %3031 = vmatprep.subr.mxu0 %v2907
    %3032 = vmatpush1.msra.mxu0 %v2906
    %3033 = vmatprep.subr.mxu0 %v2911
    %3034 = vmatpush1.msra.mxu0 %v2910
    %3035 = vmatprep.subr.mxu0 %v2915
    %3036 = vmatpush1.msra.mxu0 %v2914
    %3037 = vmatprep.subr.mxu0 %v2919
    %3038 = vmatpush1.msra.mxu0 %v2918
    %3039 = vmatprep.subr.mxu0 %v2923
    %3040 = vmatpush1.msra.mxu0 %v2922
    %3041 = vmatprep.subr.mxu0 %v2927
    %3042 = vmatpush1.msra.mxu0 %v2926
    %3043 = vmatprep.subr.mxu0 %v2931
    %3044 = vmatpush1.msra.mxu0 %v2930
    %3045 = vmatprep.subr.mxu0 %v2935
    %3046 = vmatpush1.msra.mxu0 %v2934
    %3047 = vmatprep.subr.mxu0 %v2939
    %3048 = vmatpush1.msra.mxu0 %v2938
    %3049 = vmatprep.subr.mxu0 %v2943
    %3050 = vmatpush1.msra.mxu0 %v2942
    %3051 = vmatprep.subr.mxu0 %v2947
    %3052 = vmatpush1.msra.mxu0 %v2946
    %3053 = vmatprep.subr.mxu0 %v2951
    %3054 = vmatpush1.msra.mxu0 %v2950
    %3055 = vmatprep.subr.mxu0 0.0
    %3056 = vmatpush1.msra.mxu0 0.0
    %3057 = vmatprep.subr.mxu0 0.0
    %3058 = vmatpush1.msra.mxu0 0.0
    %3059 = vmatprep.subr.mxu0 0.0
    %3060 = vmatpush1.msra.mxu0 0.0
    %3061 = vmatprep.subr.mxu0 0.0
    %3062 = vmatpush1.msra.mxu0 0.0
    %3063 = vmatprep.subr.mxu0 0.0
    %3064 = vmatpush1.msra.mxu0 0.0
    %3065 = vmatprep.subr.mxu0 0.0
    %3066 = vmatpush1.msra.mxu0 0.0
    %3067 = vmatprep.subr.mxu0 0.0
    %3068 = vmatpush1.msra.mxu0 0.0
    %3069 = vmatprep.subr.mxu0 0.0
    %3070 = vmatpush1.msra.mxu0 0.0
    %3071 = vmatprep.subr.mxu0 0.0
    %3072 = vmatpush1.msra.mxu0 0.0
    %3073 = vmatprep.subr.mxu0 0.0
    %3074 = vmatpush1.msra.mxu0 0.0
    %3075 = vmatprep.subr.mxu0 0.0
    %3076 = vmatpush1.msra.mxu0 0.0
    %3077 = vmatprep.subr.mxu0 0.0
    %3078 = vmatpush1.msra.mxu0 0.0
    %3079 = vmatprep.subr.mxu0 0.0
    %3080 = vmatpush1.msra.mxu0 0.0
    %3081 = vmatprep.subr.mxu0 0.0
    %3082 = vmatpush1.msra.mxu0 0.0
    %3083 = vmatprep.subr.mxu0 0.0
    %3084 = vmatpush1.msra.mxu0 0.0
    %3085 = vmatprep.subr.mxu0 0.0
    %3086 = vmatpush1.msra.mxu0 0.0
    %3087 = vmatprep.mubr.f32.mxu0 0.0
    %3088 = vmatmul.mubr.f32.gmra.mrb[0].mxu0 %v2882
    %v3089 = vpop.f32.mrb[0].mxu0
    %v3090 = vadd.f32 0.0, %v3089
    %v3091 = vpop.f32.mrb[0].mxu0
    %v3092 = vadd.f32 0.0, %v3091
    %3093 = vdwg.mxu0
    %v3094 = vadd.f32 %v2884, %v3019
    %v3095 = vadd.f32 %v2885, %v3021
    %v3096 = vadd.f32 %v2886, %v3090
    %v3097 = vadd.f32 %v2887, %v3092
    %v3098 = vmul.f32 %v3094, 0.5
    %v3099 = vtanh.pop %v3098
    %v3100 = vmul.f32 %v3099, 0.5
    %v3101 = vadd.f32 %v3100, 0.5
    %v3102 = vmul.f32 %v3095, 0.5
    %v3103 = vtanh.pop %v3102
    %v3104 = vmul.f32 %v3103, 0.5
    %v3105 = vadd.f32 %v3104, 0.5
    %v3106 = vtanh.pop %v3096
    %v3107 = vmul.f32 %v3097, 0.5
    %v3108 = vtanh.pop %v3107
    %v3109 = vmul.f32 %v3108, 0.5
    %v3110 = vadd.f32 %v3109, 0.5
    %v3111 = vmul.f32 %v3105, %v2880
    %v3112 = vmul.f32 %v3101, %v3106
    %v3113 = vadd.f32 %v3111, %v3112
    %v3114 = vtanh.pop %v3113
    %v3115 = vmul.f32 %v3110, %v3114
    %3116 = vst [vmem:[%s7 + $0x8] sm:$0xff] %v3115
    %v3117 = vld [vmem:[#allocation2 + $0x40] sm:$0xff]
    %v3118 = vld [vmem:[#allocation2 + $0x48] sm:$0xff]
    %v3119 = vld [vmem:[#allocation2 + $0x50] sm:$0xff]
    %v3120 = vld [vmem:[#allocation2 + $0x58] sm:$0xff]
    %v3121 = vld [vmem:[#allocation9] sm:$0xff]
    %v3122 = vld [vmem:[#allocation9 + $0x8] sm:$0xff]
    %v3123 = vld [vmem:[#allocation9 + $0x10] sm:$0xff]
    %v3124 = vld [vmem:[#allocation9 + $0x18] sm:$0xff]
    %v3125 = vld [vmem:[#allocation9 + $0x20] sm:$0xff]
    %v3126 = vld [vmem:[#allocation9 + $0x28] sm:$0xff]
    %v3127 = vld [vmem:[#allocation9 + $0x30] sm:$0xff]
    %v3128 = vld [vmem:[#allocation9 + $0x38] sm:$0xff]
    %v3129 = vld [vmem:[#allocation9 + $0x40] sm:$0xff]
    %v3130 = vld [vmem:[#allocation9 + $0x48] sm:$0xff]
    %v3131 = vld [vmem:[#allocation9 + $0x50] sm:$0xff]
    %v3132 = vld [vmem:[#allocation9 + $0x58] sm:$0xff]
    %v3133 = vld [vmem:[#allocation9 + $0x60] sm:$0xff]
    %v3134 = vld [vmem:[#allocation9 + $0x68] sm:$0xff]
    %v3135 = vld [vmem:[#allocation9 + $0x70] sm:$0xff]
    %v3136 = vld [vmem:[#allocation9 + $0x78] sm:$0xff]
    %v3137 = vld [vmem:[#allocation9 + $0x80] sm:$0xff]
    %v3138 = vld [vmem:[#allocation9 + $0x88] sm:$0xff]
    %v3139 = vld [vmem:[#allocation9 + $0x90] sm:$0xff]
    %v3140 = vld [vmem:[#allocation9 + $0x98] sm:$0xff]
    %v3141 = vld [vmem:[#allocation9 + $0xa0] sm:$0xff]
    %v3142 = vld [vmem:[#allocation9 + $0xa8] sm:$0xff]
    %v3143 = vld [vmem:[#allocation9 + $0xb0] sm:$0xff]
    %v3144 = vld [vmem:[#allocation9 + $0xb8] sm:$0xff]
    %v3145 = vld [vmem:[#allocation9 + $0xc0] sm:$0xff]
    %v3146 = vld [vmem:[#allocation9 + $0xc8] sm:$0xff]
    %v3147 = vld [vmem:[#allocation9 + $0xd0] sm:$0xff]
    %v3148 = vld [vmem:[#allocation9 + $0xd8] sm:$0xff]
    %v3149 = vld [vmem:[#allocation9 + $0xe0] sm:$0xff]
    %v3150 = vld [vmem:[#allocation9 + $0xe8] sm:$0xff]
    %v3151 = vld [vmem:[#allocation9 + $0xf0] sm:$0xff]
    %v3152 = vld [vmem:[#allocation9 + $0xf8] sm:$0xff]
    %v3153 = vld [vmem:[#allocation9 + $0x100] sm:$0xff]
    %v3154 = vld [vmem:[#allocation9 + $0x108] sm:$0xff]
    %v3155 = vld [vmem:[#allocation9 + $0x110] sm:$0xff]
    %v3156 = vld [vmem:[#allocation9 + $0x118] sm:$0xff]
    %v3157 = vld [vmem:[#allocation9 + $0x120] sm:$0xff]
    %v3158 = vld [vmem:[#allocation9 + $0x128] sm:$0xff]
    %v3159 = vld [vmem:[#allocation9 + $0x130] sm:$0xff]
    %v3160 = vld [vmem:[#allocation9 + $0x138] sm:$0xff]
    %v3161 = vld [vmem:[#allocation9 + $0x140] sm:$0xff]
    %v3162 = vld [vmem:[#allocation9 + $0x148] sm:$0xff]
    %v3163 = vld [vmem:[#allocation9 + $0x150] sm:$0xff]
    %v3164 = vld [vmem:[#allocation9 + $0x158] sm:$0xff]
    %v3165 = vld [vmem:[#allocation9 + $0x160] sm:$0xff]
    %v3166 = vld [vmem:[#allocation9 + $0x168] sm:$0xff]
    %v3167 = vld [vmem:[#allocation9 + $0x170] sm:$0xff]
    %v3168 = vld [vmem:[#allocation9 + $0x178] sm:$0xff]
    %v3169 = vld [vmem:[#allocation9 + $0x180] sm:$0xff]
    %v3170 = vld [vmem:[#allocation9 + $0x188] sm:$0xff]
    %v3171 = vld [vmem:[#allocation9 + $0x190] sm:$0xff]
    %v3172 = vld [vmem:[#allocation9 + $0x198] sm:$0xff]
    %v3173 = vld [vmem:[#allocation9 + $0x1a0] sm:$0xff]
    %v3174 = vld [vmem:[#allocation9 + $0x1a8] sm:$0xff]
    %v3175 = vld [vmem:[#allocation9 + $0x1b0] sm:$0xff]
    %v3176 = vld [vmem:[#allocation9 + $0x1b8] sm:$0xff]
    %v3177 = vld [vmem:[#allocation9 + $0x1c0] sm:$0xff]
    %v3178 = vld [vmem:[#allocation9 + $0x1c8] sm:$0xff]
    %v3179 = vld [vmem:[#allocation9 + $0x1d0] sm:$0xff]
    %v3180 = vld [vmem:[#allocation9 + $0x1d8] sm:$0xff]
    %v3181 = vld [vmem:[#allocation9 + $0x1e0] sm:$0xff]
    %v3182 = vld [vmem:[#allocation9 + $0x1e8] sm:$0xff]
    %v3183 = vld [vmem:[#allocation9 + $0x1f0] sm:$0xff]
    %v3184 = vld [vmem:[#allocation9 + $0x1f8] sm:$0xff]
    %3185 = vmatprep.subr.mxu0 %v3122
    %3186 = vmatpush1.msra.mxu0 %v3121
    %3187 = vmatprep.subr.mxu0 %v3126
    %3188 = vmatpush1.msra.mxu0 %v3125
    %3189 = vmatprep.subr.mxu0 %v3130
    %3190 = vmatpush1.msra.mxu0 %v3129
    %3191 = vmatprep.subr.mxu0 %v3134
    %3192 = vmatpush1.msra.mxu0 %v3133
    %3193 = vmatprep.subr.mxu0 %v3138
    %3194 = vmatpush1.msra.mxu0 %v3137
    %3195 = vmatprep.subr.mxu0 %v3142
    %3196 = vmatpush1.msra.mxu0 %v3141
    %3197 = vmatprep.subr.mxu0 %v3146
    %3198 = vmatpush1.msra.mxu0 %v3145
    %3199 = vmatprep.subr.mxu0 %v3150
    %3200 = vmatpush1.msra.mxu0 %v3149
    %3201 = vmatprep.subr.mxu0 %v3154
    %3202 = vmatpush1.msra.mxu0 %v3153
    %3203 = vmatprep.subr.mxu0 %v3158
    %3204 = vmatpush1.msra.mxu0 %v3157
    %3205 = vmatprep.subr.mxu0 %v3162
    %3206 = vmatpush1.msra.mxu0 %v3161
    %3207 = vmatprep.subr.mxu0 %v3166
    %3208 = vmatpush1.msra.mxu0 %v3165
    %3209 = vmatprep.subr.mxu0 %v3170
    %3210 = vmatpush1.msra.mxu0 %v3169
    %3211 = vmatprep.subr.mxu0 %v3174
    %3212 = vmatpush1.msra.mxu0 %v3173
    %3213 = vmatprep.subr.mxu0 %v3178
    %3214 = vmatpush1.msra.mxu0 %v3177
    %3215 = vmatprep.subr.mxu0 %v3182
    %3216 = vmatpush1.msra.mxu0 %v3181
    %3217 = vmatprep.subr.mxu0 0.0
    %3218 = vmatpush1.msra.mxu0 0.0
    %3219 = vmatprep.subr.mxu0 0.0
    %3220 = vmatpush1.msra.mxu0 0.0
    %3221 = vmatprep.subr.mxu0 0.0
    %3222 = vmatpush1.msra.mxu0 0.0
    %3223 = vmatprep.subr.mxu0 0.0
    %3224 = vmatpush1.msra.mxu0 0.0
    %3225 = vmatprep.subr.mxu0 0.0
    %3226 = vmatpush1.msra.mxu0 0.0
    %3227 = vmatprep.subr.mxu0 0.0
    %3228 = vmatpush1.msra.mxu0 0.0
    %3229 = vmatprep.subr.mxu0 0.0
    %3230 = vmatpush1.msra.mxu0 0.0
    %3231 = vmatprep.subr.mxu0 0.0
    %3232 = vmatpush1.msra.mxu0 0.0
    %3233 = vmatprep.subr.mxu0 0.0
    %3234 = vmatpush1.msra.mxu0 0.0
    %3235 = vmatprep.subr.mxu0 0.0
    %3236 = vmatpush1.msra.mxu0 0.0
    %3237 = vmatprep.subr.mxu0 0.0
    %3238 = vmatpush1.msra.mxu0 0.0
    %3239 = vmatprep.subr.mxu0 0.0
    %3240 = vmatpush1.msra.mxu0 0.0
    %3241 = vmatprep.subr.mxu0 0.0
    %3242 = vmatpush1.msra.mxu0 0.0
    %3243 = vmatprep.subr.mxu0 0.0
    %3244 = vmatpush1.msra.mxu0 0.0
    %3245 = vmatprep.subr.mxu0 0.0
    %3246 = vmatpush1.msra.mxu0 0.0
    %3247 = vmatprep.subr.mxu0 0.0
    %3248 = vmatpush1.msra.mxu0 0.0
    %3249 = vmatprep.mubr.f32.mxu0 0.0
    %3250 = vmatmul.mubr.f32.gmra.mrb[0].mxu0 %v3115
    %v3251 = vpop.f32.mrb[0].mxu0
    %v3252 = vadd.f32 0.0, %v3251
    %v3253 = vpop.f32.mrb[0].mxu0
    %v3254 = vadd.f32 0.0, %v3253
    %3255 = vdwg.mxu0
    %3256 = vmatprep.subr.mxu0 %v3124
    %3257 = vmatpush1.msra.mxu0 %v3123
    %3258 = vmatprep.subr.mxu0 %v3128
    %3259 = vmatpush1.msra.mxu0 %v3127
    %3260 = vmatprep.subr.mxu0 %v3132
    %3261 = vmatpush1.msra.mxu0 %v3131
    %3262 = vmatprep.subr.mxu0 %v3136
    %3263 = vmatpush1.msra.mxu0 %v3135
    %3264 = vmatprep.subr.mxu0 %v3140
    %3265 = vmatpush1.msra.mxu0 %v3139
    %3266 = vmatprep.subr.mxu0 %v3144
    %3267 = vmatpush1.msra.mxu0 %v3143
    %3268 = vmatprep.subr.mxu0 %v3148
    %3269 = vmatpush1.msra.mxu0 %v3147
    %3270 = vmatprep.subr.mxu0 %v3152
    %3271 = vmatpush1.msra.mxu0 %v3151
    %3272 = vmatprep.subr.mxu0 %v3156
    %3273 = vmatpush1.msra.mxu0 %v3155
    %3274 = vmatprep.subr.mxu0 %v3160
    %3275 = vmatpush1.msra.mxu0 %v3159
    %3276 = vmatprep.subr.mxu0 %v3164
    %3277 = vmatpush1.msra.mxu0 %v3163
    %3278 = vmatprep.subr.mxu0 %v3168
    %3279 = vmatpush1.msra.mxu0 %v3167
    %3280 = vmatprep.subr.mxu0 %v3172
    %3281 = vmatpush1.msra.mxu0 %v3171
    %3282 = vmatprep.subr.mxu0 %v3176
    %3283 = vmatpush1.msra.mxu0 %v3175
    %3284 = vmatprep.subr.mxu0 %v3180
    %3285 = vmatpush1.msra.mxu0 %v3179
    %3286 = vmatprep.subr.mxu0 %v3184
    %3287 = vmatpush1.msra.mxu0 %v3183
    %3288 = vmatprep.subr.mxu0 0.0
    %3289 = vmatpush1.msra.mxu0 0.0
    %3290 = vmatprep.subr.mxu0 0.0
    %3291 = vmatpush1.msra.mxu0 0.0
    %3292 = vmatprep.subr.mxu0 0.0
    %3293 = vmatpush1.msra.mxu0 0.0
    %3294 = vmatprep.subr.mxu0 0.0
    %3295 = vmatpush1.msra.mxu0 0.0
    %3296 = vmatprep.subr.mxu0 0.0
    %3297 = vmatpush1.msra.mxu0 0.0
    %3298 = vmatprep.subr.mxu0 0.0
    %3299 = vmatpush1.msra.mxu0 0.0
    %3300 = vmatprep.subr.mxu0 0.0
    %3301 = vmatpush1.msra.mxu0 0.0
    %3302 = vmatprep.subr.mxu0 0.0
    %3303 = vmatpush1.msra.mxu0 0.0
    %3304 = vmatprep.subr.mxu0 0.0
    %3305 = vmatpush1.msra.mxu0 0.0
    %3306 = vmatprep.subr.mxu0 0.0
    %3307 = vmatpush1.msra.mxu0 0.0
    %3308 = vmatprep.subr.mxu0 0.0
    %3309 = vmatpush1.msra.mxu0 0.0
    %3310 = vmatprep.subr.mxu0 0.0
    %3311 = vmatpush1.msra.mxu0 0.0
    %3312 = vmatprep.subr.mxu0 0.0
    %3313 = vmatpush1.msra.mxu0 0.0
    %3314 = vmatprep.subr.mxu0 0.0
    %3315 = vmatpush1.msra.mxu0 0.0
    %3316 = vmatprep.subr.mxu0 0.0
    %3317 = vmatpush1.msra.mxu0 0.0
    %3318 = vmatprep.subr.mxu0 0.0
    %3319 = vmatpush1.msra.mxu0 0.0
    %3320 = vmatprep.mubr.f32.mxu0 0.0
    %3321 = vmatmul.mubr.f32.gmra.mrb[0].mxu0 %v3115
    %v3322 = vpop.f32.mrb[0].mxu0
    %v3323 = vadd.f32 0.0, %v3322
    %v3324 = vpop.f32.mrb[0].mxu0
    %v3325 = vadd.f32 0.0, %v3324
    %3326 = vdwg.mxu0
    %v3327 = vadd.f32 %v3117, %v3252
    %v3328 = vadd.f32 %v3118, %v3254
    %v3329 = vadd.f32 %v3119, %v3323
    %v3330 = vadd.f32 %v3120, %v3325
    %v3331 = vmul.f32 %v3327, 0.5
    %v3332 = vtanh.pop %v3331
    %v3333 = vmul.f32 %v3332, 0.5
    %v3334 = vadd.f32 %v3333, 0.5
    %v3335 = vmul.f32 %v3328, 0.5
    %v3336 = vtanh.pop %v3335
    %v3337 = vmul.f32 %v3336, 0.5
    %v3338 = vadd.f32 %v3337, 0.5
    %v3339 = vtanh.pop %v3329
    %v3340 = vmul.f32 %v3330, 0.5
    %v3341 = vtanh.pop %v3340
    %v3342 = vmul.f32 %v3341, 0.5
    %v3343 = vadd.f32 %v3342, 0.5
    %v3344 = vmul.f32 %v3338, %v3113
    %v3345 = vmul.f32 %v3334, %v3339
    %v3346 = vadd.f32 %v3344, %v3345
    %v3347 = vtanh.pop %v3346
    %v3348 = vmul.f32 %v3343, %v3347
    %3349 = vst [vmem:[%s7 + $0x10] sm:$0xff] %v3348
    %v3350 = vld [vmem:[#allocation2 + $0x60] sm:$0xff]
    %v3351 = vld [vmem:[#allocation2 + $0x68] sm:$0xff]
    %v3352 = vld [vmem:[#allocation2 + $0x70] sm:$0xff]
    %v3353 = vld [vmem:[#allocation2 + $0x78] sm:$0xff]
    %v3354 = vld [vmem:[#allocation9] sm:$0xff]
    %v3355 = vld [vmem:[#allocation9 + $0x8] sm:$0xff]
    %v3356 = vld [vmem:[#allocation9 + $0x10] sm:$0xff]
    %v3357 = vld [vmem:[#allocation9 + $0x18] sm:$0xff]
    %v3358 = vld [vmem:[#allocation9 + $0x20] sm:$0xff]
    %v3359 = vld [vmem:[#allocation9 + $0x28] sm:$0xff]
    %v3360 = vld [vmem:[#allocation9 + $0x30] sm:$0xff]
    %v3361 = vld [vmem:[#allocation9 + $0x38] sm:$0xff]
    %v3362 = vld [vmem:[#allocation9 + $0x40] sm:$0xff]
    %v3363 = vld [vmem:[#allocation9 + $0x48] sm:$0xff]
    %v3364 = vld [vmem:[#allocation9 + $0x50] sm:$0xff]
    %v3365 = vld [vmem:[#allocation9 + $0x58] sm:$0xff]
    %v3366 = vld [vmem:[#allocation9 + $0x60] sm:$0xff]
    %v3367 = vld [vmem:[#allocation9 + $0x68] sm:$0xff]
    %v3368 = vld [vmem:[#allocation9 + $0x70] sm:$0xff]
    %v3369 = vld [vmem:[#allocation9 + $0x78] sm:$0xff]
    %v3370 = vld [vmem:[#allocation9 + $0x80] sm:$0xff]
    %v3371 = vld [vmem:[#allocation9 + $0x88] sm:$0xff]
    %v3372 = vld [vmem:[#allocation9 + $0x90] sm:$0xff]
    %v3373 = vld [vmem:[#allocation9 + $0x98] sm:$0xff]
    %v3374 = vld [vmem:[#allocation9 + $0xa0] sm:$0xff]
    %v3375 = vld [vmem:[#allocation9 + $0xa8] sm:$0xff]
    %v3376 = vld [vmem:[#allocation9 + $0xb0] sm:$0xff]
    %v3377 = vld [vmem:[#allocation9 + $0xb8] sm:$0xff]
    %v3378 = vld [vmem:[#allocation9 + $0xc0] sm:$0xff]
    %v3379 = vld [vmem:[#allocation9 + $0xc8] sm:$0xff]
    %v3380 = vld [vmem:[#allocation9 + $0xd0] sm:$0xff]
    %v3381 = vld [vmem:[#allocation9 + $0xd8] sm:$0xff]
    %v3382 = vld [vmem:[#allocation9 + $0xe0] sm:$0xff]
    %v3383 = vld [vmem:[#allocation9 + $0xe8] sm:$0xff]
    %v3384 = vld [vmem:[#allocation9 + $0xf0] sm:$0xff]
    %v3385 = vld [vmem:[#allocation9 + $0xf8] sm:$0xff]
    %v3386 = vld [vmem:[#allocation9 + $0x100] sm:$0xff]
    %v3387 = vld [vmem:[#allocation9 + $0x108] sm:$0xff]
    %v3388 = vld [vmem:[#allocation9 + $0x110] sm:$0xff]
    %v3389 = vld [vmem:[#allocation9 + $0x118] sm:$0xff]
    %v3390 = vld [vmem:[#allocation9 + $0x120] sm:$0xff]
    %v3391 = vld [vmem:[#allocation9 + $0x128] sm:$0xff]
    %v3392 = vld [vmem:[#allocation9 + $0x130] sm:$0xff]
    %v3393 = vld [vmem:[#allocation9 + $0x138] sm:$0xff]
    %v3394 = vld [vmem:[#allocation9 + $0x140] sm:$0xff]
    %v3395 = vld [vmem:[#allocation9 + $0x148] sm:$0xff]
    %v3396 = vld [vmem:[#allocation9 + $0x150] sm:$0xff]
    %v3397 = vld [vmem:[#allocation9 + $0x158] sm:$0xff]
    %v3398 = vld [vmem:[#allocation9 + $0x160] sm:$0xff]
    %v3399 = vld [vmem:[#allocation9 + $0x168] sm:$0xff]
    %v3400 = vld [vmem:[#allocation9 + $0x170] sm:$0xff]
    %v3401 = vld [vmem:[#allocation9 + $0x178] sm:$0xff]
    %v3402 = vld [vmem:[#allocation9 + $0x180] sm:$0xff]
    %v3403 = vld [vmem:[#allocation9 + $0x188] sm:$0xff]
    %v3404 = vld [vmem:[#allocation9 + $0x190] sm:$0xff]
    %v3405 = vld [vmem:[#allocation9 + $0x198] sm:$0xff]
    %v3406 = vld [vmem:[#allocation9 + $0x1a0] sm:$0xff]
    %v3407 = vld [vmem:[#allocation9 + $0x1a8] sm:$0xff]
    %v3408 = vld [vmem:[#allocation9 + $0x1b0] sm:$0xff]
    %v3409 = vld [vmem:[#allocation9 + $0x1b8] sm:$0xff]
    %v3410 = vld [vmem:[#allocation9 + $0x1c0] sm:$0xff]
    %v3411 = vld [vmem:[#allocation9 + $0x1c8] sm:$0xff]
    %v3412 = vld [vmem:[#allocation9 + $0x1d0] sm:$0xff]
    %v3413 = vld [vmem:[#allocation9 + $0x1d8] sm:$0xff]
    %v3414 = vld [vmem:[#allocation9 + $0x1e0] sm:$0xff]
    %v3415 = vld [vmem:[#allocation9 + $0x1e8] sm:$0xff]
    %v3416 = vld [vmem:[#allocation9 + $0x1f0] sm:$0xff]
    %v3417 = vld [vmem:[#allocation9 + $0x1f8] sm:$0xff]
    %3418 = vmatprep.subr.mxu0 %v3355
    %3419 = vmatpush1.msra.mxu0 %v3354
    %3420 = vmatprep.subr.mxu0 %v3359
    %3421 = vmatpush1.msra.mxu0 %v3358
    %3422 = vmatprep.subr.mxu0 %v3363
    %3423 = vmatpush1.msra.mxu0 %v3362
    %3424 = vmatprep.subr.mxu0 %v3367
    %3425 = vmatpush1.msra.mxu0 %v3366
    %3426 = vmatprep.subr.mxu0 %v3371
    %3427 = vmatpush1.msra.mxu0 %v3370
    %3428 = vmatprep.subr.mxu0 %v3375
    %3429 = vmatpush1.msra.mxu0 %v3374
    %3430 = vmatprep.subr.mxu0 %v3379
    %3431 = vmatpush1.msra.mxu0 %v3378
    %3432 = vmatprep.subr.mxu0 %v3383
    %3433 = vmatpush1.msra.mxu0 %v3382
    %3434 = vmatprep.subr.mxu0 %v3387
    %3435 = vmatpush1.msra.mxu0 %v3386
    %3436 = vmatprep.subr.mxu0 %v3391
    %3437 = vmatpush1.msra.mxu0 %v3390
    %3438 = vmatprep.subr.mxu0 %v3395
    %3439 = vmatpush1.msra.mxu0 %v3394
    %3440 = vmatprep.subr.mxu0 %v3399
    %3441 = vmatpush1.msra.mxu0 %v3398
    %3442 = vmatprep.subr.mxu0 %v3403
    %3443 = vmatpush1.msra.mxu0 %v3402
    %3444 = vmatprep.subr.mxu0 %v3407
    %3445 = vmatpush1.msra.mxu0 %v3406
    %3446 = vmatprep.subr.mxu0 %v3411
    %3447 = vmatpush1.msra.mxu0 %v3410
    %3448 = vmatprep.subr.mxu0 %v3415
    %3449 = vmatpush1.msra.mxu0 %v3414
    %3450 = vmatprep.subr.mxu0 0.0
    %3451 = vmatpush1.msra.mxu0 0.0
    %3452 = vmatprep.subr.mxu0 0.0
    %3453 = vmatpush1.msra.mxu0 0.0
    %3454 = vmatprep.subr.mxu0 0.0
    %3455 = vmatpush1.msra.mxu0 0.0
    %3456 = vmatprep.subr.mxu0 0.0
    %3457 = vmatpush1.msra.mxu0 0.0
    %3458 = vmatprep.subr.mxu0 0.0
    %3459 = vmatpush1.msra.mxu0 0.0
    %3460 = vmatprep.subr.mxu0 0.0
    %3461 = vmatpush1.msra.mxu0 0.0
    %3462 = vmatprep.subr.mxu0 0.0
    %3463 = vmatpush1.msra.mxu0 0.0
    %3464 = vmatprep.subr.mxu0 0.0
    %3465 = vmatpush1.msra.mxu0 0.0
    %3466 = vmatprep.subr.mxu0 0.0
    %3467 = vmatpush1.msra.mxu0 0.0
    %3468 = vmatprep.subr.mxu0 0.0
    %3469 = vmatpush1.msra.mxu0 0.0
    %3470 = vmatprep.subr.mxu0 0.0
    %3471 = vmatpush1.msra.mxu0 0.0
    %3472 = vmatprep.subr.mxu0 0.0
    %3473 = vmatpush1.msra.mxu0 0.0
    %3474 = vmatprep.subr.mxu0 0.0
    %3475 = vmatpush1.msra.mxu0 0.0
    %3476 = vmatprep.subr.mxu0 0.0
    %3477 = vmatpush1.msra.mxu0 0.0
    %3478 = vmatprep.subr.mxu0 0.0
    %3479 = vmatpush1.msra.mxu0 0.0
    %3480 = vmatprep.subr.mxu0 0.0
    %3481 = vmatpush1.msra.mxu0 0.0
    %3482 = vmatprep.mubr.f32.mxu0 0.0
    %3483 = vmatmul.mubr.f32.gmra.mrb[0].mxu0 %v3348
    %v3484 = vpop.f32.mrb[0].mxu0
    %v3485 = vadd.f32 0.0, %v3484
    %v3486 = vpop.f32.mrb[0].mxu0
    %v3487 = vadd.f32 0.0, %v3486
    %3488 = vdwg.mxu0
    %3489 = vmatprep.subr.mxu0 %v3357
    %3490 = vmatpush1.msra.mxu0 %v3356
    %3491 = vmatprep.subr.mxu0 %v3361
    %3492 = vmatpush1.msra.mxu0 %v3360
    %3493 = vmatprep.subr.mxu0 %v3365
    %3494 = vmatpush1.msra.mxu0 %v3364
    %3495 = vmatprep.subr.mxu0 %v3369
    %3496 = vmatpush1.msra.mxu0 %v3368
    %3497 = vmatprep.subr.mxu0 %v3373
    %3498 = vmatpush1.msra.mxu0 %v3372
    %3499 = vmatprep.subr.mxu0 %v3377
    %3500 = vmatpush1.msra.mxu0 %v3376
    %3501 = vmatprep.subr.mxu0 %v3381
    %3502 = vmatpush1.msra.mxu0 %v3380
    %3503 = vmatprep.subr.mxu0 %v3385
    %3504 = vmatpush1.msra.mxu0 %v3384
    %3505 = vmatprep.subr.mxu0 %v3389
    %3506 = vmatpush1.msra.mxu0 %v3388
    %3507 = vmatprep.subr.mxu0 %v3393
    %3508 = vmatpush1.msra.mxu0 %v3392
    %3509 = vmatprep.subr.mxu0 %v3397
    %3510 = vmatpush1.msra.mxu0 %v3396
    %3511 = vmatprep.subr.mxu0 %v3401
    %3512 = vmatpush1.msra.mxu0 %v3400
    %3513 = vmatprep.subr.mxu0 %v3405
    %3514 = vmatpush1.msra.mxu0 %v3404
    %3515 = vmatprep.subr.mxu0 %v3409
    %3516 = vmatpush1.msra.mxu0 %v3408
    %3517 = vmatprep.subr.mxu0 %v3413
    %3518 = vmatpush1.msra.mxu0 %v3412
    %3519 = vmatprep.subr.mxu0 %v3417
    %3520 = vmatpush1.msra.mxu0 %v3416
    %3521 = vmatprep.subr.mxu0 0.0
    %3522 = vmatpush1.msra.mxu0 0.0
    %3523 = vmatprep.subr.mxu0 0.0
    %3524 = vmatpush1.msra.mxu0 0.0
    %3525 = vmatprep.subr.mxu0 0.0
    %3526 = vmatpush1.msra.mxu0 0.0
    %3527 = vmatprep.subr.mxu0 0.0
    %3528 = vmatpush1.msra.mxu0 0.0
    %3529 = vmatprep.subr.mxu0 0.0
    %3530 = vmatpush1.msra.mxu0 0.0
    %3531 = vmatprep.subr.mxu0 0.0
    %3532 = vmatpush1.msra.mxu0 0.0
    %3533 = vmatprep.subr.mxu0 0.0
    %3534 = vmatpush1.msra.mxu0 0.0
    %3535 = vmatprep.subr.mxu0 0.0
    %3536 = vmatpush1.msra.mxu0 0.0
    %3537 = vmatprep.subr.mxu0 0.0
    %3538 = vmatpush1.msra.mxu0 0.0
    %3539 = vmatprep.subr.mxu0 0.0
    %3540 = vmatpush1.msra.mxu0 0.0
    %3541 = vmatprep.subr.mxu0 0.0
    %3542 = vmatpush1.msra.mxu0 0.0
    %3543 = vmatprep.subr.mxu0 0.0
    %3544 = vmatpush1.msra.mxu0 0.0
    %3545 = vmatprep.subr.mxu0 0.0
    %3546 = vmatpush1.msra.mxu0 0.0
    %3547 = vmatprep.subr.mxu0 0.0
    %3548 = vmatpush1.msra.mxu0 0.0
    %3549 = vmatprep.subr.mxu0 0.0
    %3550 = vmatpush1.msra.mxu0 0.0
    %3551 = vmatprep.subr.mxu0 0.0
    %3552 = vmatpush1.msra.mxu0 0.0
    %3553 = vmatprep.mubr.f32.mxu0 0.0
    %3554 = vmatmul.mubr.f32.gmra.mrb[0].mxu0 %v3348
    %v3555 = vpop.f32.mrb[0].mxu0
    %v3556 = vadd.f32 0.0, %v3555
    %v3557 = vpop.f32.mrb[0].mxu0
    %v3558 = vadd.f32 0.0, %v3557
    %3559 = vdwg.mxu0
    %v3560 = vadd.f32 %v3350, %v3485
    %v3561 = vadd.f32 %v3351, %v3487
    %v3562 = vadd.f32 %v3352, %v3556
    %v3563 = vadd.f32 %v3353, %v3558
    %v3564 = vmul.f32 %v3560, 0.5
    %v3565 = vtanh.pop %v3564
    %v3566 = vmul.f32 %v3565, 0.5
    %v3567 = vadd.f32 %v3566, 0.5
    %v3568 = vmul.f32 %v3561, 0.5
    %v3569 = vtanh.pop %v3568
    %v3570 = vmul.f32 %v3569, 0.5
    %v3571 = vadd.f32 %v3570, 0.5
    %v3572 = vtanh.pop %v3562
    %v3573 = vmul.f32 %v3563, 0.5
    %v3574 = vtanh.pop %v3573
    %v3575 = vmul.f32 %v3574, 0.5
    %v3576 = vadd.f32 %v3575, 0.5
    %v3577 = vmul.f32 %v3571, %v3346
    %v3578 = vmul.f32 %v3567, %v3572
    %v3579 = vadd.f32 %v3577, %v3578
    %v3580 = vtanh.pop %v3579
    %v3581 = vmul.f32 %v3576, %v3580
    %3582 = vst [vmem:[%s7 + $0x18] sm:$0xff] %v3581
    %v3583 = vld [vmem:[#allocation2 + $0x80] sm:$0xff]
    %v3584 = vld [vmem:[#allocation2 + $0x88] sm:$0xff]
    %v3585 = vld [vmem:[#allocation2 + $0x90] sm:$0xff]
    %v3586 = vld [vmem:[#allocation2 + $0x98] sm:$0xff]
    %v3587 = vld [vmem:[#allocation9] sm:$0xff]
    %v3588 = vld [vmem:[#allocation9 + $0x8] sm:$0xff]
    %v3589 = vld [vmem:[#allocation9 + $0x10] sm:$0xff]
    %v3590 = vld [vmem:[#allocation9 + $0x18] sm:$0xff]
    %v3591 = vld [vmem:[#allocation9 + $0x20] sm:$0xff]
    %v3592 = vld [vmem:[#allocation9 + $0x28] sm:$0xff]
    %v3593 = vld [vmem:[#allocation9 + $0x30] sm:$0xff]
    %v3594 = vld [vmem:[#allocation9 + $0x38] sm:$0xff]
    %v3595 = vld [vmem:[#allocation9 + $0x40] sm:$0xff]
    %v3596 = vld [vmem:[#allocation9 + $0x48] sm:$0xff]
    %v3597 = vld [vmem:[#allocation9 + $0x50] sm:$0xff]
    %v3598 = vld [vmem:[#allocation9 + $0x58] sm:$0xff]
    %v3599 = vld [vmem:[#allocation9 + $0x60] sm:$0xff]
    %v3600 = vld [vmem:[#allocation9 + $0x68] sm:$0xff]
    %v3601 = vld [vmem:[#allocation9 + $0x70] sm:$0xff]
    %v3602 = vld [vmem:[#allocation9 + $0x78] sm:$0xff]
    %v3603 = vld [vmem:[#allocation9 + $0x80] sm:$0xff]
    %v3604 = vld [vmem:[#allocation9 + $0x88] sm:$0xff]
    %v3605 = vld [vmem:[#allocation9 + $0x90] sm:$0xff]
    %v3606 = vld [vmem:[#allocation9 + $0x98] sm:$0xff]
    %v3607 = vld [vmem:[#allocation9 + $0xa0] sm:$0xff]
    %v3608 = vld [vmem:[#allocation9 + $0xa8] sm:$0xff]
    %v3609 = vld [vmem:[#allocation9 + $0xb0] sm:$0xff]
    %v3610 = vld [vmem:[#allocation9 + $0xb8] sm:$0xff]
    %v3611 = vld [vmem:[#allocation9 + $0xc0] sm:$0xff]
    %v3612 = vld [vmem:[#allocation9 + $0xc8] sm:$0xff]
    %v3613 = vld [vmem:[#allocation9 + $0xd0] sm:$0xff]
    %v3614 = vld [vmem:[#allocation9 + $0xd8] sm:$0xff]
    %v3615 = vld [vmem:[#allocation9 + $0xe0] sm:$0xff]
    %v3616 = vld [vmem:[#allocation9 + $0xe8] sm:$0xff]
    %v3617 = vld [vmem:[#allocation9 + $0xf0] sm:$0xff]
    %v3618 = vld [vmem:[#allocation9 + $0xf8] sm:$0xff]
    %v3619 = vld [vmem:[#allocation9 + $0x100] sm:$0xff]
    %v3620 = vld [vmem:[#allocation9 + $0x108] sm:$0xff]
    %v3621 = vld [vmem:[#allocation9 + $0x110] sm:$0xff]
    %v3622 = vld [vmem:[#allocation9 + $0x118] sm:$0xff]
    %v3623 = vld [vmem:[#allocation9 + $0x120] sm:$0xff]
    %v3624 = vld [vmem:[#allocation9 + $0x128] sm:$0xff]
    %v3625 = vld [vmem:[#allocation9 + $0x130] sm:$0xff]
    %v3626 = vld [vmem:[#allocation9 + $0x138] sm:$0xff]
    %v3627 = vld [vmem:[#allocation9 + $0x140] sm:$0xff]
    %v3628 = vld [vmem:[#allocation9 + $0x148] sm:$0xff]
    %v3629 = vld [vmem:[#allocation9 + $0x150] sm:$0xff]
    %v3630 = vld [vmem:[#allocation9 + $0x158] sm:$0xff]
    %v3631 = vld [vmem:[#allocation9 + $0x160] sm:$0xff]
    %v3632 = vld [vmem:[#allocation9 + $0x168] sm:$0xff]
    %v3633 = vld [vmem:[#allocation9 + $0x170] sm:$0xff]
    %v3634 = vld [vmem:[#allocation9 + $0x178] sm:$0xff]
    %v3635 = vld [vmem:[#allocation9 + $0x180] sm:$0xff]
    %v3636 = vld [vmem:[#allocation9 + $0x188] sm:$0xff]
    %v3637 = vld [vmem:[#allocation9 + $0x190] sm:$0xff]
    %v3638 = vld [vmem:[#allocation9 + $0x198] sm:$0xff]
    %v3639 = vld [vmem:[#allocation9 + $0x1a0] sm:$0xff]
    %v3640 = vld [vmem:[#allocation9 + $0x1a8] sm:$0xff]
    %v3641 = vld [vmem:[#allocation9 + $0x1b0] sm:$0xff]
    %v3642 = vld [vmem:[#allocation9 + $0x1b8] sm:$0xff]
    %v3643 = vld [vmem:[#allocation9 + $0x1c0] sm:$0xff]
    %v3644 = vld [vmem:[#allocation9 + $0x1c8] sm:$0xff]
    %v3645 = vld [vmem:[#allocation9 + $0x1d0] sm:$0xff]
    %v3646 = vld [vmem:[#allocation9 + $0x1d8] sm:$0xff]
    %v3647 = vld [vmem:[#allocation9 + $0x1e0] sm:$0xff]
    %v3648 = vld [vmem:[#allocation9 + $0x1e8] sm:$0xff]
    %v3649 = vld [vmem:[#allocation9 + $0x1f0] sm:$0xff]
    %v3650 = vld [vmem:[#allocation9 + $0x1f8] sm:$0xff]
    %3651 = vmatprep.subr.mxu0 %v3588
    %3652 = vmatpush1.msra.mxu0 %v3587
    %3653 = vmatprep.subr.mxu0 %v3592
    %3654 = vmatpush1.msra.mxu0 %v3591
    %3655 = vmatprep.subr.mxu0 %v3596
    %3656 = vmatpush1.msra.mxu0 %v3595
    %3657 = vmatprep.subr.mxu0 %v3600
    %3658 = vmatpush1.msra.mxu0 %v3599
    %3659 = vmatprep.subr.mxu0 %v3604
    %3660 = vmatpush1.msra.mxu0 %v3603
    %3661 = vmatprep.subr.mxu0 %v3608
    %3662 = vmatpush1.msra.mxu0 %v3607
    %3663 = vmatprep.subr.mxu0 %v3612
    %3664 = vmatpush1.msra.mxu0 %v3611
    %3665 = vmatprep.subr.mxu0 %v3616
    %3666 = vmatpush1.msra.mxu0 %v3615
    %3667 = vmatprep.subr.mxu0 %v3620
    %3668 = vmatpush1.msra.mxu0 %v3619
    %3669 = vmatprep.subr.mxu0 %v3624
    %3670 = vmatpush1.msra.mxu0 %v3623
    %3671 = vmatprep.subr.mxu0 %v3628
    %3672 = vmatpush1.msra.mxu0 %v3627
    %3673 = vmatprep.subr.mxu0 %v3632
    %3674 = vmatpush1.msra.mxu0 %v3631
    %3675 = vmatprep.subr.mxu0 %v3636
    %3676 = vmatpush1.msra.mxu0 %v3635
    %3677 = vmatprep.subr.mxu0 %v3640
    %3678 = vmatpush1.msra.mxu0 %v3639
    %3679 = vmatprep.subr.mxu0 %v3644
    %3680 = vmatpush1.msra.mxu0 %v3643
    %3681 = vmatprep.subr.mxu0 %v3648
    %3682 = vmatpush1.msra.mxu0 %v3647
    %3683 = vmatprep.subr.mxu0 0.0
    %3684 = vmatpush1.msra.mxu0 0.0
    %3685 = vmatprep.subr.mxu0 0.0
    %3686 = vmatpush1.msra.mxu0 0.0
    %3687 = vmatprep.subr.mxu0 0.0
    %3688 = vmatpush1.msra.mxu0 0.0
    %3689 = vmatprep.subr.mxu0 0.0
    %3690 = vmatpush1.msra.mxu0 0.0
    %3691 = vmatprep.subr.mxu0 0.0
    %3692 = vmatpush1.msra.mxu0 0.0
    %3693 = vmatprep.subr.mxu0 0.0
    %3694 = vmatpush1.msra.mxu0 0.0
    %3695 = vmatprep.subr.mxu0 0.0
    %3696 = vmatpush1.msra.mxu0 0.0
    %3697 = vmatprep.subr.mxu0 0.0
    %3698 = vmatpush1.msra.mxu0 0.0
    %3699 = vmatprep.subr.mxu0 0.0
    %3700 = vmatpush1.msra.mxu0 0.0
    %3701 = vmatprep.subr.mxu0 0.0
    %3702 = vmatpush1.msra.mxu0 0.0
    %3703 = vmatprep.subr.mxu0 0.0
    %3704 = vmatpush1.msra.mxu0 0.0
    %3705 = vmatprep.subr.mxu0 0.0
    %3706 = vmatpush1.msra.mxu0 0.0
    %3707 = vmatprep.subr.mxu0 0.0
    %3708 = vmatpush1.msra.mxu0 0.0
    %3709 = vmatprep.subr.mxu0 0.0
    %3710 = vmatpush1.msra.mxu0 0.0
    %3711 = vmatprep.subr.mxu0 0.0
    %3712 = vmatpush1.msra.mxu0 0.0
    %3713 = vmatprep.subr.mxu0 0.0
    %3714 = vmatpush1.msra.mxu0 0.0
    %3715 = vmatprep.mubr.f32.mxu0 0.0
    %3716 = vmatmul.mubr.f32.gmra.mrb[0].mxu0 %v3581
    %v3717 = vpop.f32.mrb[0].mxu0
    %v3718 = vadd.f32 0.0, %v3717
    %v3719 = vpop.f32.mrb[0].mxu0
    %v3720 = vadd.f32 0.0, %v3719
    %3721 = vdwg.mxu0
    %3722 = vmatprep.subr.mxu0 %v3590
    %3723 = vmatpush1.msra.mxu0 %v3589
    %3724 = vmatprep.subr.mxu0 %v3594
    %3725 = vmatpush1.msra.mxu0 %v3593
    %3726 = vmatprep.subr.mxu0 %v3598
    %3727 = vmatpush1.msra.mxu0 %v3597
    %3728 = vmatprep.subr.mxu0 %v3602
    %3729 = vmatpush1.msra.mxu0 %v3601
    %3730 = vmatprep.subr.mxu0 %v3606
    %3731 = vmatpush1.msra.mxu0 %v3605
    %3732 = vmatprep.subr.mxu0 %v3610
    %3733 = vmatpush1.msra.mxu0 %v3609
    %3734 = vmatprep.subr.mxu0 %v3614
    %3735 = vmatpush1.msra.mxu0 %v3613
    %3736 = vmatprep.subr.mxu0 %v3618
    %3737 = vmatpush1.msra.mxu0 %v3617
    %3738 = vmatprep.subr.mxu0 %v3622
    %3739 = vmatpush1.msra.mxu0 %v3621
    %3740 = vmatprep.subr.mxu0 %v3626
    %3741 = vmatpush1.msra.mxu0 %v3625
    %3742 = vmatprep.subr.mxu0 %v3630
    %3743 = vmatpush1.msra.mxu0 %v3629
    %3744 = vmatprep.subr.mxu0 %v3634
    %3745 = vmatpush1.msra.mxu0 %v3633
    %3746 = vmatprep.subr.mxu0 %v3638
    %3747 = vmatpush1.msra.mxu0 %v3637
    %3748 = vmatprep.subr.mxu0 %v3642
    %3749 = vmatpush1.msra.mxu0 %v3641
    %3750 = vmatprep.subr.mxu0 %v3646
    %3751 = vmatpush1.msra.mxu0 %v3645
    %3752 = vmatprep.subr.mxu0 %v3650
    %3753 = vmatpush1.msra.mxu0 %v3649
    %3754 = vmatprep.subr.mxu0 0.0
    %3755 = vmatpush1.msra.mxu0 0.0
    %3756 = vmatprep.subr.mxu0 0.0
    %3757 = vmatpush1.msra.mxu0 0.0
    %3758 = vmatprep.subr.mxu0 0.0
    %3759 = vmatpush1.msra.mxu0 0.0
    %3760 = vmatprep.subr.mxu0 0.0
    %3761 = vmatpush1.msra.mxu0 0.0
    %3762 = vmatprep.subr.mxu0 0.0
    %3763 = vmatpush1.msra.mxu0 0.0
    %3764 = vmatprep.subr.mxu0 0.0
    %3765 = vmatpush1.msra.mxu0 0.0
    %3766 = vmatprep.subr.mxu0 0.0
    %3767 = vmatpush1.msra.mxu0 0.0
    %3768 = vmatprep.subr.mxu0 0.0
    %3769 = vmatpush1.msra.mxu0 0.0
    %3770 = vmatprep.subr.mxu0 0.0
    %3771 = vmatpush1.msra.mxu0 0.0
    %3772 = vmatprep.subr.mxu0 0.0
    %3773 = vmatpush1.msra.mxu0 0.0
    %3774 = vmatprep.subr.mxu0 0.0
    %3775 = vmatpush1.msra.mxu0 0.0
    %3776 = vmatprep.subr.mxu0 0.0
    %3777 = vmatpush1.msra.mxu0 0.0
    %3778 = vmatprep.subr.mxu0 0.0
    %3779 = vmatpush1.msra.mxu0 0.0
    %3780 = vmatprep.subr.mxu0 0.0
    %3781 = vmatpush1.msra.mxu0 0.0
    %3782 = vmatprep.subr.mxu0 0.0
    %3783 = vmatpush1.msra.mxu0 0.0
    %3784 = vmatprep.subr.mxu0 0.0
    %3785 = vmatpush1.msra.mxu0 0.0
    %3786 = vmatprep.mubr.f32.mxu0 0.0
    %3787 = vmatmul.mubr.f32.gmra.mrb[0].mxu0 %v3581
    %v3788 = vpop.f32.mrb[0].mxu0
    %v3789 = vadd.f32 0.0, %v3788
    %v3790 = vpop.f32.mrb[0].mxu0
    %v3791 = vadd.f32 0.0, %v3790
    %3792 = vdwg.mxu0
    %v3793 = vadd.f32 %v3583, %v3718
    %v3794 = vadd.f32 %v3584, %v3720
    %v3795 = vadd.f32 %v3585, %v3789
    %v3796 = vadd.f32 %v3586, %v3791
    %v3797 = vmul.f32 %v3793, 0.5
    %v3798 = vtanh.pop %v3797
    %v3799 = vmul.f32 %v3798, 0.5
    %v3800 = vadd.f32 %v3799, 0.5
    %v3801 = vmul.f32 %v3794, 0.5
    %v3802 = vtanh.pop %v3801
    %v3803 = vmul.f32 %v3802, 0.5
    %v3804 = vadd.f32 %v3803, 0.5
    %v3805 = vtanh.pop %v3795
    %v3806 = vmul.f32 %v3796, 0.5
    %v3807 = vtanh.pop %v3806
    %v3808 = vmul.f32 %v3807, 0.5
    %v3809 = vadd.f32 %v3808, 0.5
    %v3810 = vmul.f32 %v3804, %v3579
    %v3811 = vmul.f32 %v3800, %v3805
    %v3812 = vadd.f32 %v3810, %v3811
    %v3813 = vtanh.pop %v3812
    %v3814 = vmul.f32 %v3809, %v3813
    %3815 = vst [vmem:[%s7 + $0x20] sm:$0xff] %v3814
    %v3816 = vld [vmem:[#allocation2 + $0xa0] sm:$0xff]
    %v3817 = vld [vmem:[#allocation2 + $0xa8] sm:$0xff]
    %v3818 = vld [vmem:[#allocation2 + $0xb0] sm:$0xff]
    %v3819 = vld [vmem:[#allocation2 + $0xb8] sm:$0xff]
    %v3820 = vld [vmem:[#allocation9] sm:$0xff]
    %v3821 = vld [vmem:[#allocation9 + $0x8] sm:$0xff]
    %v3822 = vld [vmem:[#allocation9 + $0x10] sm:$0xff]
    %v3823 = vld [vmem:[#allocation9 + $0x18] sm:$0xff]
    %v3824 = vld [vmem:[#allocation9 + $0x20] sm:$0xff]
    %v3825 = vld [vmem:[#allocation9 + $0x28] sm:$0xff]
    %v3826 = vld [vmem:[#allocation9 + $0x30] sm:$0xff]
    %v3827 = vld [vmem:[#allocation9 + $0x38] sm:$0xff]
    %v3828 = vld [vmem:[#allocation9 + $0x40] sm:$0xff]
    %v3829 = vld [vmem:[#allocation9 + $0x48] sm:$0xff]
    %v3830 = vld [vmem:[#allocation9 + $0x50] sm:$0xff]
    %v3831 = vld [vmem:[#allocation9 + $0x58] sm:$0xff]
    %v3832 = vld [vmem:[#allocation9 + $0x60] sm:$0xff]
    %v3833 = vld [vmem:[#allocation9 + $0x68] sm:$0xff]
    %v3834 = vld [vmem:[#allocation9 + $0x70] sm:$0xff]
    %v3835 = vld [vmem:[#allocation9 + $0x78] sm:$0xff]
    %v3836 = vld [vmem:[#allocation9 + $0x80] sm:$0xff]
    %v3837 = vld [vmem:[#allocation9 + $0x88] sm:$0xff]
    %v3838 = vld [vmem:[#allocation9 + $0x90] sm:$0xff]
    %v3839 = vld [vmem:[#allocation9 + $0x98] sm:$0xff]
    %v3840 = vld [vmem:[#allocation9 + $0xa0] sm:$0xff]
    %v3841 = vld [vmem:[#allocation9 + $0xa8] sm:$0xff]
    %v3842 = vld [vmem:[#allocation9 + $0xb0] sm:$0xff]
    %v3843 = vld [vmem:[#allocation9 + $0xb8] sm:$0xff]
    %v3844 = vld [vmem:[#allocation9 + $0xc0] sm:$0xff]
    %v3845 = vld [vmem:[#allocation9 + $0xc8] sm:$0xff]
    %v3846 = vld [vmem:[#allocation9 + $0xd0] sm:$0xff]
    %v3847 = vld [vmem:[#allocation9 + $0xd8] sm:$0xff]
    %v3848 = vld [vmem:[#allocation9 + $0xe0] sm:$0xff]
    %v3849 = vld [vmem:[#allocation9 + $0xe8] sm:$0xff]
    %v3850 = vld [vmem:[#allocation9 + $0xf0] sm:$0xff]
    %v3851 = vld [vmem:[#allocation9 + $0xf8] sm:$0xff]
    %v3852 = vld [vmem:[#allocation9 + $0x100] sm:$0xff]
    %v3853 = vld [vmem:[#allocation9 + $0x108] sm:$0xff]
    %v3854 = vld [vmem:[#allocation9 + $0x110] sm:$0xff]
    %v3855 = vld [vmem:[#allocation9 + $0x118] sm:$0xff]
    %v3856 = vld [vmem:[#allocation9 + $0x120] sm:$0xff]
    %v3857 = vld [vmem:[#allocation9 + $0x128] sm:$0xff]
    %v3858 = vld [vmem:[#allocation9 + $0x130] sm:$0xff]
    %v3859 = vld [vmem:[#allocation9 + $0x138] sm:$0xff]
    %v3860 = vld [vmem:[#allocation9 + $0x140] sm:$0xff]
    %v3861 = vld [vmem:[#allocation9 + $0x148] sm:$0xff]
    %v3862 = vld [vmem:[#allocation9 + $0x150] sm:$0xff]
    %v3863 = vld [vmem:[#allocation9 + $0x158] sm:$0xff]
    %v3864 = vld [vmem:[#allocation9 + $0x160] sm:$0xff]
    %v3865 = vld [vmem:[#allocation9 + $0x168] sm:$0xff]
    %v3866 = vld [vmem:[#allocation9 + $0x170] sm:$0xff]
    %v3867 = vld [vmem:[#allocation9 + $0x178] sm:$0xff]
    %v3868 = vld [vmem:[#allocation9 + $0x180] sm:$0xff]
    %v3869 = vld [vmem:[#allocation9 + $0x188] sm:$0xff]
    %v3870 = vld [vmem:[#allocation9 + $0x190] sm:$0xff]
    %v3871 = vld [vmem:[#allocation9 + $0x198] sm:$0xff]
    %v3872 = vld [vmem:[#allocation9 + $0x1a0] sm:$0xff]
    %v3873 = vld [vmem:[#allocation9 + $0x1a8] sm:$0xff]
    %v3874 = vld [vmem:[#allocation9 + $0x1b0] sm:$0xff]
    %v3875 = vld [vmem:[#allocation9 + $0x1b8] sm:$0xff]
    %v3876 = vld [vmem:[#allocation9 + $0x1c0] sm:$0xff]
    %v3877 = vld [vmem:[#allocation9 + $0x1c8] sm:$0xff]
    %v3878 = vld [vmem:[#allocation9 + $0x1d0] sm:$0xff]
    %v3879 = vld [vmem:[#allocation9 + $0x1d8] sm:$0xff]
    %v3880 = vld [vmem:[#allocation9 + $0x1e0] sm:$0xff]
    %v3881 = vld [vmem:[#allocation9 + $0x1e8] sm:$0xff]
    %v3882 = vld [vmem:[#allocation9 + $0x1f0] sm:$0xff]
    %v3883 = vld [vmem:[#allocation9 + $0x1f8] sm:$0xff]
    %3884 = vmatprep.subr.mxu0 %v3821
    %3885 = vmatpush1.msra.mxu0 %v3820
    %3886 = vmatprep.subr.mxu0 %v3825
    %3887 = vmatpush1.msra.mxu0 %v3824
    %3888 = vmatprep.subr.mxu0 %v3829
    %3889 = vmatpush1.msra.mxu0 %v3828
    %3890 = vmatprep.subr.mxu0 %v3833
    %3891 = vmatpush1.msra.mxu0 %v3832
    %3892 = vmatprep.subr.mxu0 %v3837
    %3893 = vmatpush1.msra.mxu0 %v3836
    %3894 = vmatprep.subr.mxu0 %v3841
    %3895 = vmatpush1.msra.mxu0 %v3840
    %3896 = vmatprep.subr.mxu0 %v3845
    %3897 = vmatpush1.msra.mxu0 %v3844
    %3898 = vmatprep.subr.mxu0 %v3849
    %3899 = vmatpush1.msra.mxu0 %v3848
    %3900 = vmatprep.subr.mxu0 %v3853
    %3901 = vmatpush1.msra.mxu0 %v3852
    %3902 = vmatprep.subr.mxu0 %v3857
    %3903 = vmatpush1.msra.mxu0 %v3856
    %3904 = vmatprep.subr.mxu0 %v3861
    %3905 = vmatpush1.msra.mxu0 %v3860
    %3906 = vmatprep.subr.mxu0 %v3865
    %3907 = vmatpush1.msra.mxu0 %v3864
    %3908 = vmatprep.subr.mxu0 %v3869
    %3909 = vmatpush1.msra.mxu0 %v3868
    %3910 = vmatprep.subr.mxu0 %v3873
    %3911 = vmatpush1.msra.mxu0 %v3872
    %3912 = vmatprep.subr.mxu0 %v3877
    %3913 = vmatpush1.msra.mxu0 %v3876
    %3914 = vmatprep.subr.mxu0 %v3881
    %3915 = vmatpush1.msra.mxu0 %v3880
    %3916 = vmatprep.subr.mxu0 0.0
    %3917 = vmatpush1.msra.mxu0 0.0
    %3918 = vmatprep.subr.mxu0 0.0
    %3919 = vmatpush1.msra.mxu0 0.0
    %3920 = vmatprep.subr.mxu0 0.0
    %3921 = vmatpush1.msra.mxu0 0.0
    %3922 = vmatprep.subr.mxu0 0.0
    %3923 = vmatpush1.msra.mxu0 0.0
    %3924 = vmatprep.subr.mxu0 0.0
    %3925 = vmatpush1.msra.mxu0 0.0
    %3926 = vmatprep.subr.mxu0 0.0
    %3927 = vmatpush1.msra.mxu0 0.0
    %3928 = vmatprep.subr.mxu0 0.0
    %3929 = vmatpush1.msra.mxu0 0.0
    %3930 = vmatprep.subr.mxu0 0.0
    %3931 = vmatpush1.msra.mxu0 0.0
    %3932 = vmatprep.subr.mxu0 0.0
    %3933 = vmatpush1.msra.mxu0 0.0
    %3934 = vmatprep.subr.mxu0 0.0
    %3935 = vmatpush1.msra.mxu0 0.0
    %3936 = vmatprep.subr.mxu0 0.0
    %3937 = vmatpush1.msra.mxu0 0.0
    %3938 = vmatprep.subr.mxu0 0.0
    %3939 = vmatpush1.msra.mxu0 0.0
    %3940 = vmatprep.subr.mxu0 0.0
    %3941 = vmatpush1.msra.mxu0 0.0
    %3942 = vmatprep.subr.mxu0 0.0
    %3943 = vmatpush1.msra.mxu0 0.0
    %3944 = vmatprep.subr.mxu0 0.0
    %3945 = vmatpush1.msra.mxu0 0.0
    %3946 = vmatprep.subr.mxu0 0.0
    %3947 = vmatpush1.msra.mxu0 0.0
    %3948 = vmatprep.mubr.f32.mxu0 0.0
    %3949 = vmatmul.mubr.f32.gmra.mrb[0].mxu0 %v3814
    %v3950 = vpop.f32.mrb[0].mxu0
    %v3951 = vadd.f32 0.0, %v3950
    %v3952 = vpop.f32.mrb[0].mxu0
    %v3953 = vadd.f32 0.0, %v3952
    %3954 = vdwg.mxu0
    %3955 = vmatprep.subr.mxu0 %v3823
    %3956 = vmatpush1.msra.mxu0 %v3822
    %3957 = vmatprep.subr.mxu0 %v3827
    %3958 = vmatpush1.msra.mxu0 %v3826
    %3959 = vmatprep.subr.mxu0 %v3831
    %3960 = vmatpush1.msra.mxu0 %v3830
    %3961 = vmatprep.subr.mxu0 %v3835
    %3962 = vmatpush1.msra.mxu0 %v3834
    %3963 = vmatprep.subr.mxu0 %v3839
    %3964 = vmatpush1.msra.mxu0 %v3838
    %3965 = vmatprep.subr.mxu0 %v3843
    %3966 = vmatpush1.msra.mxu0 %v3842
    %3967 = vmatprep.subr.mxu0 %v3847
    %3968 = vmatpush1.msra.mxu0 %v3846
    %3969 = vmatprep.subr.mxu0 %v3851
    %3970 = vmatpush1.msra.mxu0 %v3850
    %3971 = vmatprep.subr.mxu0 %v3855
    %3972 = vmatpush1.msra.mxu0 %v3854
    %3973 = vmatprep.subr.mxu0 %v3859
    %3974 = vmatpush1.msra.mxu0 %v3858
    %3975 = vmatprep.subr.mxu0 %v3863
    %3976 = vmatpush1.msra.mxu0 %v3862
    %3977 = vmatprep.subr.mxu0 %v3867
    %3978 = vmatpush1.msra.mxu0 %v3866
    %3979 = vmatprep.subr.mxu0 %v3871
    %3980 = vmatpush1.msra.mxu0 %v3870
    %3981 = vmatprep.subr.mxu0 %v3875
    %3982 = vmatpush1.msra.mxu0 %v3874
    %3983 = vmatprep.subr.mxu0 %v3879
    %3984 = vmatpush1.msra.mxu0 %v3878
    %3985 = vmatprep.subr.mxu0 %v3883
    %3986 = vmatpush1.msra.mxu0 %v3882
    %3987 = vmatprep.subr.mxu0 0.0
    %3988 = vmatpush1.msra.mxu0 0.0
    %3989 = vmatprep.subr.mxu0 0.0
    %3990 = vmatpush1.msra.mxu0 0.0
    %3991 = vmatprep.subr.mxu0 0.0
    %3992 = vmatpush1.msra.mxu0 0.0
    %3993 = vmatprep.subr.mxu0 0.0
    %3994 = vmatpush1.msra.mxu0 0.0
    %3995 = vmatprep.subr.mxu0 0.0
    %3996 = vmatpush1.msra.mxu0 0.0
    %3997 = vmatprep.subr.mxu0 0.0
    %3998 = vmatpush1.msra.mxu0 0.0
    %3999 = vmatprep.subr.mxu0 0.0
    %4000 = vmatpush1.msra.mxu0 0.0
    %4001 = vmatprep.subr.mxu0 0.0
    %4002 = vmatpush1.msra.mxu0 0.0
    %4003 = vmatprep.subr.mxu0 0.0
    %4004 = vmatpush1.msra.mxu0 0.0
    %4005 = vmatprep.subr.mxu0 0.0
    %4006 = vmatpush1.msra.mxu0 0.0
    %4007 = vmatprep.subr.mxu0 0.0
    %4008 = vmatpush1.msra.mxu0 0.0
    %4009 = vmatprep.subr.mxu0 0.0
    %4010 = vmatpush1.msra.mxu0 0.0
    %4011 = vmatprep.subr.mxu0 0.0
    %4012 = vmatpush1.msra.mxu0 0.0
    %4013 = vmatprep.subr.mxu0 0.0
    %4014 = vmatpush1.msra.mxu0 0.0
    %4015 = vmatprep.subr.mxu0 0.0
    %4016 = vmatpush1.msra.mxu0 0.0
    %4017 = vmatprep.subr.mxu0 0.0
    %4018 = vmatpush1.msra.mxu0 0.0
    %4019 = vmatprep.mubr.f32.mxu0 0.0
    %4020 = vmatmul.mubr.f32.gmra.mrb[0].mxu0 %v3814
    %v4021 = vpop.f32.mrb[0].mxu0
    %v4022 = vadd.f32 0.0, %v4021
    %v4023 = vpop.f32.mrb[0].mxu0
    %v4024 = vadd.f32 0.0, %v4023
    %4025 = vdwg.mxu0
    %v4026 = vadd.f32 %v3816, %v3951
    %v4027 = vadd.f32 %v3817, %v3953
    %v4028 = vadd.f32 %v3818, %v4022
    %v4029 = vadd.f32 %v3819, %v4024
    %v4030 = vmul.f32 %v4026, 0.5
    %v4031 = vtanh.pop %v4030
    %v4032 = vmul.f32 %v4031, 0.5
    %v4033 = vadd.f32 %v4032, 0.5
    %v4034 = vmul.f32 %v4027, 0.5
    %v4035 = vtanh.pop %v4034
    %v4036 = vmul.f32 %v4035, 0.5
    %v4037 = vadd.f32 %v4036, 0.5
    %v4038 = vtanh.pop %v4028
    %v4039 = vmul.f32 %v4029, 0.5
    %v4040 = vtanh.pop %v4039
    %v4041 = vmul.f32 %v4040, 0.5
    %v4042 = vadd.f32 %v4041, 0.5
    %v4043 = vmul.f32 %v4037, %v3812
    %v4044 = vmul.f32 %v4033, %v4038
    %v4045 = vadd.f32 %v4043, %v4044
    %v4046 = vtanh.pop %v4045
    %v4047 = vmul.f32 %v4042, %v4046
    %4048 = vst [vmem:[%s7 + $0x28] sm:$0xff] %v4047
    %v4049 = vld [vmem:[#allocation2 + $0xc0] sm:$0xff]
    %v4050 = vld [vmem:[#allocation2 + $0xc8] sm:$0xff]
    %v4051 = vld [vmem:[#allocation2 + $0xd0] sm:$0xff]
    %v4052 = vld [vmem:[#allocation2 + $0xd8] sm:$0xff]
    %v4053 = vld [vmem:[#allocation9] sm:$0xff]
    %v4054 = vld [vmem:[#allocation9 + $0x8] sm:$0xff]
    %v4055 = vld [vmem:[#allocation9 + $0x10] sm:$0xff]
    %v4056 = vld [vmem:[#allocation9 + $0x18] sm:$0xff]
    %v4057 = vld [vmem:[#allocation9 + $0x20] sm:$0xff]
    %v4058 = vld [vmem:[#allocation9 + $0x28] sm:$0xff]
    %v4059 = vld [vmem:[#allocation9 + $0x30] sm:$0xff]
    %v4060 = vld [vmem:[#allocation9 + $0x38] sm:$0xff]
    %v4061 = vld [vmem:[#allocation9 + $0x40] sm:$0xff]
    %v4062 = vld [vmem:[#allocation9 + $0x48] sm:$0xff]
    %v4063 = vld [vmem:[#allocation9 + $0x50] sm:$0xff]
    %v4064 = vld [vmem:[#allocation9 + $0x58] sm:$0xff]
    %v4065 = vld [vmem:[#allocation9 + $0x60] sm:$0xff]
    %v4066 = vld [vmem:[#allocation9 + $0x68] sm:$0xff]
    %v4067 = vld [vmem:[#allocation9 + $0x70] sm:$0xff]
    %v4068 = vld [vmem:[#allocation9 + $0x78] sm:$0xff]
    %v4069 = vld [vmem:[#allocation9 + $0x80] sm:$0xff]
    %v4070 = vld [vmem:[#allocation9 + $0x88] sm:$0xff]
    %v4071 = vld [vmem:[#allocation9 + $0x90] sm:$0xff]
    %v4072 = vld [vmem:[#allocation9 + $0x98] sm:$0xff]
    %v4073 = vld [vmem:[#allocation9 + $0xa0] sm:$0xff]
    %v4074 = vld [vmem:[#allocation9 + $0xa8] sm:$0xff]
    %v4075 = vld [vmem:[#allocation9 + $0xb0] sm:$0xff]
    %v4076 = vld [vmem:[#allocation9 + $0xb8] sm:$0xff]
    %v4077 = vld [vmem:[#allocation9 + $0xc0] sm:$0xff]
    %v4078 = vld [vmem:[#allocation9 + $0xc8] sm:$0xff]
    %v4079 = vld [vmem:[#allocation9 + $0xd0] sm:$0xff]
    %v4080 = vld [vmem:[#allocation9 + $0xd8] sm:$0xff]
    %v4081 = vld [vmem:[#allocation9 + $0xe0] sm:$0xff]
    %v4082 = vld [vmem:[#allocation9 + $0xe8] sm:$0xff]
    %v4083 = vld [vmem:[#allocation9 + $0xf0] sm:$0xff]
    %v4084 = vld [vmem:[#allocation9 + $0xf8] sm:$0xff]
    %v4085 = vld [vmem:[#allocation9 + $0x100] sm:$0xff]
    %v4086 = vld [vmem:[#allocation9 + $0x108] sm:$0xff]
    %v4087 = vld [vmem:[#allocation9 + $0x110] sm:$0xff]
    %v4088 = vld [vmem:[#allocation9 + $0x118] sm:$0xff]
    %v4089 = vld [vmem:[#allocation9 + $0x120] sm:$0xff]
    %v4090 = vld [vmem:[#allocation9 + $0x128] sm:$0xff]
    %v4091 = vld [vmem:[#allocation9 + $0x130] sm:$0xff]
    %v4092 = vld [vmem:[#allocation9 + $0x138] sm:$0xff]
    %v4093 = vld [vmem:[#allocation9 + $0x140] sm:$0xff]
    %v4094 = vld [vmem:[#allocation9 + $0x148] sm:$0xff]
    %v4095 = vld [vmem:[#allocation9 + $0x150] sm:$0xff]
    %v4096 = vld [vmem:[#allocation9 + $0x158] sm:$0xff]
    %v4097 = vld [vmem:[#allocation9 + $0x160] sm:$0xff]
    %v4098 = vld [vmem:[#allocation9 + $0x168] sm:$0xff]
    %v4099 = vld [vmem:[#allocation9 + $0x170] sm:$0xff]
    %v4100 = vld [vmem:[#allocation9 + $0x178] sm:$0xff]
    %v4101 = vld [vmem:[#allocation9 + $0x180] sm:$0xff]
    %v4102 = vld [vmem:[#allocation9 + $0x188] sm:$0xff]
    %v4103 = vld [vmem:[#allocation9 + $0x190] sm:$0xff]
    %v4104 = vld [vmem:[#allocation9 + $0x198] sm:$0xff]
    %v4105 = vld [vmem:[#allocation9 + $0x1a0] sm:$0xff]
    %v4106 = vld [vmem:[#allocation9 + $0x1a8] sm:$0xff]
    %v4107 = vld [vmem:[#allocation9 + $0x1b0] sm:$0xff]
    %v4108 = vld [vmem:[#allocation9 + $0x1b8] sm:$0xff]
    %v4109 = vld [vmem:[#allocation9 + $0x1c0] sm:$0xff]
    %v4110 = vld [vmem:[#allocation9 + $0x1c8] sm:$0xff]
    %v4111 = vld [vmem:[#allocation9 + $0x1d0] sm:$0xff]
    %v4112 = vld [vmem:[#allocation9 + $0x1d8] sm:$0xff]
    %v4113 = vld [vmem:[#allocation9 + $0x1e0] sm:$0xff]
    %v4114 = vld [vmem:[#allocation9 + $0x1e8] sm:$0xff]
    %v4115 = vld [vmem:[#allocation9 + $0x1f0] sm:$0xff]
    %v4116 = vld [vmem:[#allocation9 + $0x1f8] sm:$0xff]
    %4117 = vmatprep.subr.mxu0 %v4054
    %4118 = vmatpush1.msra.mxu0 %v4053
    %4119 = vmatprep.subr.mxu0 %v4058
    %4120 = vmatpush1.msra.mxu0 %v4057
    %4121 = vmatprep.subr.mxu0 %v4062
    %4122 = vmatpush1.msra.mxu0 %v4061
    %4123 = vmatprep.subr.mxu0 %v4066
    %4124 = vmatpush1.msra.mxu0 %v4065
    %4125 = vmatprep.subr.mxu0 %v4070
    %4126 = vmatpush1.msra.mxu0 %v4069
    %4127 = vmatprep.subr.mxu0 %v4074
    %4128 = vmatpush1.msra.mxu0 %v4073
    %4129 = vmatprep.subr.mxu0 %v4078
    %4130 = vmatpush1.msra.mxu0 %v4077
    %4131 = vmatprep.subr.mxu0 %v4082
    %4132 = vmatpush1.msra.mxu0 %v4081
    %4133 = vmatprep.subr.mxu0 %v4086
    %4134 = vmatpush1.msra.mxu0 %v4085
    %4135 = vmatprep.subr.mxu0 %v4090
    %4136 = vmatpush1.msra.mxu0 %v4089
    %4137 = vmatprep.subr.mxu0 %v4094
    %4138 = vmatpush1.msra.mxu0 %v4093
    %4139 = vmatprep.subr.mxu0 %v4098
    %4140 = vmatpush1.msra.mxu0 %v4097
    %4141 = vmatprep.subr.mxu0 %v4102
    %4142 = vmatpush1.msra.mxu0 %v4101
    %4143 = vmatprep.subr.mxu0 %v4106
    %4144 = vmatpush1.msra.mxu0 %v4105
    %4145 = vmatprep.subr.mxu0 %v4110
    %4146 = vmatpush1.msra.mxu0 %v4109
    %4147 = vmatprep.subr.mxu0 %v4114
    %4148 = vmatpush1.msra.mxu0 %v4113
    %4149 = vmatprep.subr.mxu0 0.0
    %4150 = vmatpush1.msra.mxu0 0.0
    %4151 = vmatprep.subr.mxu0 0.0
    %4152 = vmatpush1.msra.mxu0 0.0
    %4153 = vmatprep.subr.mxu0 0.0
    %4154 = vmatpush1.msra.mxu0 0.0
    %4155 = vmatprep.subr.mxu0 0.0
    %4156 = vmatpush1.msra.mxu0 0.0
    %4157 = vmatprep.subr.mxu0 0.0
    %4158 = vmatpush1.msra.mxu0 0.0
    %4159 = vmatprep.subr.mxu0 0.0
    %4160 = vmatpush1.msra.mxu0 0.0
    %4161 = vmatprep.subr.mxu0 0.0
    %4162 = vmatpush1.msra.mxu0 0.0
    %4163 = vmatprep.subr.mxu0 0.0
    %4164 = vmatpush1.msra.mxu0 0.0
    %4165 = vmatprep.subr.mxu0 0.0
    %4166 = vmatpush1.msra.mxu0 0.0
    %4167 = vmatprep.subr.mxu0 0.0
    %4168 = vmatpush1.msra.mxu0 0.0
    %4169 = vmatprep.subr.mxu0 0.0
    %4170 = vmatpush1.msra.mxu0 0.0
    %4171 = vmatprep.subr.mxu0 0.0
    %4172 = vmatpush1.msra.mxu0 0.0
    %4173 = vmatprep.subr.mxu0 0.0
    %4174 = vmatpush1.msra.mxu0 0.0
    %4175 = vmatprep.subr.mxu0 0.0
    %4176 = vmatpush1.msra.mxu0 0.0
    %4177 = vmatprep.subr.mxu0 0.0
    %4178 = vmatpush1.msra.mxu0 0.0
    %4179 = vmatprep.subr.mxu0 0.0
    %4180 = vmatpush1.msra.mxu0 0.0
    %4181 = vmatprep.mubr.f32.mxu0 0.0
    %4182 = vmatmul.mubr.f32.gmra.mrb[0].mxu0 %v4047
    %v4183 = vpop.f32.mrb[0].mxu0
    %v4184 = vadd.f32 0.0, %v4183
    %v4185 = vpop.f32.mrb[0].mxu0
    %v4186 = vadd.f32 0.0, %v4185
    %4187 = vdwg.mxu0
    %4188 = vmatprep.subr.mxu0 %v4056
    %4189 = vmatpush1.msra.mxu0 %v4055
    %4190 = vmatprep.subr.mxu0 %v4060
    %4191 = vmatpush1.msra.mxu0 %v4059
    %4192 = vmatprep.subr.mxu0 %v4064
    %4193 = vmatpush1.msra.mxu0 %v4063
    %4194 = vmatprep.subr.mxu0 %v4068
    %4195 = vmatpush1.msra.mxu0 %v4067
    %4196 = vmatprep.subr.mxu0 %v4072
    %4197 = vmatpush1.msra.mxu0 %v4071
    %4198 = vmatprep.subr.mxu0 %v4076
    %4199 = vmatpush1.msra.mxu0 %v4075
    %4200 = vmatprep.subr.mxu0 %v4080
    %4201 = vmatpush1.msra.mxu0 %v4079
    %4202 = vmatprep.subr.mxu0 %v4084
    %4203 = vmatpush1.msra.mxu0 %v4083
    %4204 = vmatprep.subr.mxu0 %v4088
    %4205 = vmatpush1.msra.mxu0 %v4087
    %4206 = vmatprep.subr.mxu0 %v4092
    %4207 = vmatpush1.msra.mxu0 %v4091
    %4208 = vmatprep.subr.mxu0 %v4096
    %4209 = vmatpush1.msra.mxu0 %v4095
    %4210 = vmatprep.subr.mxu0 %v4100
    %4211 = vmatpush1.msra.mxu0 %v4099
    %4212 = vmatprep.subr.mxu0 %v4104
    %4213 = vmatpush1.msra.mxu0 %v4103
    %4214 = vmatprep.subr.mxu0 %v4108
    %4215 = vmatpush1.msra.mxu0 %v4107
    %4216 = vmatprep.subr.mxu0 %v4112
    %4217 = vmatpush1.msra.mxu0 %v4111
    %4218 = vmatprep.subr.mxu0 %v4116
    %4219 = vmatpush1.msra.mxu0 %v4115
    %4220 = vmatprep.subr.mxu0 0.0
    %4221 = vmatpush1.msra.mxu0 0.0
    %4222 = vmatprep.subr.mxu0 0.0
    %4223 = vmatpush1.msra.mxu0 0.0
    %4224 = vmatprep.subr.mxu0 0.0
    %4225 = vmatpush1.msra.mxu0 0.0
    %4226 = vmatprep.subr.mxu0 0.0
    %4227 = vmatpush1.msra.mxu0 0.0
    %4228 = vmatprep.subr.mxu0 0.0
    %4229 = vmatpush1.msra.mxu0 0.0
    %4230 = vmatprep.subr.mxu0 0.0
    %4231 = vmatpush1.msra.mxu0 0.0
    %4232 = vmatprep.subr.mxu0 0.0
    %4233 = vmatpush1.msra.mxu0 0.0
    %4234 = vmatprep.subr.mxu0 0.0
    %4235 = vmatpush1.msra.mxu0 0.0
    %4236 = vmatprep.subr.mxu0 0.0
    %4237 = vmatpush1.msra.mxu0 0.0
    %4238 = vmatprep.subr.mxu0 0.0
    %4239 = vmatpush1.msra.mxu0 0.0
    %4240 = vmatprep.subr.mxu0 0.0
    %4241 = vmatpush1.msra.mxu0 0.0
    %4242 = vmatprep.subr.mxu0 0.0
    %4243 = vmatpush1.msra.mxu0 0.0
    %4244 = vmatprep.subr.mxu0 0.0
    %4245 = vmatpush1.msra.mxu0 0.0
    %4246 = vmatprep.subr.mxu0 0.0
    %4247 = vmatpush1.msra.mxu0 0.0
    %4248 = vmatprep.subr.mxu0 0.0
    %4249 = vmatpush1.msra.mxu0 0.0
    %4250 = vmatprep.subr.mxu0 0.0
    %4251 = vmatpush1.msra.mxu0 0.0
    %4252 = vmatprep.mubr.f32.mxu0 0.0
    %4253 = vmatmul.mubr.f32.gmra.mrb[0].mxu0 %v4047
    %v4254 = vpop.f32.mrb[0].mxu0
    %v4255 = vadd.f32 0.0, %v4254
    %v4256 = vpop.f32.mrb[0].mxu0
    %v4257 = vadd.f32 0.0, %v4256
    %4258 = vdwg.mxu0
    %v4259 = vadd.f32 %v4049, %v4184
    %v4260 = vadd.f32 %v4050, %v4186
    %v4261 = vadd.f32 %v4051, %v4255
    %v4262 = vadd.f32 %v4052, %v4257
    %v4263 = vmul.f32 %v4259, 0.5
    %v4264 = vtanh.pop %v4263
    %v4265 = vmul.f32 %v4264, 0.5
    %v4266 = vadd.f32 %v4265, 0.5
    %v4267 = vmul.f32 %v4260, 0.5
    %v4268 = vtanh.pop %v4267
    %v4269 = vmul.f32 %v4268, 0.5
    %v4270 = vadd.f32 %v4269, 0.5
    %v4271 = vtanh.pop %v4261
    %v4272 = vmul.f32 %v4262, 0.5
    %v4273 = vtanh.pop %v4272
    %v4274 = vmul.f32 %v4273, 0.5
    %v4275 = vadd.f32 %v4274, 0.5
    %v4276 = vmul.f32 %v4270, %v4045
    %v4277 = vmul.f32 %v4266, %v4271
    %v4278 = vadd.f32 %v4276, %v4277
    %v4279 = vtanh.pop %v4278
    %v4280 = vmul.f32 %v4275, %v4279
    %4281 = vst [vmem:[%s7 + $0x30] sm:$0xff] %v4280
    %v4282 = vld [vmem:[#allocation2 + $0xe0] sm:$0xff]
    %v4283 = vld [vmem:[#allocation2 + $0xe8] sm:$0xff]
    %v4284 = vld [vmem:[#allocation2 + $0xf0] sm:$0xff]
    %v4285 = vld [vmem:[#allocation2 + $0xf8] sm:$0xff]
    %v4286 = vld [vmem:[#allocation9] sm:$0xff]
    %v4287 = vld [vmem:[#allocation9 + $0x8] sm:$0xff]
    %v4288 = vld [vmem:[#allocation9 + $0x10] sm:$0xff]
    %v4289 = vld [vmem:[#allocation9 + $0x18] sm:$0xff]
    %v4290 = vld [vmem:[#allocation9 + $0x20] sm:$0xff]
    %v4291 = vld [vmem:[#allocation9 + $0x28] sm:$0xff]
    %v4292 = vld [vmem:[#allocation9 + $0x30] sm:$0xff]
    %v4293 = vld [vmem:[#allocation9 + $0x38] sm:$0xff]
    %v4294 = vld [vmem:[#allocation9 + $0x40] sm:$0xff]
    %v4295 = vld [vmem:[#allocation9 + $0x48] sm:$0xff]
    %v4296 = vld [vmem:[#allocation9 + $0x50] sm:$0xff]
    %v4297 = vld [vmem:[#allocation9 + $0x58] sm:$0xff]
    %v4298 = vld [vmem:[#allocation9 + $0x60] sm:$0xff]
    %v4299 = vld [vmem:[#allocation9 + $0x68] sm:$0xff]
    %v4300 = vld [vmem:[#allocation9 + $0x70] sm:$0xff]
    %v4301 = vld [vmem:[#allocation9 + $0x78] sm:$0xff]
    %v4302 = vld [vmem:[#allocation9 + $0x80] sm:$0xff]
    %v4303 = vld [vmem:[#allocation9 + $0x88] sm:$0xff]
    %v4304 = vld [vmem:[#allocation9 + $0x90] sm:$0xff]
    %v4305 = vld [vmem:[#allocation9 + $0x98] sm:$0xff]
    %v4306 = vld [vmem:[#allocation9 + $0xa0] sm:$0xff]
    %v4307 = vld [vmem:[#allocation9 + $0xa8] sm:$0xff]
    %v4308 = vld [vmem:[#allocation9 + $0xb0] sm:$0xff]
    %v4309 = vld [vmem:[#allocation9 + $0xb8] sm:$0xff]
    %v4310 = vld [vmem:[#allocation9 + $0xc0] sm:$0xff]
    %v4311 = vld [vmem:[#allocation9 + $0xc8] sm:$0xff]
    %v4312 = vld [vmem:[#allocation9 + $0xd0] sm:$0xff]
    %v4313 = vld [vmem:[#allocation9 + $0xd8] sm:$0xff]
    %v4314 = vld [vmem:[#allocation9 + $0xe0] sm:$0xff]
    %v4315 = vld [vmem:[#allocation9 + $0xe8] sm:$0xff]
    %v4316 = vld [vmem:[#allocation9 + $0xf0] sm:$0xff]
    %v4317 = vld [vmem:[#allocation9 + $0xf8] sm:$0xff]
    %v4318 = vld [vmem:[#allocation9 + $0x100] sm:$0xff]
    %v4319 = vld [vmem:[#allocation9 + $0x108] sm:$0xff]
    %v4320 = vld [vmem:[#allocation9 + $0x110] sm:$0xff]
    %v4321 = vld [vmem:[#allocation9 + $0x118] sm:$0xff]
    %v4322 = vld [vmem:[#allocation9 + $0x120] sm:$0xff]
    %v4323 = vld [vmem:[#allocation9 + $0x128] sm:$0xff]
    %v4324 = vld [vmem:[#allocation9 + $0x130] sm:$0xff]
    %v4325 = vld [vmem:[#allocation9 + $0x138] sm:$0xff]
    %v4326 = vld [vmem:[#allocation9 + $0x140] sm:$0xff]
    %v4327 = vld [vmem:[#allocation9 + $0x148] sm:$0xff]
    %v4328 = vld [vmem:[#allocation9 + $0x150] sm:$0xff]
    %v4329 = vld [vmem:[#allocation9 + $0x158] sm:$0xff]
    %v4330 = vld [vmem:[#allocation9 + $0x160] sm:$0xff]
    %v4331 = vld [vmem:[#allocation9 + $0x168] sm:$0xff]
    %v4332 = vld [vmem:[#allocation9 + $0x170] sm:$0xff]
    %v4333 = vld [vmem:[#allocation9 + $0x178] sm:$0xff]
    %v4334 = vld [vmem:[#allocation9 + $0x180] sm:$0xff]
    %v4335 = vld [vmem:[#allocation9 + $0x188] sm:$0xff]
    %v4336 = vld [vmem:[#allocation9 + $0x190] sm:$0xff]
    %v4337 = vld [vmem:[#allocation9 + $0x198] sm:$0xff]
    %v4338 = vld [vmem:[#allocation9 + $0x1a0] sm:$0xff]
    %v4339 = vld [vmem:[#allocation9 + $0x1a8] sm:$0xff]
    %v4340 = vld [vmem:[#allocation9 + $0x1b0] sm:$0xff]
    %v4341 = vld [vmem:[#allocation9 + $0x1b8] sm:$0xff]
    %v4342 = vld [vmem:[#allocation9 + $0x1c0] sm:$0xff]
    %v4343 = vld [vmem:[#allocation9 + $0x1c8] sm:$0xff]
    %v4344 = vld [vmem:[#allocation9 + $0x1d0] sm:$0xff]
    %v4345 = vld [vmem:[#allocation9 + $0x1d8] sm:$0xff]
    %v4346 = vld [vmem:[#allocation9 + $0x1e0] sm:$0xff]
    %v4347 = vld [vmem:[#allocation9 + $0x1e8] sm:$0xff]
    %v4348 = vld [vmem:[#allocation9 + $0x1f0] sm:$0xff]
    %v4349 = vld [vmem:[#allocation9 + $0x1f8] sm:$0xff]
    %4350 = vmatprep.subr.mxu0 %v4287
    %4351 = vmatpush1.msra.mxu0 %v4286
    %4352 = vmatprep.subr.mxu0 %v4291
    %4353 = vmatpush1.msra.mxu0 %v4290
    %4354 = vmatprep.subr.mxu0 %v4295
    %4355 = vmatpush1.msra.mxu0 %v4294
    %4356 = vmatprep.subr.mxu0 %v4299
    %4357 = vmatpush1.msra.mxu0 %v4298
    %4358 = vmatprep.subr.mxu0 %v4303
    %4359 = vmatpush1.msra.mxu0 %v4302
    %4360 = vmatprep.subr.mxu0 %v4307
    %4361 = vmatpush1.msra.mxu0 %v4306
    %4362 = vmatprep.subr.mxu0 %v4311
    %4363 = vmatpush1.msra.mxu0 %v4310
    %4364 = vmatprep.subr.mxu0 %v4315
    %4365 = vmatpush1.msra.mxu0 %v4314
    %4366 = vmatprep.subr.mxu0 %v4319
    %4367 = vmatpush1.msra.mxu0 %v4318
    %4368 = vmatprep.subr.mxu0 %v4323
    %4369 = vmatpush1.msra.mxu0 %v4322
    %4370 = vmatprep.subr.mxu0 %v4327
    %4371 = vmatpush1.msra.mxu0 %v4326
    %4372 = vmatprep.subr.mxu0 %v4331
    %4373 = vmatpush1.msra.mxu0 %v4330
    %4374 = vmatprep.subr.mxu0 %v4335
    %4375 = vmatpush1.msra.mxu0 %v4334
    %4376 = vmatprep.subr.mxu0 %v4339
    %4377 = vmatpush1.msra.mxu0 %v4338
    %4378 = vmatprep.subr.mxu0 %v4343
    %4379 = vmatpush1.msra.mxu0 %v4342
    %4380 = vmatprep.subr.mxu0 %v4347
    %4381 = vmatpush1.msra.mxu0 %v4346
    %4382 = vmatprep.subr.mxu0 0.0
    %4383 = vmatpush1.msra.mxu0 0.0
    %4384 = vmatprep.subr.mxu0 0.0
    %4385 = vmatpush1.msra.mxu0 0.0
    %4386 = vmatprep.subr.mxu0 0.0
    %4387 = vmatpush1.msra.mxu0 0.0
    %4388 = vmatprep.subr.mxu0 0.0
    %4389 = vmatpush1.msra.mxu0 0.0
    %4390 = vmatprep.subr.mxu0 0.0
    %4391 = vmatpush1.msra.mxu0 0.0
    %4392 = vmatprep.subr.mxu0 0.0
    %4393 = vmatpush1.msra.mxu0 0.0
    %4394 = vmatprep.subr.mxu0 0.0
    %4395 = vmatpush1.msra.mxu0 0.0
    %4396 = vmatprep.subr.mxu0 0.0
    %4397 = vmatpush1.msra.mxu0 0.0
    %4398 = vmatprep.subr.mxu0 0.0
    %4399 = vmatpush1.msra.mxu0 0.0
    %4400 = vmatprep.subr.mxu0 0.0
    %4401 = vmatpush1.msra.mxu0 0.0
    %4402 = vmatprep.subr.mxu0 0.0
    %4403 = vmatpush1.msra.mxu0 0.0
    %4404 = vmatprep.subr.mxu0 0.0
    %4405 = vmatpush1.msra.mxu0 0.0
    %4406 = vmatprep.subr.mxu0 0.0
    %4407 = vmatpush1.msra.mxu0 0.0
    %4408 = vmatprep.subr.mxu0 0.0
    %4409 = vmatpush1.msra.mxu0 0.0
    %4410 = vmatprep.subr.mxu0 0.0
    %4411 = vmatpush1.msra.mxu0 0.0
    %4412 = vmatprep.subr.mxu0 0.0
    %4413 = vmatpush1.msra.mxu0 0.0
    %4414 = vmatprep.mubr.f32.mxu0 0.0
    %4415 = vmatmul.mubr.f32.gmra.mrb[0].mxu0 %v4280
    %v4416 = vpop.f32.mrb[0].mxu0
    %v4417 = vadd.f32 0.0, %v4416
    %v4418 = vpop.f32.mrb[0].mxu0
    %v4419 = vadd.f32 0.0, %v4418
    %4420 = vdwg.mxu0
    %4421 = vmatprep.subr.mxu0 %v4289
    %4422 = vmatpush1.msra.mxu0 %v4288
    %4423 = vmatprep.subr.mxu0 %v4293
    %4424 = vmatpush1.msra.mxu0 %v4292
    %4425 = vmatprep.subr.mxu0 %v4297
    %4426 = vmatpush1.msra.mxu0 %v4296
    %4427 = vmatprep.subr.mxu0 %v4301
    %4428 = vmatpush1.msra.mxu0 %v4300
    %4429 = vmatprep.subr.mxu0 %v4305
    %4430 = vmatpush1.msra.mxu0 %v4304
    %4431 = vmatprep.subr.mxu0 %v4309
    %4432 = vmatpush1.msra.mxu0 %v4308
    %4433 = vmatprep.subr.mxu0 %v4313
    %4434 = vmatpush1.msra.mxu0 %v4312
    %4435 = vmatprep.subr.mxu0 %v4317
    %4436 = vmatpush1.msra.mxu0 %v4316
    %4437 = vmatprep.subr.mxu0 %v4321
    %4438 = vmatpush1.msra.mxu0 %v4320
    %4439 = vmatprep.subr.mxu0 %v4325
    %4440 = vmatpush1.msra.mxu0 %v4324
    %4441 = vmatprep.subr.mxu0 %v4329
    %4442 = vmatpush1.msra.mxu0 %v4328
    %4443 = vmatprep.subr.mxu0 %v4333
    %4444 = vmatpush1.msra.mxu0 %v4332
    %4445 = vmatprep.subr.mxu0 %v4337
    %4446 = vmatpush1.msra.mxu0 %v4336
    %4447 = vmatprep.subr.mxu0 %v4341
    %4448 = vmatpush1.msra.mxu0 %v4340
    %4449 = vmatprep.subr.mxu0 %v4345
    %4450 = vmatpush1.msra.mxu0 %v4344
    %4451 = vmatprep.subr.mxu0 %v4349
    %4452 = vmatpush1.msra.mxu0 %v4348
    %4453 = vmatprep.subr.mxu0 0.0
    %4454 = vmatpush1.msra.mxu0 0.0
    %4455 = vmatprep.subr.mxu0 0.0
    %4456 = vmatpush1.msra.mxu0 0.0
    %4457 = vmatprep.subr.mxu0 0.0
    %4458 = vmatpush1.msra.mxu0 0.0
    %4459 = vmatprep.subr.mxu0 0.0
    %4460 = vmatpush1.msra.mxu0 0.0
    %4461 = vmatprep.subr.mxu0 0.0
    %4462 = vmatpush1.msra.mxu0 0.0
    %4463 = vmatprep.subr.mxu0 0.0
    %4464 = vmatpush1.msra.mxu0 0.0
    %4465 = vmatprep.subr.mxu0 0.0
    %4466 = vmatpush1.msra.mxu0 0.0
    %4467 = vmatprep.subr.mxu0 0.0
    %4468 = vmatpush1.msra.mxu0 0.0
    %4469 = vmatprep.subr.mxu0 0.0
    %4470 = vmatpush1.msra.mxu0 0.0
    %4471 = vmatprep.subr.mxu0 0.0
    %4472 = vmatpush1.msra.mxu0 0.0
    %4473 = vmatprep.subr.mxu0 0.0
    %4474 = vmatpush1.msra.mxu0 0.0
    %4475 = vmatprep.subr.mxu0 0.0
    %4476 = vmatpush1.msra.mxu0 0.0
    %4477 = vmatprep.subr.mxu0 0.0
    %4478 = vmatpush1.msra.mxu0 0.0
    %4479 = vmatprep.subr.mxu0 0.0
    %4480 = vmatpush1.msra.mxu0 0.0
    %4481 = vmatprep.subr.mxu0 0.0
    %4482 = vmatpush1.msra.mxu0 0.0
    %4483 = vmatprep.subr.mxu0 0.0
    %4484 = vmatpush1.msra.mxu0 0.0
    %4485 = vmatprep.mubr.f32.mxu0 0.0
    %4486 = vmatmul.mubr.f32.gmra.mrb[0].mxu0 %v4280
    %v4487 = vpop.f32.mrb[0].mxu0
    %v4488 = vadd.f32 0.0, %v4487
    %v4489 = vpop.f32.mrb[0].mxu0
    %v4490 = vadd.f32 0.0, %v4489
    %4491 = vdwg.mxu0
    %v4492 = vadd.f32 %v4282, %v4417
    %v4493 = vadd.f32 %v4283, %v4419
    %v4494 = vadd.f32 %v4284, %v4488
    %v4495 = vadd.f32 %v4285, %v4490
    %v4496 = vmul.f32 %v4492, 0.5
    %v4497 = vtanh.pop %v4496
    %v4498 = vmul.f32 %v4497, 0.5
    %v4499 = vadd.f32 %v4498, 0.5
    %v4500 = vmul.f32 %v4493, 0.5
    %v4501 = vtanh.pop %v4500
    %v4502 = vmul.f32 %v4501, 0.5
    %v4503 = vadd.f32 %v4502, 0.5
    %v4504 = vtanh.pop %v4494
    %v4505 = vmul.f32 %v4495, 0.5
    %v4506 = vtanh.pop %v4505
    %v4507 = vmul.f32 %v4506, 0.5
    %v4508 = vadd.f32 %v4507, 0.5
    %v4509 = vmul.f32 %v4503, %v4278
    %v4510 = vmul.f32 %v4499, %v4504
    %v4511 = vadd.f32 %v4509, %v4510
    %v4512 = vtanh.pop %v4511
    %v4513 = vmul.f32 %v4508, %v4512
    %4514 = vst [vmem:[%s7 + $0x38] sm:$0xff] %v4513
    %4515 = vst [vmem:[%s8] sm:$0xff] %v4511
    // Predicated region
    $region46: #{rnn_forward.1} parent=1 // pred_check
      _
    $region47: #{rnn_forward.1} parent=1 // pred_check_branch
      %4517 = sbr.rel (0) target = $region49
    $region48: #{rnn_forward.1} parent=1 // pred_region
      _
    $region49: #{rnn_forward.1} parent=1 // pred_fallthru
      _
    // Predicated region
    $region50: #{rnn_forward.1} parent=1 // pred_check
      _
    $region51: #{rnn_forward.1} parent=1 // pred_check_branch
      %4519 = sbr.rel (0) target = $region53
    $region52: #{rnn_forward.1} parent=1 // pred_region
      _
    $region53: #{rnn_forward.1} parent=1 // pred_fallthru
      _
    // Predicated region
    $region54: #{rnn_forward.1} parent=1 // pred_check
      _
    $region55: #{rnn_forward.1} parent=1 // pred_check_branch
      %4521 = sbr.rel (0) target = $region57
    $region56: #{rnn_forward.1} parent=1 // pred_region
      _
    $region57: #{rnn_forward.1} parent=1 // pred_fallthru
      _
    // Predicated region
    $region58: #{rnn_forward.1} parent=1 // pred_check
      _
    $region59: #{rnn_forward.1} parent=1 // pred_check_branch
      %4523 = sbr.rel (0) target = $region61
    $region60: #{rnn_forward.1} parent=1 // pred_region
      _
    $region61: #{rnn_forward.1} parent=1 // pred_fallthru
      _
    %4524 = vsyncpa [#allocation5], 1
    %4525 = vsyncpa [#allocation7], 1
    %4526 = vsyncpa [#allocation10], 1

</llo_original>
